<compile_context>
chip_gen: v6e
topology: v6e:2x2x1
jax: 0.10.0
libtpu: 0.0.40
codegen_flags: <defaults>
</compile_context>

<pallas_src>
import numpy as np
import jax
import jax.numpy as jnp
from jax import lax
from jax.experimental import pallas as pl
from jax.experimental.pallas import tpu as pltpu

CH = (8, 16, 32)   # layer output channels (fixed by the PyTorch module)


def _fold_weights(w, W, dtype):
    """(3,3,3,Cin,Cout) DHWIO conv weight -> stacked band matrices (3, 3*W*Cin, W*Cout).

    M[kd, kh*W*Cin + wi*Cin + ci, wo*Cout + co] = w[kd, kh, kw, ci, co] with wi = wo+kw-1,
    zero when wi falls outside [0,W) (== implicit zero padding along W).  kw is folded as
    a W-band and kh is stacked into the contraction dim, so each layer needs only the 3
    kd matmuls.  Pure parameter preprocessing, done once in the wrapper.
    """
    Cin, Cout = int(w.shape[3]), int(w.shape[4])
    S = np.zeros((3, W, W), np.float32)
    for kw in range(3):
        for wo in range(W):
            wi = wo + kw - 1
            if 0 <= wi < W:
                S[kw, wi, wo] = 1.0
    M = jnp.einsum('kxw,dhkcf->dhxcwf', jnp.asarray(S), w.astype(jnp.float32))
    return M.reshape(3, 3 * W * Cin, W * Cout).astype(dtype)


def _make_kernel(D, H, W, Dp, Hp, G, R_b, NBG):
    R_data = NBG * R_b          # data rows per grid step (multiple of 8)
    C1, C2, C3 = CH

    def kernel(x_ref, m1_ref, b1_ref, m2_ref, b2_ref, m3_ref, b3_ref, p_ref,
               o_ref, e1_ref, e2_ref):
        # ---- row-validity mask, built in-kernel (no 1-lane mask DMA) -------------------
        # Row r encodes (batch-in-group, d_ext, h_ext) with power-of-two pitch Hp, so the
        # h test is a bitwise AND and the d-ring test is a few unrolled range compares.
        r = lax.broadcasted_iota(jnp.int32, (R_data, 1), 0)
        h_ext = jnp.bitwise_and(r, Hp - 1)
        valid = (h_ext >= 1) & (h_ext <= H)
        for g in range(NBG):
            front0, front1 = g * R_b, g * R_b + Hp                    # d_ext == 0 ring
            back0, back1 = g * R_b + (Dp - 1) * Hp, (g + 1) * R_b     # d_ext == Dp-1 ring
            valid = valid & jnp.logical_not((r >= front0) & (r < front1))
            valid = valid & jnp.logical_not((r >= back0) & (r < back1))

        def conv_relu(read_rows, m_ref, b_ref):
            # 3 MXU matmuls (one per kd); kh, kw and Cin are all folded into K.
            acc = None
            for kd in range(3):
                lhs = read_rows(G + (kd - 1) * Hp)   # row shift is a multiple of Hp -> aligned
                part = jnp.dot(lhs, m_ref[kd], preferred_element_type=jnp.float32)
                acc = part if acc is None else acc + part
            act = jnp.maximum(acc + b_ref[...], 0.0)  # bias + ReLU
            # Must stay a SELECT (not a multiply): it also discards any garbage propagated
            # from the never-written guard rows of the scratch slabs into ring output rows.
            return jnp.where(valid, act, 0.0)

        def store_ext(e_ref, act, wc):
            # One scratch copy per layer: E[r, kh-block] = act[r + kh - 1].  The +-1 row
            # shifts live here so every matmul LHS read above stays sublane-aligned.
            act_c = act.astype(e_ref.dtype)
            for kh in range(3):
                r0 = G - (kh - 1)
                e_ref[r0:r0 + R_data, kh * wc:(kh + 1) * wc] = act_c

        # Layer 1 reads the (already kh-extended) pipelined input block; layers 2/3 read
        # the kh-extended activation slabs straight out of VMEM scratch.
        h1 = conv_relu(lambda r0: x_ref[0, r0:r0 + R_data, :], m1_ref, b1_ref)
        store_ext(e1_ref, h1, W * C1)
        h2 = conv_relu(lambda r0: e1_ref[r0:r0 + R_data, :], m2_ref, b2_ref)
        store_ext(e2_ref, h2, W * C2)
        h3 = conv_relu(lambda r0: e2_ref[r0:r0 + R_data, :], m3_ref, b3_ref)
        # (If bundle dumps ever show layer-3 spill traffic, split h3 into two 128-lane
        #  halves; at this size it is left fused.)

        # AdaptiveAvgPool3d(1): ring/pad rows are already zero, so per batch item this is
        # a full row-sum followed by one tiny matmul against the (W*C3, C3) lane-fold
        # matrix (the 1/(D*H*W) scale is folded into P).
        parts = []
        for g in range(NBG):
            col = jnp.sum(h3[g * R_b:(g + 1) * R_b, :], axis=0, keepdims=True)
            parts.append(jnp.dot(col, p_ref[...], preferred_element_type=jnp.float32))
        o_ref[...] = jnp.concatenate(parts, axis=0).reshape(1, NBG, C3)

    return kernel


def simple3d_perceptual_net(x_ncdhw, params, *, num_steps=None,
                            compute_dtype=jnp.float32):
    """Forward pass.  x_ncdhw: (N, C, D, H, W) -> (N, 32, 1, 1, 1) like PyTorch.

    num_steps: grid steps the batch-stacked work is split into. Default min(N, 2): two
      steps keep both v7x TensorCores busy; use 1 on single-TC chips (v5e / v6e).
    compute_dtype: jnp.float32 (exact) or jnp.bfloat16 (v6e/v7x MXU headroom; relax
      validation tolerances accordingly).
    """
    Nb, C0, D, H, W = map(int, x_ncdhw.shape)
    C1, C2, C3 = CH
    Dp = D + 2
    Hp = max(8, pl.next_power_of_2(H + 2))    # sublane-aligned (power-of-two) row pitch
    R_b = Dp * Hp                             # extended (d,h) rows per batch item
    if num_steps is None:
        num_steps = min(Nb, 2)
    NBG = -(-Nb // num_steps)                 # batch items stacked per grid step
    Nb_pad = num_steps * NBG
    R_data = NBG * R_b
    G = Hp                                    # guard rows above the data block
    RA = R_data + 2 * Hp                      # allocated rows per step (guard above+below)

    (w1, b1), (w2, b2), (w3, b3) = params
    M1 = _fold_weights(w1, W, compute_dtype)
    M2 = _fold_weights(w2, W, compute_dtype)
    M3 = _fold_weights(w3, W, compute_dtype)
    b1t = jnp.tile(b1.astype(jnp.float32), W).reshape(1, W * C1)
    b2t = jnp.tile(b2.astype(jnp.float32), W).reshape(1, W * C2)
    b3t = jnp.tile(b3.astype(jnp.float32), W).reshape(1, W * C3)
    # Pooling lane-fold matrix: P[w*C3 + c, c] = 1 / (D*H*W).
    P = jnp.asarray(np.tile(np.eye(C3, dtype=np.float32), (W, 1)) / float(D * H * W))

    # NCDHW -> batch-stacked, kh-extended, h-pitch-padded row slab (layout glue).
    # TODO(synk): for large D/H/W this transpose/pad relayout should move in-kernel.
    x = jnp.transpose(x_ncdhw, (0, 2, 3, 4, 1)).astype(jnp.float32)        # NDHWC
    xp = jnp.pad(x, ((0, Nb_pad - Nb), (1, 1), (1, Hp - H - 1), (0, 0), (0, 0)))
    x2 = xp.reshape(Nb_pad, Dp, Hp, W * C0)
    xh = jnp.pad(x2, ((0, 0), (0, 0), (1, 1), (0, 0)))                     # +-1 h halo
    e0 = jnp.concatenate([xh[:, :, kh:kh + Hp, :] for kh in range(3)], axis=-1)
    e0 = e0.reshape(num_steps, R_data, 3 * W * C0)
    e0 = jnp.pad(e0, ((0, 0), (G, RA - G - R_data), (0, 0))).astype(compute_dtype)

    out = pl.pallas_call(
        _make_kernel(D, H, W, Dp, Hp, G, R_b, NBG),
        out_shape=jax.ShapeDtypeStruct((num_steps, NBG, C3), jnp.float32),
        grid=(num_steps,),
        in_specs=[
            pl.BlockSpec((1, RA, 3 * W * C0), lambda s: (s, 0, 0)),         # input slab
            pl.BlockSpec((3, 3 * W * C0, W * C1), lambda s: (0, 0, 0)),     # M1 (stacked)
            pl.BlockSpec((1, W * C1), lambda s: (0, 0)),                    # b1
            pl.BlockSpec((3, 3 * W * C1, W * C2), lambda s: (0, 0, 0)),     # M2
            pl.BlockSpec((1, W * C2), lambda s: (0, 0)),                    # b2
            pl.BlockSpec((3, 3 * W * C2, W * C3), lambda s: (0, 0, 0)),     # M3
            pl.BlockSpec((1, W * C3), lambda s: (0, 0)),                    # b3
            pl.BlockSpec((W * C3, C3), lambda s: (0, 0)),                   # pool fold P
        ],
        out_specs=pl.BlockSpec((1, NBG, C3), lambda s: (s, 0, 0)),
        scratch_shapes=[pltpu.VMEM((RA, 3 * W * C1), compute_dtype),        # kh-ext act 1
                        pltpu.VMEM((RA, 3 * W * C2), compute_dtype)],       # kh-ext act 2
        compiler_params=pltpu.CompilerParams(
            dimension_semantics=("parallel",),
            vmem_limit_bytes=32 * 1024 * 1024),
    )(e0, M1, b1t, M2, b2t, M3, b3t, P)

    out = out.reshape(Nb_pad, C3)[:Nb]
    return out.reshape(Nb, C3, 1, 1, 1)


def init_params(in_channels: int, key):
    """Deterministic params mimicking nn.Conv3d default init (uniform +/- 1/sqrt(fan_in))."""
    layer_dims = [(in_channels, CH[0]), (CH[0], CH[1]), (CH[1], CH[2])]
    params = []
    for i, (cin, cout) in enumerate(layer_dims):
        kw_, kb_ = jax.random.split(jax.random.fold_in(key, i))
        bound = 1.0 / np.sqrt(cin * 27)
        w = jax.random.uniform(kw_, (3, 3, 3, cin, cout), jnp.float32, -bound, bound)
        b = jax.random.uniform(kb_, (cout,), jnp.float32, -bound, bound)
        params.append((w, b))
    return params


def reference(x_ncdhw, params):
    """Pure-JAX reference (lax.conv_general_dilated), same semantics as the PyTorch module."""
    x = jnp.transpose(x_ncdhw, (0, 2, 3, 4, 1)).astype(jnp.float32)
    dn = ('NDHWC', 'DHWIO', 'NDHWC')
    for (w, b) in params:
        x = lax.conv_general_dilated(x, w, (1, 1, 1), 'SAME',
                                     dimension_numbers=dn,
                                     precision=lax.Precision.HIGHEST)
        x = jnp.maximum(x + b, 0.0)
    pooled = jnp.mean(x, axis=(1, 2, 3))
    return pooled.reshape(x.shape[0], -1, 1, 1, 1)


if __name__ == "__main__":
    key = jax.random.PRNGKey(0)
    k_x, k_p = jax.random.split(key)

    N, C, D, H, W = 2, 4, 8, 8, 8            # small NCDHW input (PyTorch convention)
    x = jax.random.normal(k_x, (N, C, D, H, W), jnp.float32)
    params = init_params(C, k_p)

    fwd = jax.jit(simple3d_perceptual_net)
    out = jax.block_until_ready(fwd(x, params))
    assert out.shape == (N, CH[2], 1, 1, 1), out.shape

    ref = jax.block_until_ready(reference(x, params))
    np.testing.assert_allclose(np.asarray(out), np.asarray(ref), rtol=2e-4, atol=2e-5)

    print("KERNEL_OK")
</pallas_src>

<mosaic_0001>
module attributes {stable_mosaic.version = 11 : i64} {
  func.func @kernel(%arg0: i32, %arg1: memref<1x192x96xf32, #tpu.memory_space<vmem>>, %arg2: memref<3x96x64xf32, #tpu.memory_space<vmem>>, %arg3: memref<1x64xf32, #tpu.memory_space<vmem>>, %arg4: memref<3x192x128xf32, #tpu.memory_space<vmem>>, %arg5: memref<1x128xf32, #tpu.memory_space<vmem>>, %arg6: memref<3x384x256xf32, #tpu.memory_space<vmem>>, %arg7: memref<1x256xf32, #tpu.memory_space<vmem>>, %arg8: memref<256x32xf32, #tpu.memory_space<vmem>>, %arg9: memref<1x1x32xf32, #tpu.memory_space<vmem>>, %arg10: memref<192x192xf32, #tpu.memory_space<vmem>>, %arg11: memref<192x384xf32, #tpu.memory_space<vmem>>) attributes {dimension_semantics = [#tpu.dimension_semantics<parallel>], iteration_bounds = array<i64: 2>, scalar_prefetch = 0 : i64, scratch_operands = 2 : i64, tpu.core_type = #tpu.core_type<tc>, window_params = [{transform_indices = @transform_0, window_bounds = array<i64: 1, 192, 96>}, {pipeline_mode = #tpu.pipeline_mode<synchronous>, transform_indices = @transform_1, window_bounds = array<i64: 3, 96, 64>}, {pipeline_mode = #tpu.pipeline_mode<synchronous>, transform_indices = @transform_2, window_bounds = array<i64: 1, 64>}, {pipeline_mode = #tpu.pipeline_mode<synchronous>, transform_indices = @transform_3, window_bounds = array<i64: 3, 192, 128>}, {pipeline_mode = #tpu.pipeline_mode<synchronous>, transform_indices = @transform_4, window_bounds = array<i64: 1, 128>}, {pipeline_mode = #tpu.pipeline_mode<synchronous>, transform_indices = @transform_5, window_bounds = array<i64: 3, 384, 256>}, {pipeline_mode = #tpu.pipeline_mode<synchronous>, transform_indices = @transform_6, window_bounds = array<i64: 1, 256>}, {pipeline_mode = #tpu.pipeline_mode<synchronous>, transform_indices = @transform_7, window_bounds = array<i64: 256, 32>}, {transform_indices = @transform_8, window_bounds = array<i64: 1, 1, 32>}]} {
    %0 = tpu.iota {dimensions = array<i32: 0>} : vector<160x1xi32>
    %c15_i32 = arith.constant 15 : i32
    %1 = vector.broadcast %c15_i32 : i32 to vector<160x1xi32>
    %2 = arith.andi %0, %1 : vector<160x1xi32>
    %c1_i32 = arith.constant 1 : i32
    %3 = vector.broadcast %c1_i32 : i32 to vector<160x1xi32>
    %4 = arith.cmpi sge, %2, %3 : vector<160x1xi32>
    %c8_i32 = arith.constant 8 : i32
    %5 = vector.broadcast %c8_i32 : i32 to vector<160x1xi32>
    %6 = arith.cmpi sle, %2, %5 : vector<160x1xi32>
    %7 = arith.andi %4, %6 : vector<160x1xi1>
    %c0_i32 = arith.constant 0 : i32
    %8 = vector.broadcast %c0_i32 : i32 to vector<160x1xi32>
    %9 = arith.cmpi sge, %0, %8 : vector<160x1xi32>
    %c16_i32 = arith.constant 16 : i32
    %10 = vector.broadcast %c16_i32 : i32 to vector<160x1xi32>
    %11 = arith.cmpi slt, %0, %10 : vector<160x1xi32>
    %12 = arith.andi %9, %11 : vector<160x1xi1>
    %cst = arith.constant dense<true> : vector<160x1xi1>
    %13 = arith.xori %12, %cst : vector<160x1xi1>
    %14 = arith.andi %7, %13 : vector<160x1xi1>
    %c144_i32 = arith.constant 144 : i32
    %15 = vector.broadcast %c144_i32 : i32 to vector<160x1xi32>
    %16 = arith.cmpi sge, %0, %15 : vector<160x1xi32>
    %c160_i32 = arith.constant 160 : i32
    %17 = vector.broadcast %c160_i32 : i32 to vector<160x1xi32>
    %18 = arith.cmpi slt, %0, %17 : vector<160x1xi32>
    %19 = arith.andi %16, %18 : vector<160x1xi1>
    %cst_0 = arith.constant dense<true> : vector<160x1xi1>
    %20 = arith.xori %19, %cst_0 : vector<160x1xi1>
    %21 = arith.andi %14, %20 : vector<160x1xi1>
    %c0 = arith.constant 0 : index
    %c0_1 = arith.constant 0 : index
    %c0_2 = arith.constant 0 : index
    %22 = vector.load %arg1[%c0, %c0_1, %c0_2] : memref<1x192x96xf32, #tpu.memory_space<vmem>>, vector<1x160x96xf32>
    %23 = vector.shape_cast %22 : vector<1x160x96xf32> to vector<160x96xf32>
    %c0_3 = arith.constant 0 : index
    %c0_4 = arith.constant 0 : index
    %c0_5 = arith.constant 0 : index
    %24 = vector.load %arg2[%c0_3, %c0_4, %c0_5] : memref<3x96x64xf32, #tpu.memory_space<vmem>>, vector<1x96x64xf32>
    %25 = vector.shape_cast %24 : vector<1x96x64xf32> to vector<96x64xf32>
    %cst_6 = arith.constant dense<0.000000e+00> : vector<160x64xf32>
    %26 = tpu.matmul %23, %25, %cst_6 {dimension_numbers = #tpu.dot_dimension_numbers<[1], [0], [0], [1], [0, 0, 1, 1], [], []>} : vector<160x96xf32>, vector<96x64xf32>, vector<160x64xf32> -> vector<160x64xf32>
    %c0_7 = arith.constant 0 : index
    %c16 = arith.constant 16 : index
    %c0_8 = arith.constant 0 : index
    %27 = vector.load %arg1[%c0_7, %c16, %c0_8] : memref<1x192x96xf32, #tpu.memory_space<vmem>>, vector<1x160x96xf32>
    %28 = vector.shape_cast %27 : vector<1x160x96xf32> to vector<160x96xf32>
    %c1 = arith.constant 1 : index
    %c0_9 = arith.constant 0 : index
    %c0_10 = arith.constant 0 : index
    %29 = vector.load %arg2[%c1, %c0_9, %c0_10] : memref<3x96x64xf32, #tpu.memory_space<vmem>>, vector<1x96x64xf32>
    %30 = vector.shape_cast %29 : vector<1x96x64xf32> to vector<96x64xf32>
    %cst_11 = arith.constant dense<0.000000e+00> : vector<160x64xf32>
    %31 = tpu.matmul %28, %30, %cst_11 {dimension_numbers = #tpu.dot_dimension_numbers<[1], [0], [0], [1], [0, 0, 1, 1], [], []>} : vector<160x96xf32>, vector<96x64xf32>, vector<160x64xf32> -> vector<160x64xf32>
    %32 = arith.addf %26, %31 : vector<160x64xf32>
    %c0_12 = arith.constant 0 : index
    %c32 = arith.constant 32 : index
    %c0_13 = arith.constant 0 : index
    %33 = vector.load %arg1[%c0_12, %c32, %c0_13] : memref<1x192x96xf32, #tpu.memory_space<vmem>>, vector<1x160x96xf32>
    %34 = vector.shape_cast %33 : vector<1x160x96xf32> to vector<160x96xf32>
    %c2 = arith.constant 2 : index
    %c0_14 = arith.constant 0 : index
    %c0_15 = arith.constant 0 : index
    %35 = vector.load %arg2[%c2, %c0_14, %c0_15] : memref<3x96x64xf32, #tpu.memory_space<vmem>>, vector<1x96x64xf32>
    %36 = vector.shape_cast %35 : vector<1x96x64xf32> to vector<96x64xf32>
    %cst_16 = arith.constant dense<0.000000e+00> : vector<160x64xf32>
    %37 = tpu.matmul %34, %36, %cst_16 {dimension_numbers = #tpu.dot_dimension_numbers<[1], [0], [0], [1], [0, 0, 1, 1], [], []>} : vector<160x96xf32>, vector<96x64xf32>, vector<160x64xf32> -> vector<160x64xf32>
    %38 = arith.addf %32, %37 : vector<160x64xf32>
    %c0_17 = arith.constant 0 : index
    %c0_18 = arith.constant 0 : index
    %39 = vector.load %arg3[%c0_17, %c0_18] : memref<1x64xf32, #tpu.memory_space<vmem>>, vector<1x64xf32>
    %40 = vector.broadcast %39 : vector<1x64xf32> to vector<160x64xf32>
    %41 = arith.addf %38, %40 : vector<160x64xf32>
    %cst_19 = arith.constant 0.000000e+00 : f32
    %42 = vector.broadcast %cst_19 : f32 to vector<160x64xf32>
    %43 = arith.maximumf %41, %42 : vector<160x64xf32>
    %cst_20 = arith.constant 0.000000e+00 : f32
    %44 = vector.shape_cast %21 : vector<160x1xi1> to vector<160x1xi1>
    %45 = vector.broadcast %44 : vector<160x1xi1> to vector<160x64xi1>
    %46 = vector.broadcast %cst_20 : f32 to vector<160x64xf32>
    %47 = arith.select %45, %43, %46 : vector<160x64xi1>, vector<160x64xf32>
    %c17 = arith.constant 17 : index
    %c0_21 = arith.constant 0 : index
    %48 = vector.load %arg10[%c17, %c0_21] : memref<192x192xf32, #tpu.memory_space<vmem>>, vector<160x64xf32>
    tpu.vector_store %arg10[%c17, %c0_21], %47 {strides = array<i32>} : memref<192x192xf32, #tpu.memory_space<vmem>>, vector<160x64xf32>,
    %c16_22 = arith.constant 16 : index
    %c64 = arith.constant 64 : index
    %49 = vector.load %arg10[%c16_22, %c64] : memref<192x192xf32, #tpu.memory_space<vmem>>, vector<160x64xf32>
    tpu.vector_store %arg10[%c16_22, %c64], %47 {strides = array<i32>} : memref<192x192xf32, #tpu.memory_space<vmem>>, vector<160x64xf32>,
    %c15 = arith.constant 15 : index
    %c128 = arith.constant 128 : index
    %50 = vector.load %arg10[%c15, %c128] : memref<192x192xf32, #tpu.memory_space<vmem>>, vector<160x64xf32>
    tpu.vector_store %arg10[%c15, %c128], %47 {strides = array<i32>} : memref<192x192xf32, #tpu.memory_space<vmem>>, vector<160x64xf32>,
    %c0_23 = arith.constant 0 : index
    %c0_24 = arith.constant 0 : index
    %51 = vector.load %arg10[%c0_23, %c0_24] : memref<192x192xf32, #tpu.memory_space<vmem>>, vector<160x192xf32>
    %c0_25 = arith.constant 0 : index
    %c0_26 = arith.constant 0 : index
    %c0_27 = arith.constant 0 : index
    %52 = vector.load %arg4[%c0_25, %c0_26, %c0_27] : memref<3x192x128xf32, #tpu.memory_space<vmem>>, vector<1x192x128xf32>
    %53 = vector.shape_cast %52 : vector<1x192x128xf32> to vector<192x128xf32>
    %cst_28 = arith.constant dense<0.000000e+00> : vector<160x128xf32>
    %54 = tpu.matmul %51, %53, %cst_28 {dimension_numbers = #tpu.dot_dimension_numbers<[1], [0], [0], [1], [0, 0, 1, 1], [], []>} : vector<160x192xf32>, vector<192x128xf32>, vector<160x128xf32> -> vector<160x128xf32>
    %c16_29 = arith.constant 16 : index
    %c0_30 = arith.constant 0 : index
    %55 = vector.load %arg10[%c16_29, %c0_30] : memref<192x192xf32, #tpu.memory_space<vmem>>, vector<160x192xf32>
    %c1_31 = arith.constant 1 : index
    %c0_32 = arith.constant 0 : index
    %c0_33 = arith.constant 0 : index
    %56 = vector.load %arg4[%c1_31, %c0_32, %c0_33] : memref<3x192x128xf32, #tpu.memory_space<vmem>>, vector<1x192x128xf32>
    %57 = vector.shape_cast %56 : vector<1x192x128xf32> to vector<192x128xf32>
    %cst_34 = arith.constant dense<0.000000e+00> : vector<160x128xf32>
    %58 = tpu.matmul %55, %57, %cst_34 {dimension_numbers = #tpu.dot_dimension_numbers<[1], [0], [0], [1], [0, 0, 1, 1], [], []>} : vector<160x192xf32>, vector<192x128xf32>, vector<160x128xf32> -> vector<160x128xf32>
    %59 = arith.addf %54, %58 : vector<160x128xf32>
    %c32_35 = arith.constant 32 : index
    %c0_36 = arith.constant 0 : index
    %60 = vector.load %arg10[%c32_35, %c0_36] : memref<192x192xf32, #tpu.memory_space<vmem>>, vector<160x192xf32>
    %c2_37 = arith.constant 2 : index
    %c0_38 = arith.constant 0 : index
    %c0_39 = arith.constant 0 : index
    %61 = vector.load %arg4[%c2_37, %c0_38, %c0_39] : memref<3x192x128xf32, #tpu.memory_space<vmem>>, vector<1x192x128xf32>
    %62 = vector.shape_cast %61 : vector<1x192x128xf32> to vector<192x128xf32>
    %cst_40 = arith.constant dense<0.000000e+00> : vector<160x128xf32>
    %63 = tpu.matmul %60, %62, %cst_40 {dimension_numbers = #tpu.dot_dimension_numbers<[1], [0], [0], [1], [0, 0, 1, 1], [], []>} : vector<160x192xf32>, vector<192x128xf32>, vector<160x128xf32> -> vector<160x128xf32>
    %64 = arith.addf %59, %63 : vector<160x128xf32>
    %c0_41 = arith.constant 0 : index
    %c0_42 = arith.constant 0 : index
    %65 = vector.load %arg5[%c0_41, %c0_42] : memref<1x128xf32, #tpu.memory_space<vmem>>, vector<1x128xf32>
    %66 = vector.broadcast %65 : vector<1x128xf32> to vector<160x128xf32>
    %67 = arith.addf %64, %66 : vector<160x128xf32>
    %cst_43 = arith.constant 0.000000e+00 : f32
    %68 = vector.broadcast %cst_43 : f32 to vector<160x128xf32>
    %69 = arith.maximumf %67, %68 : vector<160x128xf32>
    %cst_44 = arith.constant 0.000000e+00 : f32
    %70 = vector.shape_cast %21 : vector<160x1xi1> to vector<160x1xi1>
    %71 = vector.broadcast %70 : vector<160x1xi1> to vector<160x128xi1>
    %72 = vector.broadcast %cst_44 : f32 to vector<160x128xf32>
    %73 = arith.select %71, %69, %72 : vector<160x128xi1>, vector<160x128xf32>
    %c17_45 = arith.constant 17 : index
    %c0_46 = arith.constant 0 : index
    %74 = vector.load %arg11[%c17_45, %c0_46] : memref<192x384xf32, #tpu.memory_space<vmem>>, vector<160x128xf32>
    tpu.vector_store %arg11[%c17_45, %c0_46], %73 {strides = array<i32>} : memref<192x384xf32, #tpu.memory_space<vmem>>, vector<160x128xf32>,
    %c16_47 = arith.constant 16 : index
    %c128_48 = arith.constant 128 : index
    %75 = vector.load %arg11[%c16_47, %c128_48] : memref<192x384xf32, #tpu.memory_space<vmem>>, vector<160x128xf32>
    tpu.vector_store %arg11[%c16_47, %c128_48], %73 {strides = array<i32>} : memref<192x384xf32, #tpu.memory_space<vmem>>, vector<160x128xf32>,
    %c15_49 = arith.constant 15 : index
    %c256 = arith.constant 256 : index
    %76 = vector.load %arg11[%c15_49, %c256] : memref<192x384xf32, #tpu.memory_space<vmem>>, vector<160x128xf32>
    tpu.vector_store %arg11[%c15_49, %c256], %73 {strides = array<i32>} : memref<192x384xf32, #tpu.memory_space<vmem>>, vector<160x128xf32>,
    %c0_50 = arith.constant 0 : index
    %c0_51 = arith.constant 0 : index
    %77 = vector.load %arg11[%c0_50, %c0_51] : memref<192x384xf32, #tpu.memory_space<vmem>>, vector<160x384xf32>
    %c0_52 = arith.constant 0 : index
    %c0_53 = arith.constant 0 : index
    %c0_54 = arith.constant 0 : index
    %78 = vector.load %arg6[%c0_52, %c0_53, %c0_54] : memref<3x384x256xf32, #tpu.memory_space<vmem>>, vector<1x384x256xf32>
    %79 = vector.shape_cast %78 : vector<1x384x256xf32> to vector<384x256xf32>
    %cst_55 = arith.constant dense<0.000000e+00> : vector<160x256xf32>
    %80 = tpu.matmul %77, %79, %cst_55 {dimension_numbers = #tpu.dot_dimension_numbers<[1], [0], [0], [1], [0, 0, 1, 1], [], []>} : vector<160x384xf32>, vector<384x256xf32>, vector<160x256xf32> -> vector<160x256xf32>
    %c16_56 = arith.constant 16 : index
    %c0_57 = arith.constant 0 : index
    %81 = vector.load %arg11[%c16_56, %c0_57] : memref<192x384xf32, #tpu.memory_space<vmem>>, vector<160x384xf32>
    %c1_58 = arith.constant 1 : index
    %c0_59 = arith.constant 0 : index
    %c0_60 = arith.constant 0 : index
    %82 = vector.load %arg6[%c1_58, %c0_59, %c0_60] : memref<3x384x256xf32, #tpu.memory_space<vmem>>, vector<1x384x256xf32>
    %83 = vector.shape_cast %82 : vector<1x384x256xf32> to vector<384x256xf32>
    %cst_61 = arith.constant dense<0.000000e+00> : vector<160x256xf32>
    %84 = tpu.matmul %81, %83, %cst_61 {dimension_numbers = #tpu.dot_dimension_numbers<[1], [0], [0], [1], [0, 0, 1, 1], [], []>} : vector<160x384xf32>, vector<384x256xf32>, vector<160x256xf32> -> vector<160x256xf32>
    %85 = arith.addf %80, %84 : vector<160x256xf32>
    %c32_62 = arith.constant 32 : index
    %c0_63 = arith.constant 0 : index
    %86 = vector.load %arg11[%c32_62, %c0_63] : memref<192x384xf32, #tpu.memory_space<vmem>>, vector<160x384xf32>
    %c2_64 = arith.constant 2 : index
    %c0_65 = arith.constant 0 : index
    %c0_66 = arith.constant 0 : index
    %87 = vector.load %arg6[%c2_64, %c0_65, %c0_66] : memref<3x384x256xf32, #tpu.memory_space<vmem>>, vector<1x384x256xf32>
    %88 = vector.shape_cast %87 : vector<1x384x256xf32> to vector<384x256xf32>
    %cst_67 = arith.constant dense<0.000000e+00> : vector<160x256xf32>
    %89 = tpu.matmul %86, %88, %cst_67 {dimension_numbers = #tpu.dot_dimension_numbers<[1], [0], [0], [1], [0, 0, 1, 1], [], []>} : vector<160x384xf32>, vector<384x256xf32>, vector<160x256xf32> -> vector<160x256xf32>
    %90 = arith.addf %85, %89 : vector<160x256xf32>
    %c0_68 = arith.constant 0 : index
    %c0_69 = arith.constant 0 : index
    %91 = vector.load %arg7[%c0_68, %c0_69] : memref<1x256xf32, #tpu.memory_space<vmem>>, vector<1x256xf32>
    %92 = vector.broadcast %91 : vector<1x256xf32> to vector<160x256xf32>
    %93 = arith.addf %90, %92 : vector<160x256xf32>
    %cst_70 = arith.constant 0.000000e+00 : f32
    %94 = vector.broadcast %cst_70 : f32 to vector<160x256xf32>
    %95 = arith.maximumf %93, %94 : vector<160x256xf32>
    %cst_71 = arith.constant 0.000000e+00 : f32
    %96 = vector.shape_cast %21 : vector<160x1xi1> to vector<160x1xi1>
    %97 = vector.broadcast %96 : vector<160x1xi1> to vector<160x256xi1>
    %98 = vector.broadcast %cst_71 : f32 to vector<160x256xf32>
    %99 = arith.select %97, %95, %98 : vector<160x256xi1>, vector<160x256xf32>
    %cst_72 = arith.constant dense<0.000000e+00> : vector<256xf32>
    %100 = vector.multi_reduction <add>, %99, %cst_72 [0] : vector<160x256xf32> to vector<256xf32>
    %101 = vector.shape_cast %100 : vector<256xf32> to vector<1x256xf32>
    %c0_73 = arith.constant 0 : index
    %c0_74 = arith.constant 0 : index
    %102 = vector.load %arg8[%c0_73, %c0_74] : memref<256x32xf32, #tpu.memory_space<vmem>>, vector<256x32xf32>
    %cst_75 = arith.constant dense<0.000000e+00> : vector<1x32xf32>
    %103 = tpu.matmul %101, %102, %cst_75 {dimension_numbers = #tpu.dot_dimension_numbers<[1], [0], [0], [1], [0, 0, 1, 1], [], []>} : vector<1x256xf32>, vector<256x32xf32>, vector<1x32xf32> -> vector<1x32xf32>
    %104 = vector.shape_cast %103 : vector<1x32xf32> to vector<1x1x32xf32>
    %c0_76 = arith.constant 0 : index
    %c0_77 = arith.constant 0 : index
    %c0_78 = arith.constant 0 : index
    %105 = vector.load %arg9[%c0_76, %c0_77, %c0_78] : memref<1x1x32xf32, #tpu.memory_space<vmem>>, vector<1x1x32xf32>
    tpu.vector_store %arg9[%c0_76, %c0_77, %c0_78], %104 {strides = array<i32>} : memref<1x1x32xf32, #tpu.memory_space<vmem>>, vector<1x1x32xf32>,
    return
  }
  func.func @transform_0(%arg0: i32) -> (i32, i32, i32) {
    %c0_i32 = arith.constant 0 : i32
    %c0_i32_0 = arith.constant 0 : i32
    %c0_i32_1 = arith.constant 0 : i32
    return %arg0, %c0_i32, %c0_i32_0 : i32, i32, i32
  }
  func.func @transform_1(%arg0: i32) -> (i32, i32, i32) {
    %c0_i32 = arith.constant 0 : i32
    %c0_i32_0 = arith.constant 0 : i32
    %c0_i32_1 = arith.constant 0 : i32
    %c0_i32_2 = arith.constant 0 : i32
    return %c0_i32, %c0_i32_0, %c0_i32_1 : i32, i32, i32
  }
  func.func @transform_2(%arg0: i32) -> (i32, i32) {
    %c0_i32 = arith.constant 0 : i32
    %c0_i32_0 = arith.constant 0 : i32
    %c0_i32_1 = arith.constant 0 : i32
    return %c0_i32, %c0_i32_0 : i32, i32
  }
  func.func @transform_3(%arg0: i32) -> (i32, i32, i32) {
    %c0_i32 = arith.constant 0 : i32
    %c0_i32_0 = arith.constant 0 : i32
    %c0_i32_1 = arith.constant 0 : i32
    %c0_i32_2 = arith.constant 0 : i32
    return %c0_i32, %c0_i32_0, %c0_i32_1 : i32, i32, i32
  }
  func.func @transform_4(%arg0: i32) -> (i32, i32) {
    %c0_i32 = arith.constant 0 : i32
    %c0_i32_0 = arith.constant 0 : i32
    %c0_i32_1 = arith.constant 0 : i32
    return %c0_i32, %c0_i32_0 : i32, i32
  }
  func.func @transform_5(%arg0: i32) -> (i32, i32, i32) {
    %c0_i32 = arith.constant 0 : i32
    %c0_i32_0 = arith.constant 0 : i32
    %c0_i32_1 = arith.constant 0 : i32
    %c0_i32_2 = arith.constant 0 : i32
    return %c0_i32, %c0_i32_0, %c0_i32_1 : i32, i32, i32
  }
  func.func @transform_6(%arg0: i32) -> (i32, i32) {
    %c0_i32 = arith.constant 0 : i32
    %c0_i32_0 = arith.constant 0 : i32
    %c0_i32_1 = arith.constant 0 : i32
    return %c0_i32, %c0_i32_0 : i32, i32
  }
  func.func @transform_7(%arg0: i32) -> (i32, i32) {
    %c0_i32 = arith.constant 0 : i32
    %c0_i32_0 = arith.constant 0 : i32
    %c0_i32_1 = arith.constant 0 : i32
    return %c0_i32, %c0_i32_0 : i32, i32
  }
  func.func @transform_8(%arg0: i32) -> (i32, i32, i32) {
    %c0_i32 = arith.constant 0 : i32
    %c0_i32_0 = arith.constant 0 : i32
    %c0_i32_1 = arith.constant 0 : i32
    return %arg0, %c0_i32, %c0_i32_0 : i32, i32, i32
  }
}

</mosaic_0001>

<llo_original>
// kernel: tile.28
$region0: #{tile.28}
  #allocation0 [shape = 's32[1]{0}', space=sflag, size = 0x4, scoped, tag = 'scoped memory for tile.28']
  %s0 = inlined_call_operand.vmem [shape: f32[32], index: 0, kind: input, shape index: {}]
  %s1 = inlined_call_operand.vmem [shape: f32[8,32], index: 1, kind: output, shape index: {}]
  // Predicated region
  $region2: #{tile.28} parent=0 // pred_check
    _
  $region3: #{tile.28} parent=0 // pred_check_branch
    %3 = sbr.rel (0) target = $region5
  $region4: #{tile.28} parent=0 // pred_region
    _
  $region5: #{tile.28} parent=0 // pred_fallthru
    _
  %v4 = vld [vmem:[%s0] ss:$0 sm:$0xff]
  %5 = vst [vmem:[%s1] sm:$0xff] %v4

// kernel: tile.29
$region0: #{tile.29}
  %s0 = inlined_call_operand.vmem [shape: f32[8,32], index: 0, kind: input, shape index: {}]
  %s1 = inlined_call_operand.vmem [shape: f32[1,256], index: 1, kind: output, shape index: {}]
  $region1: #{tile.29} parent=0
    #allocation0 [shape = 'u8[8192]{0}', space=vmem, size = 0x2000, scoped, tag = 'scoped mem for output reshape']
    %s2 = smov 3
    %v3 = vld [vmem:[%s0] ss:$4 sm:%s2]
    %vm4 = vcmask 261120
    %5 = vst.msk [vmem:[#allocation0] ss:$8 sm:$0x3] %vm4, %v3
    %s6 = scalar_lea.vmem %s0, 3
    %s7 = smov 3
    %v8 = vld [vmem:[%s6] ss:$4 sm:%s7]
    %9 = vrot.lane.b32.xlu0 %v8, 96
    %v10 = vpop.permute.xlu0 %9
    %vm11 = vcmask 1048320
    %12 = vst.msk [vmem:[#allocation0] ss:$8 sm:$0x3] %vm11, %v10
    %s13 = scalar_lea.vmem %s0, 2
    %s14 = smov 3
    %v15 = vld [vmem:[%s13] ss:$4 sm:%s14]
    %16 = vrot.lane.b32.xlu0 %v15, 64
    %v17 = vpop.permute.xlu0 %16
    %vm18 = vcmask 785920
    %19 = vst.msk [vmem:[#allocation0] ss:$8 sm:$0x3] %vm18, %v17
    %s20 = scalar_lea.vmem %s0, 1
    %s21 = smov 3
    %v22 = vld [vmem:[%s20] ss:$4 sm:%s21]
    %23 = vrot.lane.b32.xlu0 %v22, 32
    %v24 = vpop.permute.xlu0 %23
    %vm25 = vcmask 523520
    %26 = vst.msk [vmem:[#allocation0] ss:$8 sm:$0x3] %vm25, %v24
    %s28 = sshll.u32 1, 1
    %s29 = ssub.s32 %s28, 1
    %v31 = vld [vmem:[#allocation0] sm:%s29]
    %s32 = sshll.u32 1, 1
    %s33 = ssub.s32 %s32, 1
    %34 = vst [vmem:[%s1] sm:%s33] %v31
    %s35 = scalar_lea.vmem [#allocation0], 8
    %v36 = vld [vmem:[%s35] sm:%s29]
    %s37 = sshll.u32 1, 1
    %s38 = ssub.s32 %s37, 1
    %s39 = scalar_lea.vmem %s1, 1
    %40 = vst [vmem:[%s39] sm:%s38] %v36

// kernel: tile.18
$region0: #{tile.18}
  #allocation0 [shape = 's32[1]{0}', space=sflag, size = 0x4, scoped, tag = 'scoped memory for tile.18']
  %s0 = inlined_call_operand.vmem [shape: f32[8], index: 0, kind: input, shape index: {}]
  %s1 = inlined_call_operand.vmem [shape: f32[8,8], index: 1, kind: output, shape index: {}]
  // Predicated region
  $region2: #{tile.18} parent=0 // pred_check
    _
  $region3: #{tile.18} parent=0 // pred_check_branch
    %3 = sbr.rel (0) target = $region5
  $region4: #{tile.18} parent=0 // pred_region
    _
  $region5: #{tile.18} parent=0 // pred_fallthru
    _
  %v4 = vld [vmem:[%s0] ss:$0 sm:$0xff]
  %5 = vst [vmem:[%s1] sm:$0xff] %v4

// kernel: tile.19
$region0: #{tile.19}
  %s0 = inlined_call_operand.vmem [shape: f32[8,8], index: 0, kind: input, shape index: {}]
  %s1 = inlined_call_operand.vmem [shape: f32[1,64], index: 1, kind: output, shape index: {}]
  $region1: #{tile.19} parent=0
    #allocation0 [shape = 'u8[4096]{0}', space=vmem, size = 0x1000, scoped, tag = 'scoped mem for output reshape']
    %v2 = vld [vmem:[%s0] sm:$0x1]
    %vm3 = vcmask 64512
    %4 = vst.msk [vmem:[#allocation0] sm:$0x1] %vm3, %v2
    %s5 = scalar_lea.vmem %s0, 7
    %v6 = vld [vmem:[%s5] sm:$0x1]
    %7 = vrot.lane.b32.xlu0 %v6, 56
    %v8 = vpop.permute.xlu0 %7
    %vm9 = vcmask 523712
    %10 = vst.msk [vmem:[#allocation0] sm:$0x1] %vm9, %v8
    %s11 = scalar_lea.vmem %s0, 6
    %v12 = vld [vmem:[%s11] sm:$0x1]
    %13 = vrot.lane.b32.xlu0 %v12, 48
    %v14 = vpop.permute.xlu0 %13
    %vm15 = vcmask 458112
    %16 = vst.msk [vmem:[#allocation0] sm:$0x1] %vm15, %v14
    %s17 = scalar_lea.vmem %s0, 5
    %v18 = vld [vmem:[%s17] sm:$0x1]
    %19 = vrot.lane.b32.xlu0 %v18, 40
    %v20 = vpop.permute.xlu0 %19
    %vm21 = vcmask 392512
    %22 = vst.msk [vmem:[#allocation0] sm:$0x1] %vm21, %v20
    %s23 = scalar_lea.vmem %s0, 4
    %v24 = vld [vmem:[%s23] sm:$0x1]
    %25 = vrot.lane.b32.xlu0 %v24, 32
    %v26 = vpop.permute.xlu0 %25
    %vm27 = vcmask 326912
    %28 = vst.msk [vmem:[#allocation0] sm:$0x1] %vm27, %v26
    %s29 = scalar_lea.vmem %s0, 3
    %v30 = vld [vmem:[%s29] sm:$0x1]
    %31 = vrot.lane.b32.xlu0 %v30, 24
    %v32 = vpop.permute.xlu0 %31
    %vm33 = vcmask 261312
    %34 = vst.msk [vmem:[#allocation0] sm:$0x1] %vm33, %v32
    %s35 = scalar_lea.vmem %s0, 2
    %v36 = vld [vmem:[%s35] sm:$0x1]
    %37 = vrot.lane.b32.xlu0 %v36, 16
    %v38 = vpop.permute.xlu0 %37
    %vm39 = vcmask 195712
    %40 = vst.msk [vmem:[#allocation0] sm:$0x1] %vm39, %v38
    %s41 = scalar_lea.vmem %s0, 1
    %v42 = vld [vmem:[%s41] sm:$0x1]
    %43 = vrot.lane.b32.xlu0 %v42, 8
    %v44 = vpop.permute.xlu0 %43
    %vm45 = vcmask 130112
    %46 = vst.msk [vmem:[#allocation0] sm:$0x1] %vm45, %v44
    %s48 = sshll.u32 1, 1
    %s49 = ssub.s32 %s48, 1
    %v51 = vld [vmem:[#allocation0] sm:%s49]
    %s52 = sshll.u32 1, 1
    %s53 = ssub.s32 %s52, 1
    %54 = vst [vmem:[%s1] sm:%s53] %v51

// kernel: tile.23
$region0: #{tile.23}
  #allocation0 [shape = 's32[1]{0}', space=sflag, size = 0x4, scoped, tag = 'scoped memory for tile.23']
  %s0 = inlined_call_operand.vmem [shape: f32[16], index: 0, kind: input, shape index: {}]
  %s1 = inlined_call_operand.vmem [shape: f32[8,16], index: 1, kind: output, shape index: {}]
  // Predicated region
  $region2: #{tile.23} parent=0 // pred_check
    _
  $region3: #{tile.23} parent=0 // pred_check_branch
    %3 = sbr.rel (0) target = $region5
  $region4: #{tile.23} parent=0 // pred_region
    _
  $region5: #{tile.23} parent=0 // pred_fallthru
    _
  %v4 = vld [vmem:[%s0] ss:$0 sm:$0xff]
  %5 = vst [vmem:[%s1] sm:$0xff] %v4

// kernel: tile.24
$region0: #{tile.24}
  %s0 = inlined_call_operand.vmem [shape: f32[8,16], index: 0, kind: input, shape index: {}]
  %s1 = inlined_call_operand.vmem [shape: f32[1,128], index: 1, kind: output, shape index: {}]
  $region1: #{tile.24} parent=0
    #allocation0 [shape = 'u8[4096]{0}', space=vmem, size = 0x1000, scoped, tag = 'scoped mem for output reshape']
    %v2 = vld [vmem:[%s0] sm:$0x1]
    %vm3 = vcmask 130048
    %4 = vst.msk [vmem:[#allocation0] sm:$0x1] %vm3, %v2
    %s5 = scalar_lea.vmem %s0, 7
    %v6 = vld [vmem:[%s5] sm:$0x1]
    %7 = vrot.lane.b32.xlu0 %v6, 112
    %v8 = vpop.permute.xlu0 %7
    %vm9 = vcmask 1048448
    %10 = vst.msk [vmem:[#allocation0] sm:$0x1] %vm9, %v8
    %s11 = scalar_lea.vmem %s0, 6
    %v12 = vld [vmem:[%s11] sm:$0x1]
    %13 = vrot.lane.b32.xlu0 %v12, 96
    %v14 = vpop.permute.xlu0 %13
    %vm15 = vcmask 917248
    %16 = vst.msk [vmem:[#allocation0] sm:$0x1] %vm15, %v14
    %s17 = scalar_lea.vmem %s0, 5
    %v18 = vld [vmem:[%s17] sm:$0x1]
    %19 = vrot.lane.b32.xlu0 %v18, 80
    %v20 = vpop.permute.xlu0 %19
    %vm21 = vcmask 786048
    %22 = vst.msk [vmem:[#allocation0] sm:$0x1] %vm21, %v20
    %s23 = scalar_lea.vmem %s0, 4
    %v24 = vld [vmem:[%s23] sm:$0x1]
    %25 = vrot.lane.b32.xlu0 %v24, 64
    %v26 = vpop.permute.xlu0 %25
    %vm27 = vcmask 654848
    %28 = vst.msk [vmem:[#allocation0] sm:$0x1] %vm27, %v26
    %s29 = scalar_lea.vmem %s0, 3
    %v30 = vld [vmem:[%s29] sm:$0x1]
    %31 = vrot.lane.b32.xlu0 %v30, 48
    %v32 = vpop.permute.xlu0 %31
    %vm33 = vcmask 523648
    %34 = vst.msk [vmem:[#allocation0] sm:$0x1] %vm33, %v32
    %s35 = scalar_lea.vmem %s0, 2
    %v36 = vld [vmem:[%s35] sm:$0x1]
    %37 = vrot.lane.b32.xlu0 %v36, 32
    %v38 = vpop.permute.xlu0 %37
    %vm39 = vcmask 392448
    %40 = vst.msk [vmem:[#allocation0] sm:$0x1] %vm39, %v38
    %s41 = scalar_lea.vmem %s0, 1
    %v42 = vld [vmem:[%s41] sm:$0x1]
    %43 = vrot.lane.b32.xlu0 %v42, 16
    %v44 = vpop.permute.xlu0 %43
    %vm45 = vcmask 261248
    %46 = vst.msk [vmem:[#allocation0] sm:$0x1] %vm45, %v44
    %s48 = sshll.u32 1, 1
    %s49 = ssub.s32 %s48, 1
    %v51 = vld [vmem:[#allocation0] sm:%s49]
    %s52 = sshll.u32 1, 1
    %s53 = ssub.s32 %s52, 1
    %54 = vst [vmem:[%s1] sm:%s53] %v51

// kernel: simple3d_perceptual_net.1
$region0: #{simple3d_perceptual_net.1}
  #allocation0 [shape = 'u32[]', space=smem, size = 0x4, offset = 0x4, fixed_abs, tag = 'smem constant byte address 0x4 - core index']
  #allocation1 [shape = 'u32[144,128]{1,0:T(1,128)}', space=vmem, size = 0x12000, scoped, tag = 'internal scratch']
  #allocation2 [shape = 'f32[192,192]{1,0:T(8,128)}', space=vmem, size = 0x30000, scoped, tag = 'scratch operand']
  #allocation3 [shape = 'f32[192,384]{1,0:T(8,128)}', space=vmem, size = 0x48000, scoped, tag = 'scratch operand']
  %s0 = inlined_call_operand.vmem [shape: f32[2,192,96], index: 0, kind: input, shape index: {}]
  %s1 = inlined_call_operand.vmem [shape: f32[3,96,64], index: 1, kind: input, shape index: {}]
  %s2 = inlined_call_operand.vmem [shape: f32[1,64], index: 2, kind: input, shape index: {}]
  %s3 = inlined_call_operand.vmem [shape: f32[3,192,128], index: 3, kind: input, shape index: {}]
  %s4 = inlined_call_operand.vmem [shape: f32[1,128], index: 4, kind: input, shape index: {}]
  %s5 = inlined_call_operand.vmem [shape: f32[3,384,256], index: 5, kind: input, shape index: {}]
  %s6 = inlined_call_operand.vmem [shape: f32[1,256], index: 6, kind: input, shape index: {}]
  %s7 = inlined_call_operand.vmem [shape: f32[256,32], index: 7, kind: input, shape index: {}]
  %s8 = inlined_call_operand.hbm [shape: f32[2,1,32], index: 8, kind: output, shape index: {}]
  %s9 = sld [smem:[#allocation0]]
  $region65: #{simple3d_perceptual_net.1} parent=0
    _
  %s11 = ssub.s32 1, %s9
  %s12 = scalar_select 0, %s11, %s9
  $region1: #{simple3d_perceptual_net.1} parent=0
    #allocation4 [shape = 'u8[1024]{0}', space=vmem, size = 0x400, scoped, tag = 'output window, operand 0']
    #allocation5 [shape = 's32[2]{0}', space=sflag, size = 0x8, scoped, tag = 'scoped memory for simple3d_perceptual_net.1']
    %13 = vsyncpa [#allocation5], 0
    %s14 = scalar_lea.sflag [#allocation5], 1
    %15 = vsyncpa %s14, 0
    loop: start=0, step=1, limit=4
    $region2: #{simple3d_perceptual_net.1} parent=1 // loop_pre_header
      _
    $region3: #{simple3d_perceptual_net.1} parent=1 // loop_header
      %s17 = sphi 0, %s21
      %p18 = scmp.ge.s32.totalorder %s17, 4
      %s27 = sphi 0, %s29
      %s30 = sphi 0, %s27
      %s31 = sphi 0, %s30
      %s47 = sphi 0, %s31
      %s51 = sphi 0, %s51
      %s53 = sphi 0, %s51
      %s54 = sphi 0, %s53
      %s68 = sphi 0, %s54
      %s72 = sphi 0, %s72
      %s74 = sphi 0, %s72
      %s75 = sphi 0, %s74
      %s89 = sphi 0, %s75
      %s93 = sphi 0, %s93
      %s95 = sphi 0, %s93
      %s96 = sphi 0, %s95
      %s110 = sphi 0, %s96
      %s114 = sphi 0, %s114
      %s116 = sphi 0, %s114
      %s117 = sphi 0, %s116
      %s131 = sphi 0, %s117
      %s135 = sphi 0, %s135
      %s137 = sphi 0, %s135
      %s138 = sphi 0, %s137
      %s152 = sphi 0, %s138
      %s156 = sphi 0, %s156
      %s158 = sphi 0, %s156
      %s159 = sphi 0, %s158
      %s173 = sphi 0, %s159
      %s177 = sphi 0, %s177
      %s179 = sphi 0, %s177
      %s180 = sphi 0, %s179
      %s194 = sphi 0, %s180
      %s200 = sphi 0, %s202
      %s203 = sphi 0, %s200
      %s204 = sphi 0, %s203
      %s220 = sphi 0, %s204
    $region4: #{simple3d_perceptual_net.1} parent=1 // loop_header_branch
      %20 = sbr.rel (%p18) target = $region8
    $region5: #{simple3d_perceptual_net.1} parent=1 // loop_body
      %s22 = ssub.s32 %s17, 1
      %s23 = ssub.s32 %s17, 2
      %s24 = sadd.s32 %s17, 1
      %s25 = ssub.s32 %s17, %s24
      %p26 = scmp.eq.s32.totalorder %s25, 0
      %s28 = sadd.s32 %s27, 1
      %s29 = scalar_select %p26, %s27, %s28
      %p32 = pneg %p26
      %p33 = scmp.eq.s32.totalorder %s17, 1
      %p34 = por %p32, %p33
      %p35 = scmp.ne.s32.totalorder %s27, %s30
      %p36 = scmp.eq.s32.totalorder %s17, 0
      %p37 = por %p35, %p36
      %p38 = scmp.ne.s32.totalorder %s27, %s30
      %p39 = scmp.eq.s32.totalorder %s22, 1
      %p40 = por %p38, %p39
      %p41 = scmp.ne.s32.totalorder %s30, %s31
      %p42 = scmp.eq.s32.totalorder %s22, 0
      %p43 = por %p41, %p42
      %p44 = scmp.ne.s32.totalorder %s30, %s31
      %p45 = scmp.eq.s32.totalorder %s23, 1
      %p46 = por %p44, %p45
      %p48 = scmp.ne.s32.totalorder %s31, %s47
      %p49 = scmp.eq.s32.totalorder %s23, 0
      %p50 = por %p48, %p49
      %s52 = sadd.s32 %s51, 1
      %p55 = scmp.eq.s32.totalorder %s17, 1
      %p56 = scmp.ne.s32.totalorder %s51, %s53
      %p57 = scmp.eq.s32.totalorder %s17, 0
      %p58 = por %p56, %p57
      %p59 = scmp.ne.s32.totalorder %s51, %s53
      %p60 = scmp.eq.s32.totalorder %s22, 1
      %p61 = por %p59, %p60
      %p62 = scmp.ne.s32.totalorder %s53, %s54
      %p63 = scmp.eq.s32.totalorder %s22, 0
      %p64 = por %p62, %p63
      %p65 = scmp.ne.s32.totalorder %s53, %s54
      %p66 = scmp.eq.s32.totalorder %s23, 1
      %p67 = por %p65, %p66
      %p69 = scmp.ne.s32.totalorder %s54, %s68
      %p70 = scmp.eq.s32.totalorder %s23, 0
      %p71 = por %p69, %p70
      %s73 = sadd.s32 %s72, 1
      %p76 = scmp.eq.s32.totalorder %s17, 1
      %p77 = scmp.ne.s32.totalorder %s72, %s74
      %p78 = scmp.eq.s32.totalorder %s17, 0
      %p79 = por %p77, %p78
      %p80 = scmp.ne.s32.totalorder %s72, %s74
      %p81 = scmp.eq.s32.totalorder %s22, 1
      %p82 = por %p80, %p81
      %p83 = scmp.ne.s32.totalorder %s74, %s75
      %p84 = scmp.eq.s32.totalorder %s22, 0
      %p85 = por %p83, %p84
      %p86 = scmp.ne.s32.totalorder %s74, %s75
      %p87 = scmp.eq.s32.totalorder %s23, 1
      %p88 = por %p86, %p87
      %p90 = scmp.ne.s32.totalorder %s75, %s89
      %p91 = scmp.eq.s32.totalorder %s23, 0
      %p92 = por %p90, %p91
      %s94 = sadd.s32 %s93, 1
      %p97 = scmp.eq.s32.totalorder %s17, 1
      %p98 = scmp.ne.s32.totalorder %s93, %s95
      %p99 = scmp.eq.s32.totalorder %s17, 0
      %p100 = por %p98, %p99
      %p101 = scmp.ne.s32.totalorder %s93, %s95
      %p102 = scmp.eq.s32.totalorder %s22, 1
      %p103 = por %p101, %p102
      %p104 = scmp.ne.s32.totalorder %s95, %s96
      %p105 = scmp.eq.s32.totalorder %s22, 0
      %p106 = por %p104, %p105
      %p107 = scmp.ne.s32.totalorder %s95, %s96
      %p108 = scmp.eq.s32.totalorder %s23, 1
      %p109 = por %p107, %p108
      %p111 = scmp.ne.s32.totalorder %s96, %s110
      %p112 = scmp.eq.s32.totalorder %s23, 0
      %p113 = por %p111, %p112
      %s115 = sadd.s32 %s114, 1
      %p118 = scmp.eq.s32.totalorder %s17, 1
      %p119 = scmp.ne.s32.totalorder %s114, %s116
      %p120 = scmp.eq.s32.totalorder %s17, 0
      %p121 = por %p119, %p120
      %p122 = scmp.ne.s32.totalorder %s114, %s116
      %p123 = scmp.eq.s32.totalorder %s22, 1
      %p124 = por %p122, %p123
      %p125 = scmp.ne.s32.totalorder %s116, %s117
      %p126 = scmp.eq.s32.totalorder %s22, 0
      %p127 = por %p125, %p126
      %p128 = scmp.ne.s32.totalorder %s116, %s117
      %p129 = scmp.eq.s32.totalorder %s23, 1
      %p130 = por %p128, %p129
      %p132 = scmp.ne.s32.totalorder %s117, %s131
      %p133 = scmp.eq.s32.totalorder %s23, 0
      %p134 = por %p132, %p133
      %s136 = sadd.s32 %s135, 1
      %p139 = scmp.eq.s32.totalorder %s17, 1
      %p140 = scmp.ne.s32.totalorder %s135, %s137
      %p141 = scmp.eq.s32.totalorder %s17, 0
      %p142 = por %p140, %p141
      %p143 = scmp.ne.s32.totalorder %s135, %s137
      %p144 = scmp.eq.s32.totalorder %s22, 1
      %p145 = por %p143, %p144
      %p146 = scmp.ne.s32.totalorder %s137, %s138
      %p147 = scmp.eq.s32.totalorder %s22, 0
      %p148 = por %p146, %p147
      %p149 = scmp.ne.s32.totalorder %s137, %s138
      %p150 = scmp.eq.s32.totalorder %s23, 1
      %p151 = por %p149, %p150
      %p153 = scmp.ne.s32.totalorder %s138, %s152
      %p154 = scmp.eq.s32.totalorder %s23, 0
      %p155 = por %p153, %p154
      %s157 = sadd.s32 %s156, 1
      %p160 = scmp.eq.s32.totalorder %s17, 1
      %p161 = scmp.ne.s32.totalorder %s156, %s158
      %p162 = scmp.eq.s32.totalorder %s17, 0
      %p163 = por %p161, %p162
      %p164 = scmp.ne.s32.totalorder %s156, %s158
      %p165 = scmp.eq.s32.totalorder %s22, 1
      %p166 = por %p164, %p165
      %p167 = scmp.ne.s32.totalorder %s158, %s159
      %p168 = scmp.eq.s32.totalorder %s22, 0
      %p169 = por %p167, %p168
      %p170 = scmp.ne.s32.totalorder %s158, %s159
      %p171 = scmp.eq.s32.totalorder %s23, 1
      %p172 = por %p170, %p171
      %p174 = scmp.ne.s32.totalorder %s159, %s173
      %p175 = scmp.eq.s32.totalorder %s23, 0
      %p176 = por %p174, %p175
      %s178 = sadd.s32 %s177, 1
      %p181 = scmp.eq.s32.totalorder %s17, 1
      %p182 = scmp.ne.s32.totalorder %s177, %s179
      %p183 = scmp.eq.s32.totalorder %s17, 0
      %p184 = por %p182, %p183
      %p185 = scmp.ne.s32.totalorder %s177, %s179
      %p186 = scmp.eq.s32.totalorder %s22, 1
      %p187 = por %p185, %p186
      %p188 = scmp.ne.s32.totalorder %s179, %s180
      %p189 = scmp.eq.s32.totalorder %s22, 0
      %p190 = por %p188, %p189
      %p191 = scmp.ne.s32.totalorder %s179, %s180
      %p192 = scmp.eq.s32.totalorder %s23, 1
      %p193 = por %p191, %p192
      %p195 = scmp.ne.s32.totalorder %s180, %s194
      %p196 = scmp.eq.s32.totalorder %s23, 0
      %p197 = por %p195, %p196
      %s198 = ssub.s32 %s17, %s24
      %p199 = scmp.eq.s32.totalorder %s198, 0
      %s201 = sadd.s32 %s200, 1
      %s202 = scalar_select %p199, %s200, %s201
      %p205 = pneg %p199
      %p206 = scmp.eq.s32.totalorder %s17, 1
      %p207 = por %p205, %p206
      %p208 = scmp.ne.s32.totalorder %s200, %s203
      %p209 = scmp.eq.s32.totalorder %s17, 0
      %p210 = por %p208, %p209
      %p211 = scmp.ne.s32.totalorder %s200, %s203
      %p212 = scmp.eq.s32.totalorder %s22, 1
      %p213 = por %p211, %p212
      %p214 = scmp.ne.s32.totalorder %s203, %s204
      %p215 = scmp.eq.s32.totalorder %s22, 0
      %p216 = por %p214, %p215
      %p217 = scmp.ne.s32.totalorder %s203, %s204
      %p218 = scmp.eq.s32.totalorder %s23, 1
      %p219 = por %p217, %p218
      %p221 = scmp.ne.s32.totalorder %s204, %s220
      %p222 = scmp.eq.s32.totalorder %s23, 0
      %p223 = por %p221, %p222
      %p224 = scmp.le.s32.totalorder 1, %s17
      %p225 = scmp.lt.s32.totalorder %s17, 3
      %p226 = pnand %p224, %p225
      %p227 = pneg %p226
      // Predicated region
      $region9: #{simple3d_perceptual_net.1} parent=5 // pred_check
        _
      $region10: #{simple3d_perceptual_net.1} parent=5 // pred_check_branch
        %229 = sbr.rel (%p226) target = $region12
      $region11: #{simple3d_perceptual_net.1} parent=5 // pred_region
        %s230 = ssub.s32 %s17, 1
        // Predicated region
        $region13: #{simple3d_perceptual_net.1} parent=11 // pred_check
          %p231 = pneg %p64
        $region14: #{simple3d_perceptual_net.1} parent=11 // pred_check_branch
          %233 = sbr.rel (%p231) target = $region16
        $region15: #{simple3d_perceptual_net.1} parent=11 // pred_region
          _
        $region16: #{simple3d_perceptual_net.1} parent=11 // pred_fallthru
          _
        // Predicated region
        $region17: #{simple3d_perceptual_net.1} parent=11 // pred_check
          %p234 = pneg %p85
        $region18: #{simple3d_perceptual_net.1} parent=11 // pred_check_branch
          %236 = sbr.rel (%p234) target = $region20
        $region19: #{simple3d_perceptual_net.1} parent=11 // pred_region
          _
        $region20: #{simple3d_perceptual_net.1} parent=11 // pred_fallthru
          _
        // Predicated region
        $region21: #{simple3d_perceptual_net.1} parent=11 // pred_check
          %p237 = pneg %p106
        $region22: #{simple3d_perceptual_net.1} parent=11 // pred_check_branch
          %239 = sbr.rel (%p237) target = $region24
        $region23: #{simple3d_perceptual_net.1} parent=11 // pred_region
          _
        $region24: #{simple3d_perceptual_net.1} parent=11 // pred_fallthru
          _
        // Predicated region
        $region25: #{simple3d_perceptual_net.1} parent=11 // pred_check
          %p240 = pneg %p127
        $region26: #{simple3d_perceptual_net.1} parent=11 // pred_check_branch
          %242 = sbr.rel (%p240) target = $region28
        $region27: #{simple3d_perceptual_net.1} parent=11 // pred_region
          _
        $region28: #{simple3d_perceptual_net.1} parent=11 // pred_fallthru
          _
        // Predicated region
        $region29: #{simple3d_perceptual_net.1} parent=11 // pred_check
          %p243 = pneg %p148
        $region30: #{simple3d_perceptual_net.1} parent=11 // pred_check_branch
          %245 = sbr.rel (%p243) target = $region32
        $region31: #{simple3d_perceptual_net.1} parent=11 // pred_region
          _
        $region32: #{simple3d_perceptual_net.1} parent=11 // pred_fallthru
          _
        // Predicated region
        $region33: #{simple3d_perceptual_net.1} parent=11 // pred_check
          %p246 = pneg %p169
        $region34: #{simple3d_perceptual_net.1} parent=11 // pred_check_branch
          %248 = sbr.rel (%p246) target = $region36
        $region35: #{simple3d_perceptual_net.1} parent=11 // pred_region
          _
        $region36: #{simple3d_perceptual_net.1} parent=11 // pred_fallthru
          _
        // Predicated region
        $region37: #{simple3d_perceptual_net.1} parent=11 // pred_check
          %p249 = pneg %p190
        $region38: #{simple3d_perceptual_net.1} parent=11 // pred_check_branch
          %251 = sbr.rel (%p249) target = $region40
        $region39: #{simple3d_perceptual_net.1} parent=11 // pred_region
          _
        $region40: #{simple3d_perceptual_net.1} parent=11 // pred_fallthru
          _
      $region12: #{simple3d_perceptual_net.1} parent=5 // pred_fallthru
        _
      %p252 = scmp.lt.s32.totalorder %s17, 2
      // Predicated region
      $region41: #{simple3d_perceptual_net.1} parent=5 // pred_check
        %p253 = pneg %p252
      $region42: #{simple3d_perceptual_net.1} parent=5 // pred_check_branch
        %255 = sbr.rel (%p253) target = $region44
      $region43: #{simple3d_perceptual_net.1} parent=5 // pred_region
        // Predicated region
        $region45: #{simple3d_perceptual_net.1} parent=43 // pred_check
          %p256 = pneg %p37
        $region46: #{simple3d_perceptual_net.1} parent=43 // pred_check_branch
          %258 = sbr.rel (%p256) target = $region48
        $region47: #{simple3d_perceptual_net.1} parent=43 // pred_region
          %p259 = scmp.lt.s32.totalorder %s17, 1
          %s260 = scalar_select %p259, %s17, 1
          %s261 = smul.addr %s260, 24
          %s262 = smul.addr %s261, 8
          %s263 = scalar_lea.vmem %s0, %s262
        $region48: #{simple3d_perceptual_net.1} parent=43 // pred_fallthru
          _
      $region44: #{simple3d_perceptual_net.1} parent=5 // pred_fallthru
        _
      %p264 = scmp.le.s32.totalorder 1, %s17
      %p265 = scmp.lt.s32.totalorder %s17, 3
      %p266 = pnand %p264, %p265
      %p267 = pneg %p266
      // Predicated region
      $region49: #{simple3d_perceptual_net.1} parent=5 // pred_check
        _
      $region50: #{simple3d_perceptual_net.1} parent=5 // pred_check_branch
        %269 = sbr.rel (%p266) target = $region52
      $region51: #{simple3d_perceptual_net.1} parent=5 // pred_region
        %s270 = ssub.s32 %s17, 1
        %p271 = scmp.lt.s32.totalorder %s22, 1
        %s272 = scalar_select %p271, %s22, 1
        %s273 = smul.addr %s272, 24
        %s274 = smul.addr %s273, 8
        %s275 = scalar_lea.vmem %s0, %s274
        %p276 = pneg %p43
        %p277 = pneg %p40
        %p278 = pneg %p64
        %p279 = pneg %p61
        %p280 = pneg %p85
        %p281 = pneg %p82
        %p282 = pneg %p106
        %p283 = pneg %p103
        %p284 = pneg %p127
        %p285 = pneg %p124
        %p286 = pneg %p148
        %p287 = pneg %p145
        %p288 = pneg %p169
        %p289 = pneg %p166
        %p290 = pneg %p190
        %p291 = pneg %p187
        %p292 = pneg %p216
        %p293 = pneg %p213
        %s294 = sand.u32 %s203, 1
        %s295 = scalar_lea.sflag [#allocation5], %s294
        %s296 = sand.u32 %s203, 1
        %s297 = scalar_lea.vmem [#allocation4], %s296
        %p298 = scmp.lt.s32.totalorder %s22, 1
        %s299 = scalar_select %p298, %s22, 1
        %s300 = smul.addr %s299, 24
        %s301 = smul.addr %s300, 8
        %s302 = scalar_lea.vmem %s0, %s301
        %v303 = vlaneseq
        %v304 = vshrl.u32 %v303, 7
        %v305 = vadd.s32 %v304, 8
        %v306 = vadd.s32 %v304, 16
        %v307 = vadd.s32 %v304, 24
        %v308 = vadd.s32 %v304, 32
        %v309 = vadd.s32 %v304, 40
        %v310 = vadd.s32 %v304, 48
        %v311 = vadd.s32 %v304, 56
        %v312 = vadd.s32 %v304, 64
        %v313 = vadd.s32 %v304, 72
        %v314 = vadd.s32 %v304, 80
        %v315 = vadd.s32 %v304, 88
        %v316 = vadd.s32 %v304, 96
        %v317 = vadd.s32 %v304, 104
        %v318 = vadd.s32 %v304, 112
        %v319 = vadd.s32 %v304, 120
        %v320 = vadd.s32 %v304, 128
        %v321 = vadd.s32 %v304, 136
        %v322 = vadd.s32 %v304, 144
        %v323 = vadd.s32 %v304, 152
        %v324 = vand.u32 %v304, 15
        %v325 = vand.u32 %v305, 15
        %v326 = vand.u32 %v306, 15
        %v327 = vand.u32 %v307, 15
        %v328 = vand.u32 %v308, 15
        %v329 = vand.u32 %v309, 15
        %v330 = vand.u32 %v310, 15
        %v331 = vand.u32 %v311, 15
        %v332 = vand.u32 %v312, 15
        %v333 = vand.u32 %v313, 15
        %v334 = vand.u32 %v314, 15
        %v335 = vand.u32 %v315, 15
        %v336 = vand.u32 %v316, 15
        %v337 = vand.u32 %v317, 15
        %v338 = vand.u32 %v318, 15
        %v339 = vand.u32 %v319, 15
        %v340 = vand.u32 %v320, 15
        %v341 = vand.u32 %v321, 15
        %v342 = vand.u32 %v322, 15
        %v343 = vand.u32 %v323, 15
        %vm344 = vcmp.ge.s32.totalorder %v324, 1
        %vm345 = vcmp.ge.s32.totalorder %v325, 1
        %vm346 = vcmp.ge.s32.totalorder %v326, 1
        %vm347 = vcmp.ge.s32.totalorder %v327, 1
        %vm348 = vcmp.ge.s32.totalorder %v328, 1
        %vm349 = vcmp.ge.s32.totalorder %v329, 1
        %vm350 = vcmp.ge.s32.totalorder %v330, 1
        %vm351 = vcmp.ge.s32.totalorder %v331, 1
        %vm352 = vcmp.ge.s32.totalorder %v332, 1
        %vm353 = vcmp.ge.s32.totalorder %v333, 1
        %vm354 = vcmp.ge.s32.totalorder %v334, 1
        %vm355 = vcmp.ge.s32.totalorder %v335, 1
        %vm356 = vcmp.ge.s32.totalorder %v336, 1
        %vm357 = vcmp.ge.s32.totalorder %v337, 1
        %vm358 = vcmp.ge.s32.totalorder %v338, 1
        %vm359 = vcmp.ge.s32.totalorder %v339, 1
        %vm360 = vcmp.ge.s32.totalorder %v340, 1
        %vm361 = vcmp.ge.s32.totalorder %v341, 1
        %vm362 = vcmp.ge.s32.totalorder %v342, 1
        %vm363 = vcmp.ge.s32.totalorder %v343, 1
        %vm364 = vcmp.le.s32.totalorder %v324, 8
        %vm365 = vcmp.le.s32.totalorder %v325, 8
        %vm366 = vcmp.le.s32.totalorder %v326, 8
        %vm367 = vcmp.le.s32.totalorder %v327, 8
        %vm368 = vcmp.le.s32.totalorder %v328, 8
        %vm369 = vcmp.le.s32.totalorder %v329, 8
        %vm370 = vcmp.le.s32.totalorder %v330, 8
        %vm371 = vcmp.le.s32.totalorder %v331, 8
        %vm372 = vcmp.le.s32.totalorder %v332, 8
        %vm373 = vcmp.le.s32.totalorder %v333, 8
        %vm374 = vcmp.le.s32.totalorder %v334, 8
        %vm375 = vcmp.le.s32.totalorder %v335, 8
        %vm376 = vcmp.le.s32.totalorder %v336, 8
        %vm377 = vcmp.le.s32.totalorder %v337, 8
        %vm378 = vcmp.le.s32.totalorder %v338, 8
        %vm379 = vcmp.le.s32.totalorder %v339, 8
        %vm380 = vcmp.le.s32.totalorder %v340, 8
        %vm381 = vcmp.le.s32.totalorder %v341, 8
        %vm382 = vcmp.le.s32.totalorder %v342, 8
        %vm383 = vcmp.le.s32.totalorder %v343, 8
        %vm384 = vmand %vm344, %vm364
        %vm385 = vmand %vm345, %vm365
        %vm386 = vmand %vm346, %vm366
        %vm387 = vmand %vm347, %vm367
        %vm388 = vmand %vm348, %vm368
        %vm389 = vmand %vm349, %vm369
        %vm390 = vmand %vm350, %vm370
        %vm391 = vmand %vm351, %vm371
        %vm392 = vmand %vm352, %vm372
        %vm393 = vmand %vm353, %vm373
        %vm394 = vmand %vm354, %vm374
        %vm395 = vmand %vm355, %vm375
        %vm396 = vmand %vm356, %vm376
        %vm397 = vmand %vm357, %vm377
        %vm398 = vmand %vm358, %vm378
        %vm399 = vmand %vm359, %vm379
        %vm400 = vmand %vm360, %vm380
        %vm401 = vmand %vm361, %vm381
        %vm402 = vmand %vm362, %vm382
        %vm403 = vmand %vm363, %vm383
        %vm404 = vcmp.ge.s32.totalorder %v304, 0
        %vm405 = vcmp.ge.s32.totalorder %v305, 0
        %vm406 = vcmp.ge.s32.totalorder %v306, 0
        %vm407 = vcmp.ge.s32.totalorder %v307, 0
        %vm408 = vcmp.ge.s32.totalorder %v308, 0
        %vm409 = vcmp.ge.s32.totalorder %v309, 0
        %vm410 = vcmp.ge.s32.totalorder %v310, 0
        %vm411 = vcmp.ge.s32.totalorder %v311, 0
        %vm412 = vcmp.ge.s32.totalorder %v312, 0
        %vm413 = vcmp.ge.s32.totalorder %v313, 0
        %vm414 = vcmp.ge.s32.totalorder %v314, 0
        %vm415 = vcmp.ge.s32.totalorder %v315, 0
        %vm416 = vcmp.ge.s32.totalorder %v316, 0
        %vm417 = vcmp.ge.s32.totalorder %v317, 0
        %vm418 = vcmp.ge.s32.totalorder %v318, 0
        %vm419 = vcmp.ge.s32.totalorder %v319, 0
        %vm420 = vcmp.ge.s32.totalorder %v320, 0
        %vm421 = vcmp.ge.s32.totalorder %v321, 0
        %vm422 = vcmp.ge.s32.totalorder %v322, 0
        %vm423 = vcmp.ge.s32.totalorder %v323, 0
        %vm424 = vcmp.lt.s32.totalorder %v304, 16
        %vm425 = vcmp.lt.s32.totalorder %v305, 16
        %vm426 = vcmp.lt.s32.totalorder %v306, 16
        %vm427 = vcmp.lt.s32.totalorder %v307, 16
        %vm428 = vcmp.lt.s32.totalorder %v308, 16
        %vm429 = vcmp.lt.s32.totalorder %v309, 16
        %vm430 = vcmp.lt.s32.totalorder %v310, 16
        %vm431 = vcmp.lt.s32.totalorder %v311, 16
        %vm432 = vcmp.lt.s32.totalorder %v312, 16
        %vm433 = vcmp.lt.s32.totalorder %v313, 16
        %vm434 = vcmp.lt.s32.totalorder %v314, 16
        %vm435 = vcmp.lt.s32.totalorder %v315, 16
        %vm436 = vcmp.lt.s32.totalorder %v316, 16
        %vm437 = vcmp.lt.s32.totalorder %v317, 16
        %vm438 = vcmp.lt.s32.totalorder %v318, 16
        %vm439 = vcmp.lt.s32.totalorder %v319, 16
        %vm440 = vcmp.lt.s32.totalorder %v320, 16
        %vm441 = vcmp.lt.s32.totalorder %v321, 16
        %vm442 = vcmp.lt.s32.totalorder %v322, 16
        %vm443 = vcmp.lt.s32.totalorder %v323, 16
        %vm444 = vmand %vm404, %vm424
        %vm445 = vmand %vm405, %vm425
        %vm446 = vmand %vm406, %vm426
        %vm447 = vmand %vm407, %vm427
        %vm448 = vmand %vm408, %vm428
        %vm449 = vmand %vm409, %vm429
        %vm450 = vmand %vm410, %vm430
        %vm451 = vmand %vm411, %vm431
        %vm452 = vmand %vm412, %vm432
        %vm453 = vmand %vm413, %vm433
        %vm454 = vmand %vm414, %vm434
        %vm455 = vmand %vm415, %vm435
        %vm456 = vmand %vm416, %vm436
        %vm457 = vmand %vm417, %vm437
        %vm458 = vmand %vm418, %vm438
        %vm459 = vmand %vm419, %vm439
        %vm460 = vmand %vm420, %vm440
        %vm461 = vmand %vm421, %vm441
        %vm462 = vmand %vm422, %vm442
        %vm463 = vmand %vm423, %vm443
        %vm464 = vmxor %vm444, 1
        %vm465 = vmxor %vm445, 1
        %vm466 = vmxor %vm446, 1
        %vm467 = vmxor %vm447, 1
        %vm468 = vmxor %vm448, 1
        %vm469 = vmxor %vm449, 1
        %vm470 = vmxor %vm450, 1
        %vm471 = vmxor %vm451, 1
        %vm472 = vmxor %vm452, 1
        %vm473 = vmxor %vm453, 1
        %vm474 = vmxor %vm454, 1
        %vm475 = vmxor %vm455, 1
        %vm476 = vmxor %vm456, 1
        %vm477 = vmxor %vm457, 1
        %vm478 = vmxor %vm458, 1
        %vm479 = vmxor %vm459, 1
        %vm480 = vmxor %vm460, 1
        %vm481 = vmxor %vm461, 1
        %vm482 = vmxor %vm462, 1
        %vm483 = vmxor %vm463, 1
        %vm484 = vmand %vm384, %vm464
        %vm485 = vmand %vm385, %vm465
        %vm486 = vmand %vm386, %vm466
        %vm487 = vmand %vm387, %vm467
        %vm488 = vmand %vm388, %vm468
        %vm489 = vmand %vm389, %vm469
        %vm490 = vmand %vm390, %vm470
        %vm491 = vmand %vm391, %vm471
        %vm492 = vmand %vm392, %vm472
        %vm493 = vmand %vm393, %vm473
        %vm494 = vmand %vm394, %vm474
        %vm495 = vmand %vm395, %vm475
        %vm496 = vmand %vm396, %vm476
        %vm497 = vmand %vm397, %vm477
        %vm498 = vmand %vm398, %vm478
        %vm499 = vmand %vm399, %vm479
        %vm500 = vmand %vm400, %vm480
        %vm501 = vmand %vm401, %vm481
        %vm502 = vmand %vm402, %vm482
        %vm503 = vmand %vm403, %vm483
        %vm504 = vcmp.ge.s32.totalorder %v304, 144
        %vm505 = vcmp.ge.s32.totalorder %v305, 144
        %vm506 = vcmp.ge.s32.totalorder %v306, 144
        %vm507 = vcmp.ge.s32.totalorder %v307, 144
        %vm508 = vcmp.ge.s32.totalorder %v308, 144
        %vm509 = vcmp.ge.s32.totalorder %v309, 144
        %vm510 = vcmp.ge.s32.totalorder %v310, 144
        %vm511 = vcmp.ge.s32.totalorder %v311, 144
        %vm512 = vcmp.ge.s32.totalorder %v312, 144
        %vm513 = vcmp.ge.s32.totalorder %v313, 144
        %vm514 = vcmp.ge.s32.totalorder %v314, 144
        %vm515 = vcmp.ge.s32.totalorder %v315, 144
        %vm516 = vcmp.ge.s32.totalorder %v316, 144
        %vm517 = vcmp.ge.s32.totalorder %v317, 144
        %vm518 = vcmp.ge.s32.totalorder %v318, 144
        %vm519 = vcmp.ge.s32.totalorder %v319, 144
        %vm520 = vcmp.ge.s32.totalorder %v320, 144
        %vm521 = vcmp.ge.s32.totalorder %v321, 144
        %vm522 = vcmp.ge.s32.totalorder %v322, 144
        %vm523 = vcmp.ge.s32.totalorder %v323, 144
        %vm524 = vcmp.lt.s32.totalorder %v304, 160
        %vm525 = vcmp.lt.s32.totalorder %v305, 160
        %vm526 = vcmp.lt.s32.totalorder %v306, 160
        %vm527 = vcmp.lt.s32.totalorder %v307, 160
        %vm528 = vcmp.lt.s32.totalorder %v308, 160
        %vm529 = vcmp.lt.s32.totalorder %v309, 160
        %vm530 = vcmp.lt.s32.totalorder %v310, 160
        %vm531 = vcmp.lt.s32.totalorder %v311, 160
        %vm532 = vcmp.lt.s32.totalorder %v312, 160
        %vm533 = vcmp.lt.s32.totalorder %v313, 160
        %vm534 = vcmp.lt.s32.totalorder %v314, 160
        %vm535 = vcmp.lt.s32.totalorder %v315, 160
        %vm536 = vcmp.lt.s32.totalorder %v316, 160
        %vm537 = vcmp.lt.s32.totalorder %v317, 160
        %vm538 = vcmp.lt.s32.totalorder %v318, 160
        %vm539 = vcmp.lt.s32.totalorder %v319, 160
        %vm540 = vcmp.lt.s32.totalorder %v320, 160
        %vm541 = vcmp.lt.s32.totalorder %v321, 160
        %vm542 = vcmp.lt.s32.totalorder %v322, 160
        %vm543 = vcmp.lt.s32.totalorder %v323, 160
        %vm544 = vmand %vm504, %vm524
        %vm545 = vmand %vm505, %vm525
        %vm546 = vmand %vm506, %vm526
        %vm547 = vmand %vm507, %vm527
        %vm548 = vmand %vm508, %vm528
        %vm549 = vmand %vm509, %vm529
        %vm550 = vmand %vm510, %vm530
        %vm551 = vmand %vm511, %vm531
        %vm552 = vmand %vm512, %vm532
        %vm553 = vmand %vm513, %vm533
        %vm554 = vmand %vm514, %vm534
        %vm555 = vmand %vm515, %vm535
        %vm556 = vmand %vm516, %vm536
        %vm557 = vmand %vm517, %vm537
        %vm558 = vmand %vm518, %vm538
        %vm559 = vmand %vm519, %vm539
        %vm560 = vmand %vm520, %vm540
        %vm561 = vmand %vm521, %vm541
        %vm562 = vmand %vm522, %vm542
        %vm563 = vmand %vm523, %vm543
        %vm564 = vmxor %vm544, 1
        %vm565 = vmxor %vm545, 1
        %vm566 = vmxor %vm546, 1
        %vm567 = vmxor %vm547, 1
        %vm568 = vmxor %vm548, 1
        %vm569 = vmxor %vm549, 1
        %vm570 = vmxor %vm550, 1
        %vm571 = vmxor %vm551, 1
        %vm572 = vmxor %vm552, 1
        %vm573 = vmxor %vm553, 1
        %vm574 = vmxor %vm554, 1
        %vm575 = vmxor %vm555, 1
        %vm576 = vmxor %vm556, 1
        %vm577 = vmxor %vm557, 1
        %vm578 = vmxor %vm558, 1
        %vm579 = vmxor %vm559, 1
        %vm580 = vmxor %vm560, 1
        %vm581 = vmxor %vm561, 1
        %vm582 = vmxor %vm562, 1
        %vm583 = vmxor %vm563, 1
        %vm584 = vmand %vm484, %vm564
        %vm585 = vmand %vm485, %vm565
        %vm586 = vmand %vm486, %vm566
        %vm587 = vmand %vm487, %vm567
        %vm588 = vmand %vm488, %vm568
        %vm589 = vmand %vm489, %vm569
        %vm590 = vmand %vm490, %vm570
        %vm591 = vmand %vm491, %vm571
        %vm592 = vmand %vm492, %vm572
        %vm593 = vmand %vm493, %vm573
        %vm594 = vmand %vm494, %vm574
        %vm595 = vmand %vm495, %vm575
        %vm596 = vmand %vm496, %vm576
        %vm597 = vmand %vm497, %vm577
        %vm598 = vmand %vm498, %vm578
        %vm599 = vmand %vm499, %vm579
        %vm600 = vmand %vm500, %vm580
        %vm601 = vmand %vm501, %vm581
        %vm602 = vmand %vm502, %vm582
        %vm603 = vmand %vm503, %vm583
        %v604 = vld [vmem:[%s302] sm:$0xff]
        %v605 = vld [vmem:[%s302 + $0x8] sm:$0xff]
        %v606 = vld [vmem:[%s302 + $0x10] sm:$0xff]
        %v607 = vld [vmem:[%s302 + $0x18] sm:$0xff]
        %v608 = vld [vmem:[%s302 + $0x20] sm:$0xff]
        %v609 = vld [vmem:[%s302 + $0x28] sm:$0xff]
        %v610 = vld [vmem:[%s302 + $0x30] sm:$0xff]
        %v611 = vld [vmem:[%s302 + $0x38] sm:$0xff]
        %v612 = vld [vmem:[%s302 + $0x40] sm:$0xff]
        %v613 = vld [vmem:[%s302 + $0x48] sm:$0xff]
        %v614 = vld [vmem:[%s302 + $0x50] sm:$0xff]
        %v615 = vld [vmem:[%s302 + $0x58] sm:$0xff]
        %v616 = vld [vmem:[%s302 + $0x60] sm:$0xff]
        %v617 = vld [vmem:[%s302 + $0x68] sm:$0xff]
        %v618 = vld [vmem:[%s302 + $0x70] sm:$0xff]
        %v619 = vld [vmem:[%s302 + $0x78] sm:$0xff]
        %v620 = vld [vmem:[%s302 + $0x80] sm:$0xff]
        %v621 = vld [vmem:[%s302 + $0x88] sm:$0xff]
        %v622 = vld [vmem:[%s302 + $0x90] sm:$0xff]
        %v623 = vld [vmem:[%s302 + $0x98] sm:$0xff]
        %v624 = vld [vmem:[%s1] sm:$0xff]
        %v625 = vld [vmem:[%s1 + $0x8] sm:$0xff]
        %v626 = vld [vmem:[%s1 + $0x10] sm:$0xff]
        %v627 = vld [vmem:[%s1 + $0x18] sm:$0xff]
        %v628 = vld [vmem:[%s1 + $0x20] sm:$0xff]
        %v629 = vld [vmem:[%s1 + $0x28] sm:$0xff]
        %v630 = vld [vmem:[%s1 + $0x30] sm:$0xff]
        %v631 = vld [vmem:[%s1 + $0x38] sm:$0xff]
        %v632 = vld [vmem:[%s1 + $0x40] sm:$0xff]
        %v633 = vld [vmem:[%s1 + $0x48] sm:$0xff]
        %v634 = vld [vmem:[%s1 + $0x50] sm:$0xff]
        %v635 = vld [vmem:[%s1 + $0x58] sm:$0xff]
        %v636 = vld [vmem:[%s302 + $0xa0] sm:$0xff]
        %v637 = vld [vmem:[%s302 + $0xa8] sm:$0xff]
        %s638 = scalar_lea.vmem %s1, 96
        %v639 = vld [vmem:[%s638] sm:$0xff]
        %v640 = vld [vmem:[%s638 + $0x8] sm:$0xff]
        %v641 = vld [vmem:[%s638 + $0x10] sm:$0xff]
        %v642 = vld [vmem:[%s638 + $0x18] sm:$0xff]
        %v643 = vld [vmem:[%s638 + $0x20] sm:$0xff]
        %v644 = vld [vmem:[%s638 + $0x28] sm:$0xff]
        %v645 = vld [vmem:[%s638 + $0x30] sm:$0xff]
        %v646 = vld [vmem:[%s638 + $0x38] sm:$0xff]
        %v647 = vld [vmem:[%s638 + $0x40] sm:$0xff]
        %v648 = vld [vmem:[%s638 + $0x48] sm:$0xff]
        %v649 = vld [vmem:[%s638 + $0x50] sm:$0xff]
        %v650 = vld [vmem:[%s638 + $0x58] sm:$0xff]
        %vm651 = vcmask 785408
        %v653 = vsel %vm651, %v606, 0
        %v656 = vsel %vm651, %v607, 0
        %v659 = vsel %vm651, %v608, 0
        %v662 = vsel %vm651, %v609, 0
        %v665 = vsel %vm651, %v610, 0
        %v668 = vsel %vm651, %v611, 0
        %v671 = vsel %vm651, %v612, 0
        %v674 = vsel %vm651, %v613, 0
        %v677 = vsel %vm651, %v614, 0
        %v680 = vsel %vm651, %v615, 0
        %v683 = vsel %vm651, %v616, 0
        %v686 = vsel %vm651, %v617, 0
        %v689 = vsel %vm651, %v618, 0
        %v692 = vsel %vm651, %v619, 0
        %v695 = vsel %vm651, %v620, 0
        %v698 = vsel %vm651, %v621, 0
        %v701 = vsel %vm651, %v622, 0
        %v704 = vsel %vm651, %v623, 0
        %v707 = vsel %vm651, %v636, 0
        %v710 = vsel %vm651, %v637, 0
        %712 = vmatprep.subr.mxu0 0.0
        %713 = vmatpush1.msra.mxu0 0.0
        %714 = vmatprep.subr.mxu0 0.0
        %715 = vmatpush1.msra.mxu0 0.0
        %716 = vmatprep.subr.mxu0 0.0
        %717 = vmatpush1.msra.mxu0 0.0
        %718 = vmatprep.subr.mxu0 0.0
        %719 = vmatpush1.msra.mxu0 0.0
        %720 = vmatprep.subr.mxu0 0.0
        %721 = vmatpush1.msra.mxu0 %v650
        %722 = vmatprep.subr.mxu0 0.0
        %723 = vmatpush1.msra.mxu0 %v649
        %724 = vmatprep.subr.mxu0 0.0
        %725 = vmatpush1.msra.mxu0 %v648
        %726 = vmatprep.subr.mxu0 0.0
        %727 = vmatpush1.msra.mxu0 %v647
        %728 = vmatprep.subr.mxu0 0.0
        %729 = vmatpush1.msra.mxu0 %v646
        %730 = vmatprep.subr.mxu0 0.0
        %731 = vmatpush1.msra.mxu0 %v645
        %732 = vmatprep.subr.mxu0 0.0
        %733 = vmatpush1.msra.mxu0 %v644
        %734 = vmatprep.subr.mxu0 0.0
        %735 = vmatpush1.msra.mxu0 %v643
        %736 = vmatprep.subr.mxu0 0.0
        %737 = vmatpush1.msra.mxu0 %v642
        %738 = vmatprep.subr.mxu0 0.0
        %739 = vmatpush1.msra.mxu0 %v641
        %740 = vmatprep.subr.mxu0 0.0
        %741 = vmatpush1.msra.mxu0 %v640
        %742 = vmatprep.subr.mxu0 0.0
        %743 = vmatpush1.msra.mxu0 %v639
        %744 = vmatprep.subr.mxu0 0.0
        %745 = vmatpush2.msra.mxu0 0.0
        %746 = vmatprep.subr.mxu0 0.0
        %747 = vmatpush2.msra.mxu0 0.0
        %748 = vmatprep.subr.mxu0 0.0
        %749 = vmatpush2.msra.mxu0 0.0
        %750 = vmatprep.subr.mxu0 0.0
        %751 = vmatpush2.msra.mxu0 0.0
        %752 = vmatprep.subr.mxu0 0.0
        %753 = vmatpush2.msra.mxu0 0.0
        %754 = vmatprep.subr.mxu0 0.0
        %755 = vmatpush2.msra.mxu0 0.0
        %756 = vmatprep.subr.mxu0 0.0
        %757 = vmatpush2.msra.mxu0 0.0
        %758 = vmatprep.subr.mxu0 0.0
        %759 = vmatpush2.msra.mxu0 0.0
        %760 = vmatprep.subr.mxu0 0.0
        %761 = vmatpush2.msra.mxu0 0.0
        %762 = vmatprep.subr.mxu0 0.0
        %763 = vmatpush2.msra.mxu0 0.0
        %764 = vmatprep.subr.mxu0 0.0
        %765 = vmatpush2.msra.mxu0 0.0
        %766 = vmatprep.subr.mxu0 0.0
        %767 = vmatpush2.msra.mxu0 0.0
        %768 = vmatprep.subr.mxu0 0.0
        %769 = vmatpush2.msra.mxu0 0.0
        %770 = vmatprep.subr.mxu0 0.0
        %771 = vmatpush2.msra.mxu0 0.0
        %772 = vmatprep.subr.mxu0 0.0
        %773 = vmatpush2.msra.mxu0 0.0
        %774 = vmatprep.subr.mxu0 0.0
        %775 = vmatpush2.msra.mxu0 0.0
        %776 = vmatprep.mubr.f32.mxu0 0.0
        %777 = vmatmul.mubr.f32.gmra.mxu0 %v653
        %v778 = vpop.f32.mrf.mxu0
        %v779 = vadd.f32 0.0, %v778
        %v780 = vpop.f32.mrf.mxu0
        %781 = vmatprep.mubr.f32.mxu0 0.0
        %782 = vmatmul.mubr.f32.gmra.mxu0 %v656
        %v783 = vpop.f32.mrf.mxu0
        %v784 = vadd.f32 0.0, %v783
        %v785 = vpop.f32.mrf.mxu0
        %786 = vmatprep.mubr.f32.mxu0 0.0
        %787 = vmatmul.mubr.f32.gmra.mxu0 %v659
        %v788 = vpop.f32.mrf.mxu0
        %v789 = vadd.f32 0.0, %v788
        %v790 = vpop.f32.mrf.mxu0
        %791 = vmatprep.mubr.f32.mxu0 0.0
        %792 = vmatmul.mubr.f32.gmra.mxu0 %v662
        %v793 = vpop.f32.mrf.mxu0
        %v794 = vadd.f32 0.0, %v793
        %v795 = vpop.f32.mrf.mxu0
        %796 = vmatprep.mubr.f32.mxu0 0.0
        %797 = vmatmul.mubr.f32.gmra.mxu0 %v665
        %v798 = vpop.f32.mrf.mxu0
        %v799 = vadd.f32 0.0, %v798
        %v800 = vpop.f32.mrf.mxu0
        %801 = vmatprep.mubr.f32.mxu0 0.0
        %802 = vmatmul.mubr.f32.gmra.mxu0 %v668
        %v803 = vpop.f32.mrf.mxu0
        %v804 = vadd.f32 0.0, %v803
        %v805 = vpop.f32.mrf.mxu0
        %806 = vmatprep.mubr.f32.mxu0 0.0
        %807 = vmatmul.mubr.f32.gmra.mxu0 %v671
        %v808 = vpop.f32.mrf.mxu0
        %v809 = vadd.f32 0.0, %v808
        %v810 = vpop.f32.mrf.mxu0
        %811 = vmatprep.mubr.f32.mxu0 0.0
        %812 = vmatmul.mubr.f32.gmra.mxu0 %v674
        %v813 = vpop.f32.mrf.mxu0
        %v814 = vadd.f32 0.0, %v813
        %v815 = vpop.f32.mrf.mxu0
        %816 = vmatprep.mubr.f32.mxu0 0.0
        %817 = vmatmul.mubr.f32.gmra.mxu0 %v677
        %v818 = vpop.f32.mrf.mxu0
        %v819 = vadd.f32 0.0, %v818
        %v820 = vpop.f32.mrf.mxu0
        %821 = vmatprep.mubr.f32.mxu0 0.0
        %822 = vmatmul.mubr.f32.gmra.mxu0 %v680
        %v823 = vpop.f32.mrf.mxu0
        %v824 = vadd.f32 0.0, %v823
        %v825 = vpop.f32.mrf.mxu0
        %826 = vmatprep.mubr.f32.mxu0 0.0
        %827 = vmatmul.mubr.f32.gmra.mxu0 %v683
        %v828 = vpop.f32.mrf.mxu0
        %v829 = vadd.f32 0.0, %v828
        %v830 = vpop.f32.mrf.mxu0
        %831 = vmatprep.mubr.f32.mxu0 0.0
        %832 = vmatmul.mubr.f32.gmra.mxu0 %v686
        %v833 = vpop.f32.mrf.mxu0
        %v834 = vadd.f32 0.0, %v833
        %v835 = vpop.f32.mrf.mxu0
        %836 = vmatprep.mubr.f32.mxu0 0.0
        %837 = vmatmul.mubr.f32.gmra.mxu0 %v689
        %v838 = vpop.f32.mrf.mxu0
        %v839 = vadd.f32 0.0, %v838
        %v840 = vpop.f32.mrf.mxu0
        %841 = vmatprep.mubr.f32.mxu0 0.0
        %842 = vmatmul.mubr.f32.gmra.mxu0 %v692
        %v843 = vpop.f32.mrf.mxu0
        %v844 = vadd.f32 0.0, %v843
        %v845 = vpop.f32.mrf.mxu0
        %846 = vmatprep.mubr.f32.mxu0 0.0
        %847 = vmatmul.mubr.f32.gmra.mxu0 %v695
        %v848 = vpop.f32.mrf.mxu0
        %v849 = vadd.f32 0.0, %v848
        %v850 = vpop.f32.mrf.mxu0
        %851 = vmatprep.mubr.f32.mxu0 0.0
        %852 = vmatmul.mubr.f32.gmra.mxu0 %v698
        %v853 = vpop.f32.mrf.mxu0
        %v854 = vadd.f32 0.0, %v853
        %v855 = vpop.f32.mrf.mxu0
        %856 = vmatprep.mubr.f32.mxu0 0.0
        %857 = vmatmul.mubr.f32.gmra.mxu0 %v701
        %v858 = vpop.f32.mrf.mxu0
        %v859 = vadd.f32 0.0, %v858
        %v860 = vpop.f32.mrf.mxu0
        %861 = vmatprep.mubr.f32.mxu0 0.0
        %862 = vmatmul.mubr.f32.gmra.mxu0 %v704
        %v863 = vpop.f32.mrf.mxu0
        %v864 = vadd.f32 0.0, %v863
        %v865 = vpop.f32.mrf.mxu0
        %866 = vmatprep.mubr.f32.mxu0 0.0
        %867 = vmatmul.mubr.f32.gmra.mxu0 %v707
        %v868 = vpop.f32.mrf.mxu0
        %v869 = vadd.f32 0.0, %v868
        %v870 = vpop.f32.mrf.mxu0
        %871 = vmatprep.mubr.f32.mxu0 0.0
        %872 = vmatmul.mubr.f32.gmra.mxu0 %v710
        %v873 = vpop.f32.mrf.mxu0
        %v874 = vadd.f32 0.0, %v873
        %v875 = vpop.f32.mrf.mxu0
        %876 = vdwg.mxu0
        %v878 = vsel %vm651, %v604, 0
        %v881 = vsel %vm651, %v605, 0
        %883 = vmatprep.subr.mxu0 0.0
        %884 = vmatpush1.msra.mxu0 0.0
        %885 = vmatprep.subr.mxu0 0.0
        %886 = vmatpush1.msra.mxu0 0.0
        %887 = vmatprep.subr.mxu0 0.0
        %888 = vmatpush1.msra.mxu0 0.0
        %889 = vmatprep.subr.mxu0 0.0
        %890 = vmatpush1.msra.mxu0 0.0
        %891 = vmatprep.subr.mxu0 0.0
        %892 = vmatpush1.msra.mxu0 %v635
        %893 = vmatprep.subr.mxu0 0.0
        %894 = vmatpush1.msra.mxu0 %v634
        %895 = vmatprep.subr.mxu0 0.0
        %896 = vmatpush1.msra.mxu0 %v633
        %897 = vmatprep.subr.mxu0 0.0
        %898 = vmatpush1.msra.mxu0 %v632
        %899 = vmatprep.subr.mxu0 0.0
        %900 = vmatpush1.msra.mxu0 %v631
        %901 = vmatprep.subr.mxu0 0.0
        %902 = vmatpush1.msra.mxu0 %v630
        %903 = vmatprep.subr.mxu0 0.0
        %904 = vmatpush1.msra.mxu0 %v629
        %905 = vmatprep.subr.mxu0 0.0
        %906 = vmatpush1.msra.mxu0 %v628
        %907 = vmatprep.subr.mxu0 0.0
        %908 = vmatpush1.msra.mxu0 %v627
        %909 = vmatprep.subr.mxu0 0.0
        %910 = vmatpush1.msra.mxu0 %v626
        %911 = vmatprep.subr.mxu0 0.0
        %912 = vmatpush1.msra.mxu0 %v625
        %913 = vmatprep.subr.mxu0 0.0
        %914 = vmatpush1.msra.mxu0 %v624
        %915 = vmatprep.subr.mxu0 0.0
        %916 = vmatpush2.msra.mxu0 0.0
        %917 = vmatprep.subr.mxu0 0.0
        %918 = vmatpush2.msra.mxu0 0.0
        %919 = vmatprep.subr.mxu0 0.0
        %920 = vmatpush2.msra.mxu0 0.0
        %921 = vmatprep.subr.mxu0 0.0
        %922 = vmatpush2.msra.mxu0 0.0
        %923 = vmatprep.subr.mxu0 0.0
        %924 = vmatpush2.msra.mxu0 0.0
        %925 = vmatprep.subr.mxu0 0.0
        %926 = vmatpush2.msra.mxu0 0.0
        %927 = vmatprep.subr.mxu0 0.0
        %928 = vmatpush2.msra.mxu0 0.0
        %929 = vmatprep.subr.mxu0 0.0
        %930 = vmatpush2.msra.mxu0 0.0
        %931 = vmatprep.subr.mxu0 0.0
        %932 = vmatpush2.msra.mxu0 0.0
        %933 = vmatprep.subr.mxu0 0.0
        %934 = vmatpush2.msra.mxu0 0.0
        %935 = vmatprep.subr.mxu0 0.0
        %936 = vmatpush2.msra.mxu0 0.0
        %937 = vmatprep.subr.mxu0 0.0
        %938 = vmatpush2.msra.mxu0 0.0
        %939 = vmatprep.subr.mxu0 0.0
        %940 = vmatpush2.msra.mxu0 0.0
        %941 = vmatprep.subr.mxu0 0.0
        %942 = vmatpush2.msra.mxu0 0.0
        %943 = vmatprep.subr.mxu0 0.0
        %944 = vmatpush2.msra.mxu0 0.0
        %945 = vmatprep.subr.mxu0 0.0
        %946 = vmatpush2.msra.mxu0 0.0
        %947 = vmatprep.mubr.f32.mxu0 0.0
        %948 = vmatmul.mubr.f32.gmra.mxu0 %v878
        %v949 = vpop.f32.mrf.mxu0
        %v950 = vadd.f32 %v779, %v949
        %v951 = vpop.f32.mrf.mxu0
        %952 = vmatprep.mubr.f32.mxu0 0.0
        %953 = vmatmul.mubr.f32.gmra.mxu0 %v881
        %v954 = vpop.f32.mrf.mxu0
        %v955 = vadd.f32 %v784, %v954
        %v956 = vpop.f32.mrf.mxu0
        %957 = vmatprep.mubr.f32.mxu0 0.0
        %958 = vmatmul.mubr.f32.gmra.mxu0 %v653
        %v959 = vpop.f32.mrf.mxu0
        %v960 = vadd.f32 %v789, %v959
        %v961 = vpop.f32.mrf.mxu0
        %962 = vmatprep.mubr.f32.mxu0 0.0
        %963 = vmatmul.mubr.f32.gmra.mxu0 %v656
        %v964 = vpop.f32.mrf.mxu0
        %v965 = vadd.f32 %v794, %v964
        %v966 = vpop.f32.mrf.mxu0
        %967 = vmatprep.mubr.f32.mxu0 0.0
        %968 = vmatmul.mubr.f32.gmra.mxu0 %v659
        %v969 = vpop.f32.mrf.mxu0
        %v970 = vadd.f32 %v799, %v969
        %v971 = vpop.f32.mrf.mxu0
        %972 = vmatprep.mubr.f32.mxu0 0.0
        %973 = vmatmul.mubr.f32.gmra.mxu0 %v662
        %v974 = vpop.f32.mrf.mxu0
        %v975 = vadd.f32 %v804, %v974
        %v976 = vpop.f32.mrf.mxu0
        %977 = vmatprep.mubr.f32.mxu0 0.0
        %978 = vmatmul.mubr.f32.gmra.mxu0 %v665
        %v979 = vpop.f32.mrf.mxu0
        %v980 = vadd.f32 %v809, %v979
        %v981 = vpop.f32.mrf.mxu0
        %982 = vmatprep.mubr.f32.mxu0 0.0
        %983 = vmatmul.mubr.f32.gmra.mxu0 %v668
        %v984 = vpop.f32.mrf.mxu0
        %v985 = vadd.f32 %v814, %v984
        %v986 = vpop.f32.mrf.mxu0
        %987 = vmatprep.mubr.f32.mxu0 0.0
        %988 = vmatmul.mubr.f32.gmra.mxu0 %v671
        %v989 = vpop.f32.mrf.mxu0
        %v990 = vadd.f32 %v819, %v989
        %v991 = vpop.f32.mrf.mxu0
        %992 = vmatprep.mubr.f32.mxu0 0.0
        %993 = vmatmul.mubr.f32.gmra.mxu0 %v674
        %v994 = vpop.f32.mrf.mxu0
        %v995 = vadd.f32 %v824, %v994
        %v996 = vpop.f32.mrf.mxu0
        %997 = vmatprep.mubr.f32.mxu0 0.0
        %998 = vmatmul.mubr.f32.gmra.mxu0 %v677
        %v999 = vpop.f32.mrf.mxu0
        %v1000 = vadd.f32 %v829, %v999
        %v1001 = vpop.f32.mrf.mxu0
        %1002 = vmatprep.mubr.f32.mxu0 0.0
        %1003 = vmatmul.mubr.f32.gmra.mxu0 %v680
        %v1004 = vpop.f32.mrf.mxu0
        %v1005 = vadd.f32 %v834, %v1004
        %v1006 = vpop.f32.mrf.mxu0
        %1007 = vmatprep.mubr.f32.mxu0 0.0
        %1008 = vmatmul.mubr.f32.gmra.mxu0 %v683
        %v1009 = vpop.f32.mrf.mxu0
        %v1010 = vadd.f32 %v839, %v1009
        %v1011 = vpop.f32.mrf.mxu0
        %1012 = vmatprep.mubr.f32.mxu0 0.0
        %1013 = vmatmul.mubr.f32.gmra.mxu0 %v686
        %v1014 = vpop.f32.mrf.mxu0
        %v1015 = vadd.f32 %v844, %v1014
        %v1016 = vpop.f32.mrf.mxu0
        %1017 = vmatprep.mubr.f32.mxu0 0.0
        %1018 = vmatmul.mubr.f32.gmra.mxu0 %v689
        %v1019 = vpop.f32.mrf.mxu0
        %v1020 = vadd.f32 %v849, %v1019
        %v1021 = vpop.f32.mrf.mxu0
        %1022 = vmatprep.mubr.f32.mxu0 0.0
        %1023 = vmatmul.mubr.f32.gmra.mxu0 %v692
        %v1024 = vpop.f32.mrf.mxu0
        %v1025 = vadd.f32 %v854, %v1024
        %v1026 = vpop.f32.mrf.mxu0
        %1027 = vmatprep.mubr.f32.mxu0 0.0
        %1028 = vmatmul.mubr.f32.gmra.mxu0 %v695
        %v1029 = vpop.f32.mrf.mxu0
        %v1030 = vadd.f32 %v859, %v1029
        %v1031 = vpop.f32.mrf.mxu0
        %1032 = vmatprep.mubr.f32.mxu0 0.0
        %1033 = vmatmul.mubr.f32.gmra.mxu0 %v698
        %v1034 = vpop.f32.mrf.mxu0
        %v1035 = vadd.f32 %v864, %v1034
        %v1036 = vpop.f32.mrf.mxu0
        %1037 = vmatprep.mubr.f32.mxu0 0.0
        %1038 = vmatmul.mubr.f32.gmra.mxu0 %v701
        %v1039 = vpop.f32.mrf.mxu0
        %v1040 = vadd.f32 %v869, %v1039
        %v1041 = vpop.f32.mrf.mxu0
        %1042 = vmatprep.mubr.f32.mxu0 0.0
        %1043 = vmatmul.mubr.f32.gmra.mxu0 %v704
        %v1044 = vpop.f32.mrf.mxu0
        %v1045 = vadd.f32 %v874, %v1044
        %v1046 = vpop.f32.mrf.mxu0
        %1047 = vdwg.mxu0
        %v1048 = vld [vmem:[%s302 + $0x20] sm:$0xff]
        %v1049 = vld [vmem:[%s302 + $0x28] sm:$0xff]
        %v1050 = vld [vmem:[%s302 + $0x30] sm:$0xff]
        %v1051 = vld [vmem:[%s302 + $0x38] sm:$0xff]
        %v1052 = vld [vmem:[%s302 + $0x40] sm:$0xff]
        %v1053 = vld [vmem:[%s302 + $0x48] sm:$0xff]
        %v1054 = vld [vmem:[%s302 + $0x50] sm:$0xff]
        %v1055 = vld [vmem:[%s302 + $0x58] sm:$0xff]
        %v1056 = vld [vmem:[%s302 + $0x60] sm:$0xff]
        %v1057 = vld [vmem:[%s302 + $0x68] sm:$0xff]
        %v1058 = vld [vmem:[%s302 + $0x70] sm:$0xff]
        %v1059 = vld [vmem:[%s302 + $0x78] sm:$0xff]
        %v1060 = vld [vmem:[%s302 + $0x80] sm:$0xff]
        %v1061 = vld [vmem:[%s302 + $0x88] sm:$0xff]
        %v1062 = vld [vmem:[%s302 + $0x90] sm:$0xff]
        %v1063 = vld [vmem:[%s302 + $0x98] sm:$0xff]
        %v1064 = vld [vmem:[%s302 + $0xa0] sm:$0xff]
        %v1065 = vld [vmem:[%s302 + $0xa8] sm:$0xff]
        %v1066 = vld [vmem:[%s302 + $0xb0] sm:$0xff]
        %v1067 = vld [vmem:[%s302 + $0xb8] sm:$0xff]
        %s1068 = scalar_lea.vmem %s1, 192
        %v1069 = vld [vmem:[%s1068] sm:$0xff]
        %v1070 = vld [vmem:[%s1068 + $0x8] sm:$0xff]
        %v1071 = vld [vmem:[%s1068 + $0x10] sm:$0xff]
        %v1072 = vld [vmem:[%s1068 + $0x18] sm:$0xff]
        %v1073 = vld [vmem:[%s1068 + $0x20] sm:$0xff]
        %v1074 = vld [vmem:[%s1068 + $0x28] sm:$0xff]
        %v1075 = vld [vmem:[%s1068 + $0x30] sm:$0xff]
        %v1076 = vld [vmem:[%s1068 + $0x38] sm:$0xff]
        %v1077 = vld [vmem:[%s1068 + $0x40] sm:$0xff]
        %v1078 = vld [vmem:[%s1068 + $0x48] sm:$0xff]
        %v1079 = vld [vmem:[%s1068 + $0x50] sm:$0xff]
        %v1080 = vld [vmem:[%s1068 + $0x58] sm:$0xff]
        %v1082 = vsel %vm651, %v1048, 0
        %v1085 = vsel %vm651, %v1049, 0
        %v1088 = vsel %vm651, %v1050, 0
        %v1091 = vsel %vm651, %v1051, 0
        %v1094 = vsel %vm651, %v1052, 0
        %v1097 = vsel %vm651, %v1053, 0
        %v1100 = vsel %vm651, %v1054, 0
        %v1103 = vsel %vm651, %v1055, 0
        %v1106 = vsel %vm651, %v1056, 0
        %v1109 = vsel %vm651, %v1057, 0
        %v1112 = vsel %vm651, %v1058, 0
        %v1115 = vsel %vm651, %v1059, 0
        %v1118 = vsel %vm651, %v1060, 0
        %v1121 = vsel %vm651, %v1061, 0
        %v1124 = vsel %vm651, %v1062, 0
        %v1127 = vsel %vm651, %v1063, 0
        %v1130 = vsel %vm651, %v1064, 0
        %v1133 = vsel %vm651, %v1065, 0
        %v1136 = vsel %vm651, %v1066, 0
        %v1139 = vsel %vm651, %v1067, 0
        %1141 = vmatprep.subr.mxu0 0.0
        %1142 = vmatpush1.msra.mxu0 0.0
        %1143 = vmatprep.subr.mxu0 0.0
        %1144 = vmatpush1.msra.mxu0 0.0
        %1145 = vmatprep.subr.mxu0 0.0
        %1146 = vmatpush1.msra.mxu0 0.0
        %1147 = vmatprep.subr.mxu0 0.0
        %1148 = vmatpush1.msra.mxu0 0.0
        %1149 = vmatprep.subr.mxu0 0.0
        %1150 = vmatpush1.msra.mxu0 %v1080
        %1151 = vmatprep.subr.mxu0 0.0
        %1152 = vmatpush1.msra.mxu0 %v1079
        %1153 = vmatprep.subr.mxu0 0.0
        %1154 = vmatpush1.msra.mxu0 %v1078
        %1155 = vmatprep.subr.mxu0 0.0
        %1156 = vmatpush1.msra.mxu0 %v1077
        %1157 = vmatprep.subr.mxu0 0.0
        %1158 = vmatpush1.msra.mxu0 %v1076
        %1159 = vmatprep.subr.mxu0 0.0
        %1160 = vmatpush1.msra.mxu0 %v1075
        %1161 = vmatprep.subr.mxu0 0.0
        %1162 = vmatpush1.msra.mxu0 %v1074
        %1163 = vmatprep.subr.mxu0 0.0
        %1164 = vmatpush1.msra.mxu0 %v1073
        %1165 = vmatprep.subr.mxu0 0.0
        %1166 = vmatpush1.msra.mxu0 %v1072
        %1167 = vmatprep.subr.mxu0 0.0
        %1168 = vmatpush1.msra.mxu0 %v1071
        %1169 = vmatprep.subr.mxu0 0.0
        %1170 = vmatpush1.msra.mxu0 %v1070
        %1171 = vmatprep.subr.mxu0 0.0
        %1172 = vmatpush1.msra.mxu0 %v1069
        %1173 = vmatprep.subr.mxu0 0.0
        %1174 = vmatpush2.msra.mxu0 0.0
        %1175 = vmatprep.subr.mxu0 0.0
        %1176 = vmatpush2.msra.mxu0 0.0
        %1177 = vmatprep.subr.mxu0 0.0
        %1178 = vmatpush2.msra.mxu0 0.0
        %1179 = vmatprep.subr.mxu0 0.0
        %1180 = vmatpush2.msra.mxu0 0.0
        %1181 = vmatprep.subr.mxu0 0.0
        %1182 = vmatpush2.msra.mxu0 0.0
        %1183 = vmatprep.subr.mxu0 0.0
        %1184 = vmatpush2.msra.mxu0 0.0
        %1185 = vmatprep.subr.mxu0 0.0
        %1186 = vmatpush2.msra.mxu0 0.0
        %1187 = vmatprep.subr.mxu0 0.0
        %1188 = vmatpush2.msra.mxu0 0.0
        %1189 = vmatprep.subr.mxu0 0.0
        %1190 = vmatpush2.msra.mxu0 0.0
        %1191 = vmatprep.subr.mxu0 0.0
        %1192 = vmatpush2.msra.mxu0 0.0
        %1193 = vmatprep.subr.mxu0 0.0
        %1194 = vmatpush2.msra.mxu0 0.0
        %1195 = vmatprep.subr.mxu0 0.0
        %1196 = vmatpush2.msra.mxu0 0.0
        %1197 = vmatprep.subr.mxu0 0.0
        %1198 = vmatpush2.msra.mxu0 0.0
        %1199 = vmatprep.subr.mxu0 0.0
        %1200 = vmatpush2.msra.mxu0 0.0
        %1201 = vmatprep.subr.mxu0 0.0
        %1202 = vmatpush2.msra.mxu0 0.0
        %1203 = vmatprep.subr.mxu0 0.0
        %1204 = vmatpush2.msra.mxu0 0.0
        %1205 = vmatprep.mubr.f32.mxu0 0.0
        %1206 = vmatmul.mubr.f32.gmra.mxu0 %v1082
        %v1207 = vpop.f32.mrf.mxu0
        %v1208 = vadd.f32 0.0, %v1207
        %v1209 = vpop.f32.mrf.mxu0
        %1210 = vmatprep.mubr.f32.mxu0 0.0
        %1211 = vmatmul.mubr.f32.gmra.mxu0 %v1085
        %v1212 = vpop.f32.mrf.mxu0
        %v1213 = vadd.f32 0.0, %v1212
        %v1214 = vpop.f32.mrf.mxu0
        %1215 = vmatprep.mubr.f32.mxu0 0.0
        %1216 = vmatmul.mubr.f32.gmra.mxu0 %v1088
        %v1217 = vpop.f32.mrf.mxu0
        %v1218 = vadd.f32 0.0, %v1217
        %v1219 = vpop.f32.mrf.mxu0
        %1220 = vmatprep.mubr.f32.mxu0 0.0
        %1221 = vmatmul.mubr.f32.gmra.mxu0 %v1091
        %v1222 = vpop.f32.mrf.mxu0
        %v1223 = vadd.f32 0.0, %v1222
        %v1224 = vpop.f32.mrf.mxu0
        %1225 = vmatprep.mubr.f32.mxu0 0.0
        %1226 = vmatmul.mubr.f32.gmra.mxu0 %v1094
        %v1227 = vpop.f32.mrf.mxu0
        %v1228 = vadd.f32 0.0, %v1227
        %v1229 = vpop.f32.mrf.mxu0
        %1230 = vmatprep.mubr.f32.mxu0 0.0
        %1231 = vmatmul.mubr.f32.gmra.mxu0 %v1097
        %v1232 = vpop.f32.mrf.mxu0
        %v1233 = vadd.f32 0.0, %v1232
        %v1234 = vpop.f32.mrf.mxu0
        %1235 = vmatprep.mubr.f32.mxu0 0.0
        %1236 = vmatmul.mubr.f32.gmra.mxu0 %v1100
        %v1237 = vpop.f32.mrf.mxu0
        %v1238 = vadd.f32 0.0, %v1237
        %v1239 = vpop.f32.mrf.mxu0
        %1240 = vmatprep.mubr.f32.mxu0 0.0
        %1241 = vmatmul.mubr.f32.gmra.mxu0 %v1103
        %v1242 = vpop.f32.mrf.mxu0
        %v1243 = vadd.f32 0.0, %v1242
        %v1244 = vpop.f32.mrf.mxu0
        %1245 = vmatprep.mubr.f32.mxu0 0.0
        %1246 = vmatmul.mubr.f32.gmra.mxu0 %v1106
        %v1247 = vpop.f32.mrf.mxu0
        %v1248 = vadd.f32 0.0, %v1247
        %v1249 = vpop.f32.mrf.mxu0
        %1250 = vmatprep.mubr.f32.mxu0 0.0
        %1251 = vmatmul.mubr.f32.gmra.mxu0 %v1109
        %v1252 = vpop.f32.mrf.mxu0
        %v1253 = vadd.f32 0.0, %v1252
        %v1254 = vpop.f32.mrf.mxu0
        %1255 = vmatprep.mubr.f32.mxu0 0.0
        %1256 = vmatmul.mubr.f32.gmra.mxu0 %v1112
        %v1257 = vpop.f32.mrf.mxu0
        %v1258 = vadd.f32 0.0, %v1257
        %v1259 = vpop.f32.mrf.mxu0
        %1260 = vmatprep.mubr.f32.mxu0 0.0
        %1261 = vmatmul.mubr.f32.gmra.mxu0 %v1115
        %v1262 = vpop.f32.mrf.mxu0
        %v1263 = vadd.f32 0.0, %v1262
        %v1264 = vpop.f32.mrf.mxu0
        %1265 = vmatprep.mubr.f32.mxu0 0.0
        %1266 = vmatmul.mubr.f32.gmra.mxu0 %v1118
        %v1267 = vpop.f32.mrf.mxu0
        %v1268 = vadd.f32 0.0, %v1267
        %v1269 = vpop.f32.mrf.mxu0
        %1270 = vmatprep.mubr.f32.mxu0 0.0
        %1271 = vmatmul.mubr.f32.gmra.mxu0 %v1121
        %v1272 = vpop.f32.mrf.mxu0
        %v1273 = vadd.f32 0.0, %v1272
        %v1274 = vpop.f32.mrf.mxu0
        %1275 = vmatprep.mubr.f32.mxu0 0.0
        %1276 = vmatmul.mubr.f32.gmra.mxu0 %v1124
        %v1277 = vpop.f32.mrf.mxu0
        %v1278 = vadd.f32 0.0, %v1277
        %v1279 = vpop.f32.mrf.mxu0
        %1280 = vmatprep.mubr.f32.mxu0 0.0
        %1281 = vmatmul.mubr.f32.gmra.mxu0 %v1127
        %v1282 = vpop.f32.mrf.mxu0
        %v1283 = vadd.f32 0.0, %v1282
        %v1284 = vpop.f32.mrf.mxu0
        %1285 = vmatprep.mubr.f32.mxu0 0.0
        %1286 = vmatmul.mubr.f32.gmra.mxu0 %v1130
        %v1287 = vpop.f32.mrf.mxu0
        %v1288 = vadd.f32 0.0, %v1287
        %v1289 = vpop.f32.mrf.mxu0
        %1290 = vmatprep.mubr.f32.mxu0 0.0
        %1291 = vmatmul.mubr.f32.gmra.mxu0 %v1133
        %v1292 = vpop.f32.mrf.mxu0
        %v1293 = vadd.f32 0.0, %v1292
        %v1294 = vpop.f32.mrf.mxu0
        %1295 = vmatprep.mubr.f32.mxu0 0.0
        %1296 = vmatmul.mubr.f32.gmra.mxu0 %v1136
        %v1297 = vpop.f32.mrf.mxu0
        %v1298 = vadd.f32 0.0, %v1297
        %v1299 = vpop.f32.mrf.mxu0
        %1300 = vmatprep.mubr.f32.mxu0 0.0
        %1301 = vmatmul.mubr.f32.gmra.mxu0 %v1139
        %v1302 = vpop.f32.mrf.mxu0
        %v1303 = vadd.f32 0.0, %v1302
        %v1304 = vpop.f32.mrf.mxu0
        %1305 = vdwg.mxu0
        %v1306 = vadd.f32 %v950, %v1208
        %v1307 = vadd.f32 %v955, %v1213
        %v1308 = vadd.f32 %v960, %v1218
        %v1309 = vadd.f32 %v965, %v1223
        %v1310 = vadd.f32 %v970, %v1228
        %v1311 = vadd.f32 %v975, %v1233
        %v1312 = vadd.f32 %v980, %v1238
        %v1313 = vadd.f32 %v985, %v1243
        %v1314 = vadd.f32 %v990, %v1248
        %v1315 = vadd.f32 %v995, %v1253
        %v1316 = vadd.f32 %v1000, %v1258
        %v1317 = vadd.f32 %v1005, %v1263
        %v1318 = vadd.f32 %v1010, %v1268
        %v1319 = vadd.f32 %v1015, %v1273
        %v1320 = vadd.f32 %v1020, %v1278
        %v1321 = vadd.f32 %v1025, %v1283
        %v1322 = vadd.f32 %v1030, %v1288
        %v1323 = vadd.f32 %v1035, %v1293
        %v1324 = vadd.f32 %v1040, %v1298
        %v1325 = vadd.f32 %v1045, %v1303
        %v1326 = vld [vmem:[%s2] sm:$0x1]
        %v1328 = vlaneseq
        %v1329 = vshrl.u32 %v1328, 7
        %v1330 = vsub.s32 0, %v1329
        %v1331 = vrot.slane %v1326, %v1330
        %v1333 = vadd.f32 %v1306, %v1331
        %v1334 = vadd.f32 %v1307, %v1331
        %v1335 = vadd.f32 %v1308, %v1331
        %v1336 = vadd.f32 %v1309, %v1331
        %v1337 = vadd.f32 %v1310, %v1331
        %v1338 = vadd.f32 %v1311, %v1331
        %v1339 = vadd.f32 %v1312, %v1331
        %v1340 = vadd.f32 %v1313, %v1331
        %v1341 = vadd.f32 %v1314, %v1331
        %v1342 = vadd.f32 %v1315, %v1331
        %v1343 = vadd.f32 %v1316, %v1331
        %v1344 = vadd.f32 %v1317, %v1331
        %v1345 = vadd.f32 %v1318, %v1331
        %v1346 = vadd.f32 %v1319, %v1331
        %v1347 = vadd.f32 %v1320, %v1331
        %v1348 = vadd.f32 %v1321, %v1331
        %v1349 = vadd.f32 %v1322, %v1331
        %v1350 = vadd.f32 %v1323, %v1331
        %v1351 = vadd.f32 %v1324, %v1331
        %v1352 = vadd.f32 %v1325, %v1331
        %v1353 = vmax.f32 %v1333, 0.0
        %v1354 = vmax.f32 %v1334, 0.0
        %v1355 = vmax.f32 %v1335, 0.0
        %v1356 = vmax.f32 %v1336, 0.0
        %v1357 = vmax.f32 %v1337, 0.0
        %v1358 = vmax.f32 %v1338, 0.0
        %v1359 = vmax.f32 %v1339, 0.0
        %v1360 = vmax.f32 %v1340, 0.0
        %v1361 = vmax.f32 %v1341, 0.0
        %v1362 = vmax.f32 %v1342, 0.0
        %v1363 = vmax.f32 %v1343, 0.0
        %v1364 = vmax.f32 %v1344, 0.0
        %v1365 = vmax.f32 %v1345, 0.0
        %v1366 = vmax.f32 %v1346, 0.0
        %v1367 = vmax.f32 %v1347, 0.0
        %v1368 = vmax.f32 %v1348, 0.0
        %v1369 = vmax.f32 %v1349, 0.0
        %v1370 = vmax.f32 %v1350, 0.0
        %v1371 = vmax.f32 %v1351, 0.0
        %v1372 = vmax.f32 %v1352, 0.0
        %v1373 = vsel %vm584, 1, 0
        %v1374 = vsel %vm585, 1, 0
        %v1375 = vsel %vm586, 1, 0
        %v1376 = vsel %vm587, 1, 0
        %v1377 = vsel %vm588, 1, 0
        %v1378 = vsel %vm589, 1, 0
        %v1379 = vsel %vm590, 1, 0
        %v1380 = vsel %vm591, 1, 0
        %v1381 = vsel %vm592, 1, 0
        %v1382 = vsel %vm593, 1, 0
        %v1383 = vsel %vm594, 1, 0
        %v1384 = vsel %vm595, 1, 0
        %v1385 = vsel %vm596, 1, 0
        %v1386 = vsel %vm597, 1, 0
        %v1387 = vsel %vm598, 1, 0
        %v1388 = vsel %vm599, 1, 0
        %v1389 = vsel %vm600, 1, 0
        %v1390 = vsel %vm601, 1, 0
        %v1391 = vsel %vm602, 1, 0
        %v1392 = vsel %vm603, 1, 0
        %vm1393 = vcmp.eq.s32.totalorder %v1373, 1
        %vm1394 = vcmp.eq.s32.totalorder %v1374, 1
        %vm1395 = vcmp.eq.s32.totalorder %v1375, 1
        %vm1396 = vcmp.eq.s32.totalorder %v1376, 1
        %vm1397 = vcmp.eq.s32.totalorder %v1377, 1
        %vm1398 = vcmp.eq.s32.totalorder %v1378, 1
        %vm1399 = vcmp.eq.s32.totalorder %v1379, 1
        %vm1400 = vcmp.eq.s32.totalorder %v1380, 1
        %vm1401 = vcmp.eq.s32.totalorder %v1381, 1
        %vm1402 = vcmp.eq.s32.totalorder %v1382, 1
        %vm1403 = vcmp.eq.s32.totalorder %v1383, 1
        %vm1404 = vcmp.eq.s32.totalorder %v1384, 1
        %vm1405 = vcmp.eq.s32.totalorder %v1385, 1
        %vm1406 = vcmp.eq.s32.totalorder %v1386, 1
        %vm1407 = vcmp.eq.s32.totalorder %v1387, 1
        %vm1408 = vcmp.eq.s32.totalorder %v1388, 1
        %vm1409 = vcmp.eq.s32.totalorder %v1389, 1
        %vm1410 = vcmp.eq.s32.totalorder %v1390, 1
        %vm1411 = vcmp.eq.s32.totalorder %v1391, 1
        %vm1412 = vcmp.eq.s32.totalorder %v1392, 1
        %v1413 = vsel %vm1393, %v1353, 0.0
        %v1414 = vsel %vm1394, %v1354, 0.0
        %v1415 = vsel %vm1395, %v1355, 0.0
        %v1416 = vsel %vm1396, %v1356, 0.0
        %v1417 = vsel %vm1397, %v1357, 0.0
        %v1418 = vsel %vm1398, %v1358, 0.0
        %v1419 = vsel %vm1399, %v1359, 0.0
        %v1420 = vsel %vm1400, %v1360, 0.0
        %v1421 = vsel %vm1401, %v1361, 0.0
        %v1422 = vsel %vm1402, %v1362, 0.0
        %v1423 = vsel %vm1403, %v1363, 0.0
        %v1424 = vsel %vm1404, %v1364, 0.0
        %v1425 = vsel %vm1405, %v1365, 0.0
        %v1426 = vsel %vm1406, %v1366, 0.0
        %v1427 = vsel %vm1407, %v1367, 0.0
        %v1428 = vsel %vm1408, %v1368, 0.0
        %v1429 = vsel %vm1409, %v1369, 0.0
        %v1430 = vsel %vm1410, %v1370, 0.0
        %v1431 = vsel %vm1411, %v1371, 0.0
        %v1432 = vsel %vm1412, %v1372, 0.0
        %vm1453 = vcmask 1040384
        %v1454 = vrot.slane %v1413, 7
        %v1455 = vrot.slane %v1414, 7
        %v1456 = vsel %vm1453, %v1454, %v1455
        %v1457 = vrot.slane %v1415, 7
        %v1458 = vsel %vm1453, %v1455, %v1457
        %v1459 = vrot.slane %v1416, 7
        %v1460 = vsel %vm1453, %v1457, %v1459
        %v1461 = vrot.slane %v1417, 7
        %v1462 = vsel %vm1453, %v1459, %v1461
        %v1463 = vrot.slane %v1418, 7
        %v1464 = vsel %vm1453, %v1461, %v1463
        %v1465 = vrot.slane %v1419, 7
        %v1466 = vsel %vm1453, %v1463, %v1465
        %v1467 = vrot.slane %v1420, 7
        %v1468 = vsel %vm1453, %v1465, %v1467
        %v1469 = vrot.slane %v1421, 7
        %v1470 = vsel %vm1453, %v1467, %v1469
        %v1471 = vrot.slane %v1422, 7
        %v1472 = vsel %vm1453, %v1469, %v1471
        %v1473 = vrot.slane %v1423, 7
        %v1474 = vsel %vm1453, %v1471, %v1473
        %v1475 = vrot.slane %v1424, 7
        %v1476 = vsel %vm1453, %v1473, %v1475
        %v1477 = vrot.slane %v1425, 7
        %v1478 = vsel %vm1453, %v1475, %v1477
        %v1479 = vrot.slane %v1426, 7
        %v1480 = vsel %vm1453, %v1477, %v1479
        %v1481 = vrot.slane %v1427, 7
        %v1482 = vsel %vm1453, %v1479, %v1481
        %v1483 = vrot.slane %v1428, 7
        %v1484 = vsel %vm1453, %v1481, %v1483
        %v1485 = vrot.slane %v1429, 7
        %v1486 = vsel %vm1453, %v1483, %v1485
        %v1487 = vrot.slane %v1430, 7
        %v1488 = vsel %vm1453, %v1485, %v1487
        %v1489 = vrot.slane %v1431, 7
        %v1490 = vsel %vm1453, %v1487, %v1489
        %v1491 = vrot.slane %v1432, 7
        %v1492 = vsel %vm1453, %v1489, %v1491
        %vm1514 = vcmask 523265
        %1515 = vst.msk [vmem:[#allocation2 + $0x20] sm:$0xfe] %vm1514, %v1454
        %vm1516 = vcmask 523264
        %1517 = vst.msk [vmem:[#allocation2 + $0x30] sm:$0xff] %vm1516, %v1456
        %1518 = vst.msk [vmem:[#allocation2 + $0x40] sm:$0xff] %vm1516, %v1458
        %1519 = vst.msk [vmem:[#allocation2 + $0x50] sm:$0xff] %vm1516, %v1460
        %1520 = vst.msk [vmem:[#allocation2 + $0x60] sm:$0xff] %vm1516, %v1462
        %1521 = vst.msk [vmem:[#allocation2 + $0x70] sm:$0xff] %vm1516, %v1464
        %1522 = vst.msk [vmem:[#allocation2 + $0x80] sm:$0xff] %vm1516, %v1466
        %1523 = vst.msk [vmem:[#allocation2 + $0x90] sm:$0xff] %vm1516, %v1468
        %1524 = vst.msk [vmem:[#allocation2 + $0xa0] sm:$0xff] %vm1516, %v1470
        %1525 = vst.msk [vmem:[#allocation2 + $0xb0] sm:$0xff] %vm1516, %v1472
        %1526 = vst.msk [vmem:[#allocation2 + $0xc0] sm:$0xff] %vm1516, %v1474
        %1527 = vst.msk [vmem:[#allocation2 + $0xd0] sm:$0xff] %vm1516, %v1476
        %1528 = vst.msk [vmem:[#allocation2 + $0xe0] sm:$0xff] %vm1516, %v1478
        %1529 = vst.msk [vmem:[#allocation2 + $0xf0] sm:$0xff] %vm1516, %v1480
        %1530 = vst.msk [vmem:[#allocation2 + $0x100] sm:$0xff] %vm1516, %v1482
        %1531 = vst.msk [vmem:[#allocation2 + $0x110] sm:$0xff] %vm1516, %v1484
        %1532 = vst.msk [vmem:[#allocation2 + $0x120] sm:$0xff] %vm1516, %v1486
        %1533 = vst.msk [vmem:[#allocation2 + $0x130] sm:$0xff] %vm1516, %v1488
        %1534 = vst.msk [vmem:[#allocation2 + $0x140] sm:$0xff] %vm1516, %v1490
        %1535 = vst.msk [vmem:[#allocation2 + $0x150] sm:$0xff] %vm1516, %v1492
        %vm1536 = vcmask 516096
        %1537 = vst.msk [vmem:[#allocation2 + $0x160] sm:$0x1] %vm1536, %v1491
        %1538 = vrot.lane.b32.xlu0 %v1413, 64
        %v1539 = vpop.permute.xlu0 %1538
        %1540 = vrot.lane.b32.xlu0 %v1414, 64
        %v1541 = vpop.permute.xlu0 %1540
        %1542 = vrot.lane.b32.xlu0 %v1415, 64
        %v1543 = vpop.permute.xlu0 %1542
        %1544 = vrot.lane.b32.xlu0 %v1416, 64
        %v1545 = vpop.permute.xlu0 %1544
        %1546 = vrot.lane.b32.xlu0 %v1417, 64
        %v1547 = vpop.permute.xlu0 %1546
        %1548 = vrot.lane.b32.xlu0 %v1418, 64
        %v1549 = vpop.permute.xlu0 %1548
        %1550 = vrot.lane.b32.xlu0 %v1419, 64
        %v1551 = vpop.permute.xlu0 %1550
        %1552 = vrot.lane.b32.xlu0 %v1420, 64
        %v1553 = vpop.permute.xlu0 %1552
        %1554 = vrot.lane.b32.xlu0 %v1421, 64
        %v1555 = vpop.permute.xlu0 %1554
        %1556 = vrot.lane.b32.xlu0 %v1422, 64
        %v1557 = vpop.permute.xlu0 %1556
        %1558 = vrot.lane.b32.xlu0 %v1423, 64
        %v1559 = vpop.permute.xlu0 %1558
        %1560 = vrot.lane.b32.xlu0 %v1424, 64
        %v1561 = vpop.permute.xlu0 %1560
        %1562 = vrot.lane.b32.xlu0 %v1425, 64
        %v1563 = vpop.permute.xlu0 %1562
        %1564 = vrot.lane.b32.xlu0 %v1426, 64
        %v1565 = vpop.permute.xlu0 %1564
        %1566 = vrot.lane.b32.xlu0 %v1427, 64
        %v1567 = vpop.permute.xlu0 %1566
        %1568 = vrot.lane.b32.xlu0 %v1428, 64
        %v1569 = vpop.permute.xlu0 %1568
        %1570 = vrot.lane.b32.xlu0 %v1429, 64
        %v1571 = vpop.permute.xlu0 %1570
        %1572 = vrot.lane.b32.xlu0 %v1430, 64
        %v1573 = vpop.permute.xlu0 %1572
        %1574 = vrot.lane.b32.xlu0 %v1431, 64
        %v1575 = vpop.permute.xlu0 %1574
        %1576 = vrot.lane.b32.xlu0 %v1432, 64
        %v1577 = vpop.permute.xlu0 %1576
        %vm1598 = vcmask 1048064
        %1599 = vst.msk [vmem:[#allocation2 + $0x20] sm:$0xff] %vm1598, %v1539
        %1600 = vst.msk [vmem:[#allocation2 + $0x30] sm:$0xff] %vm1598, %v1541
        %1601 = vst.msk [vmem:[#allocation2 + $0x40] sm:$0xff] %vm1598, %v1543
        %1602 = vst.msk [vmem:[#allocation2 + $0x50] sm:$0xff] %vm1598, %v1545
        %1603 = vst.msk [vmem:[#allocation2 + $0x60] sm:$0xff] %vm1598, %v1547
        %1604 = vst.msk [vmem:[#allocation2 + $0x70] sm:$0xff] %vm1598, %v1549
        %1605 = vst.msk [vmem:[#allocation2 + $0x80] sm:$0xff] %vm1598, %v1551
        %1606 = vst.msk [vmem:[#allocation2 + $0x90] sm:$0xff] %vm1598, %v1553
        %1607 = vst.msk [vmem:[#allocation2 + $0xa0] sm:$0xff] %vm1598, %v1555
        %1608 = vst.msk [vmem:[#allocation2 + $0xb0] sm:$0xff] %vm1598, %v1557
        %1609 = vst.msk [vmem:[#allocation2 + $0xc0] sm:$0xff] %vm1598, %v1559
        %1610 = vst.msk [vmem:[#allocation2 + $0xd0] sm:$0xff] %vm1598, %v1561
        %1611 = vst.msk [vmem:[#allocation2 + $0xe0] sm:$0xff] %vm1598, %v1563
        %1612 = vst.msk [vmem:[#allocation2 + $0xf0] sm:$0xff] %vm1598, %v1565
        %1613 = vst.msk [vmem:[#allocation2 + $0x100] sm:$0xff] %vm1598, %v1567
        %1614 = vst.msk [vmem:[#allocation2 + $0x110] sm:$0xff] %vm1598, %v1569
        %1615 = vst.msk [vmem:[#allocation2 + $0x120] sm:$0xff] %vm1598, %v1571
        %1616 = vst.msk [vmem:[#allocation2 + $0x130] sm:$0xff] %vm1598, %v1573
        %1617 = vst.msk [vmem:[#allocation2 + $0x140] sm:$0xff] %vm1598, %v1575
        %1618 = vst.msk [vmem:[#allocation2 + $0x150] sm:$0xff] %vm1598, %v1577
        %vm1619 = vcmask 1046528
        %v1620 = vrot.slane %v1413, 1
        %v1621 = vrot.slane %v1414, 1
        %v1622 = vsel %vm1619, %v1620, %v1621
        %v1623 = vrot.slane %v1415, 1
        %v1624 = vsel %vm1619, %v1621, %v1623
        %v1625 = vrot.slane %v1416, 1
        %v1626 = vsel %vm1619, %v1623, %v1625
        %v1627 = vrot.slane %v1417, 1
        %v1628 = vsel %vm1619, %v1625, %v1627
        %v1629 = vrot.slane %v1418, 1
        %v1630 = vsel %vm1619, %v1627, %v1629
        %v1631 = vrot.slane %v1419, 1
        %v1632 = vsel %vm1619, %v1629, %v1631
        %v1633 = vrot.slane %v1420, 1
        %v1634 = vsel %vm1619, %v1631, %v1633
        %v1635 = vrot.slane %v1421, 1
        %v1636 = vsel %vm1619, %v1633, %v1635
        %v1637 = vrot.slane %v1422, 1
        %v1638 = vsel %vm1619, %v1635, %v1637
        %v1639 = vrot.slane %v1423, 1
        %v1640 = vsel %vm1619, %v1637, %v1639
        %v1641 = vrot.slane %v1424, 1
        %v1642 = vsel %vm1619, %v1639, %v1641
        %v1643 = vrot.slane %v1425, 1
        %v1644 = vsel %vm1619, %v1641, %v1643
        %v1645 = vrot.slane %v1426, 1
        %v1646 = vsel %vm1619, %v1643, %v1645
        %v1647 = vrot.slane %v1427, 1
        %v1648 = vsel %vm1619, %v1645, %v1647
        %v1649 = vrot.slane %v1428, 1
        %v1650 = vsel %vm1619, %v1647, %v1649
        %v1651 = vrot.slane %v1429, 1
        %v1652 = vsel %vm1619, %v1649, %v1651
        %v1653 = vrot.slane %v1430, 1
        %v1654 = vsel %vm1619, %v1651, %v1653
        %v1655 = vrot.slane %v1431, 1
        %v1656 = vsel %vm1619, %v1653, %v1655
        %v1657 = vrot.slane %v1432, 1
        %v1658 = vsel %vm1619, %v1655, %v1657
        %vm1680 = vcmask 523271
        %1681 = vst.msk [vmem:[#allocation2 + $0x18] sm:$0x80] %vm1680, %v1620
        %1682 = vst.msk [vmem:[#allocation2 + $0x28] sm:$0xff] %vm1516, %v1622
        %1683 = vst.msk [vmem:[#allocation2 + $0x38] sm:$0xff] %vm1516, %v1624
        %1684 = vst.msk [vmem:[#allocation2 + $0x48] sm:$0xff] %vm1516, %v1626
        %1685 = vst.msk [vmem:[#allocation2 + $0x58] sm:$0xff] %vm1516, %v1628
        %1686 = vst.msk [vmem:[#allocation2 + $0x68] sm:$0xff] %vm1516, %v1630
        %1687 = vst.msk [vmem:[#allocation2 + $0x78] sm:$0xff] %vm1516, %v1632
        %1688 = vst.msk [vmem:[#allocation2 + $0x88] sm:$0xff] %vm1516, %v1634
        %1689 = vst.msk [vmem:[#allocation2 + $0x98] sm:$0xff] %vm1516, %v1636
        %1690 = vst.msk [vmem:[#allocation2 + $0xa8] sm:$0xff] %vm1516, %v1638
        %1691 = vst.msk [vmem:[#allocation2 + $0xb8] sm:$0xff] %vm1516, %v1640
        %1692 = vst.msk [vmem:[#allocation2 + $0xc8] sm:$0xff] %vm1516, %v1642
        %1693 = vst.msk [vmem:[#allocation2 + $0xd8] sm:$0xff] %vm1516, %v1644
        %1694 = vst.msk [vmem:[#allocation2 + $0xe8] sm:$0xff] %vm1516, %v1646
        %1695 = vst.msk [vmem:[#allocation2 + $0xf8] sm:$0xff] %vm1516, %v1648
        %1696 = vst.msk [vmem:[#allocation2 + $0x108] sm:$0xff] %vm1516, %v1650
        %1697 = vst.msk [vmem:[#allocation2 + $0x118] sm:$0xff] %vm1516, %v1652
        %1698 = vst.msk [vmem:[#allocation2 + $0x128] sm:$0xff] %vm1516, %v1654
        %1699 = vst.msk [vmem:[#allocation2 + $0x138] sm:$0xff] %vm1516, %v1656
        %1700 = vst.msk [vmem:[#allocation2 + $0x148] sm:$0xff] %vm1516, %v1658
        %vm1701 = vcmask 522240
        %1702 = vst.msk [vmem:[#allocation2 + $0x158] sm:$0x7f] %vm1701, %v1657
        %v1703 = vld [vmem:[#allocation2] sm:$0xff]
        %v1704 = vld [vmem:[#allocation2 + $0x8] sm:$0xff]
        %v1705 = vld [vmem:[#allocation2 + $0x10] sm:$0xff]
        %v1706 = vld [vmem:[#allocation2 + $0x18] sm:$0xff]
        %v1707 = vld [vmem:[#allocation2 + $0x20] sm:$0xff]
        %v1708 = vld [vmem:[#allocation2 + $0x28] sm:$0xff]
        %v1709 = vld [vmem:[#allocation2 + $0x30] sm:$0xff]
        %v1710 = vld [vmem:[#allocation2 + $0x38] sm:$0xff]
        %v1711 = vld [vmem:[#allocation2 + $0x40] sm:$0xff]
        %v1712 = vld [vmem:[#allocation2 + $0x48] sm:$0xff]
        %v1713 = vld [vmem:[#allocation2 + $0x50] sm:$0xff]
        %v1714 = vld [vmem:[#allocation2 + $0x58] sm:$0xff]
        %v1715 = vld [vmem:[#allocation2 + $0x60] sm:$0xff]
        %v1716 = vld [vmem:[#allocation2 + $0x68] sm:$0xff]
        %v1717 = vld [vmem:[#allocation2 + $0x70] sm:$0xff]
        %v1718 = vld [vmem:[#allocation2 + $0x78] sm:$0xff]
        %v1719 = vld [vmem:[#allocation2 + $0x80] sm:$0xff]
        %v1720 = vld [vmem:[#allocation2 + $0x88] sm:$0xff]
        %v1721 = vld [vmem:[#allocation2 + $0x90] sm:$0xff]
        %v1722 = vld [vmem:[#allocation2 + $0x98] sm:$0xff]
        %v1723 = vld [vmem:[#allocation2 + $0xa0] sm:$0xff]
        %v1724 = vld [vmem:[#allocation2 + $0xa8] sm:$0xff]
        %v1725 = vld [vmem:[#allocation2 + $0xb0] sm:$0xff]
        %v1726 = vld [vmem:[#allocation2 + $0xb8] sm:$0xff]
        %v1727 = vld [vmem:[#allocation2 + $0xc0] sm:$0xff]
        %v1728 = vld [vmem:[#allocation2 + $0xc8] sm:$0xff]
        %v1729 = vld [vmem:[#allocation2 + $0xd0] sm:$0xff]
        %v1730 = vld [vmem:[#allocation2 + $0xd8] sm:$0xff]
        %v1731 = vld [vmem:[#allocation2 + $0xe0] sm:$0xff]
        %v1732 = vld [vmem:[#allocation2 + $0xe8] sm:$0xff]
        %v1733 = vld [vmem:[#allocation2 + $0xf0] sm:$0xff]
        %v1734 = vld [vmem:[#allocation2 + $0xf8] sm:$0xff]
        %v1735 = vld [vmem:[#allocation2 + $0x100] sm:$0xff]
        %v1736 = vld [vmem:[#allocation2 + $0x108] sm:$0xff]
        %v1737 = vld [vmem:[#allocation2 + $0x110] sm:$0xff]
        %v1738 = vld [vmem:[#allocation2 + $0x118] sm:$0xff]
        %v1739 = vld [vmem:[#allocation2 + $0x120] sm:$0xff]
        %v1740 = vld [vmem:[#allocation2 + $0x128] sm:$0xff]
        %v1741 = vld [vmem:[#allocation2 + $0x130] sm:$0xff]
        %v1742 = vld [vmem:[#allocation2 + $0x138] sm:$0xff]
        %v1743 = vld [vmem:[%s3] sm:$0xff]
        %v1744 = vld [vmem:[%s3 + $0x8] sm:$0xff]
        %v1745 = vld [vmem:[%s3 + $0x10] sm:$0xff]
        %v1746 = vld [vmem:[%s3 + $0x18] sm:$0xff]
        %v1747 = vld [vmem:[%s3 + $0x20] sm:$0xff]
        %v1748 = vld [vmem:[%s3 + $0x28] sm:$0xff]
        %v1749 = vld [vmem:[%s3 + $0x30] sm:$0xff]
        %v1750 = vld [vmem:[%s3 + $0x38] sm:$0xff]
        %v1751 = vld [vmem:[%s3 + $0x40] sm:$0xff]
        %v1752 = vld [vmem:[%s3 + $0x48] sm:$0xff]
        %v1753 = vld [vmem:[%s3 + $0x50] sm:$0xff]
        %v1754 = vld [vmem:[%s3 + $0x58] sm:$0xff]
        %v1755 = vld [vmem:[%s3 + $0x60] sm:$0xff]
        %v1756 = vld [vmem:[%s3 + $0x68] sm:$0xff]
        %v1757 = vld [vmem:[%s3 + $0x70] sm:$0xff]
        %v1758 = vld [vmem:[%s3 + $0x78] sm:$0xff]
        %v1759 = vld [vmem:[%s3 + $0x80] sm:$0xff]
        %v1760 = vld [vmem:[%s3 + $0x88] sm:$0xff]
        %v1761 = vld [vmem:[%s3 + $0x90] sm:$0xff]
        %v1762 = vld [vmem:[%s3 + $0x98] sm:$0xff]
        %v1763 = vld [vmem:[%s3 + $0xa0] sm:$0xff]
        %v1764 = vld [vmem:[%s3 + $0xa8] sm:$0xff]
        %v1765 = vld [vmem:[%s3 + $0xb0] sm:$0xff]
        %v1766 = vld [vmem:[%s3 + $0xb8] sm:$0xff]
        %v1767 = vld [vmem:[#allocation2 + $0x140] sm:$0xff]
        %v1768 = vld [vmem:[#allocation2 + $0x148] sm:$0xff]
        %v1769 = vld [vmem:[#allocation2 + $0x150] sm:$0xff]
        %v1770 = vld [vmem:[#allocation2 + $0x158] sm:$0xff]
        %s1771 = scalar_lea.vmem %s3, 192
        %v1772 = vld [vmem:[%s1771] sm:$0xff]
        %v1773 = vld [vmem:[%s1771 + $0x8] sm:$0xff]
        %v1774 = vld [vmem:[%s1771 + $0x10] sm:$0xff]
        %v1775 = vld [vmem:[%s1771 + $0x18] sm:$0xff]
        %v1776 = vld [vmem:[%s1771 + $0x20] sm:$0xff]
        %v1777 = vld [vmem:[%s1771 + $0x28] sm:$0xff]
        %v1778 = vld [vmem:[%s1771 + $0x30] sm:$0xff]
        %v1779 = vld [vmem:[%s1771 + $0x38] sm:$0xff]
        %v1780 = vld [vmem:[%s1771 + $0x40] sm:$0xff]
        %v1781 = vld [vmem:[%s1771 + $0x48] sm:$0xff]
        %v1782 = vld [vmem:[%s1771 + $0x50] sm:$0xff]
        %v1783 = vld [vmem:[%s1771 + $0x58] sm:$0xff]
        %v1784 = vld [vmem:[%s1771 + $0x60] sm:$0xff]
        %v1785 = vld [vmem:[%s1771 + $0x68] sm:$0xff]
        %v1786 = vld [vmem:[%s1771 + $0x70] sm:$0xff]
        %v1787 = vld [vmem:[%s1771 + $0x78] sm:$0xff]
        %v1788 = vld [vmem:[%s1771 + $0x80] sm:$0xff]
        %v1789 = vld [vmem:[%s1771 + $0x88] sm:$0xff]
        %v1790 = vld [vmem:[%s1771 + $0x90] sm:$0xff]
        %v1791 = vld [vmem:[%s1771 + $0x98] sm:$0xff]
        %v1792 = vld [vmem:[%s1771 + $0xa0] sm:$0xff]
        %v1793 = vld [vmem:[%s1771 + $0xa8] sm:$0xff]
        %v1794 = vld [vmem:[%s1771 + $0xb0] sm:$0xff]
        %v1795 = vld [vmem:[%s1771 + $0xb8] sm:$0xff]
        %v1797 = vsel %vm1516, %v1708, 0
        %v1800 = vsel %vm1516, %v1710, 0
        %v1803 = vsel %vm1516, %v1712, 0
        %v1806 = vsel %vm1516, %v1714, 0
        %v1809 = vsel %vm1516, %v1716, 0
        %v1812 = vsel %vm1516, %v1718, 0
        %v1815 = vsel %vm1516, %v1720, 0
        %v1818 = vsel %vm1516, %v1722, 0
        %v1821 = vsel %vm1516, %v1724, 0
        %v1824 = vsel %vm1516, %v1726, 0
        %v1827 = vsel %vm1516, %v1728, 0
        %v1830 = vsel %vm1516, %v1730, 0
        %v1833 = vsel %vm1516, %v1732, 0
        %v1836 = vsel %vm1516, %v1734, 0
        %v1839 = vsel %vm1516, %v1736, 0
        %v1842 = vsel %vm1516, %v1738, 0
        %v1845 = vsel %vm1516, %v1740, 0
        %v1848 = vsel %vm1516, %v1742, 0
        %v1851 = vsel %vm1516, %v1768, 0
        %v1854 = vsel %vm1516, %v1770, 0
        %1856 = vmatprep.subr.mxu0 0.0
        %1857 = vmatpush1.msra.mxu0 %v1787
        %1858 = vmatprep.subr.mxu0 0.0
        %1859 = vmatpush1.msra.mxu0 %v1786
        %1860 = vmatprep.subr.mxu0 0.0
        %1861 = vmatpush1.msra.mxu0 %v1785
        %1862 = vmatprep.subr.mxu0 0.0
        %1863 = vmatpush1.msra.mxu0 %v1784
        %1864 = vmatprep.subr.mxu0 0.0
        %1865 = vmatpush1.msra.mxu0 %v1783
        %1866 = vmatprep.subr.mxu0 0.0
        %1867 = vmatpush1.msra.mxu0 %v1782
        %1868 = vmatprep.subr.mxu0 0.0
        %1869 = vmatpush1.msra.mxu0 %v1781
        %1870 = vmatprep.subr.mxu0 0.0
        %1871 = vmatpush1.msra.mxu0 %v1780
        %1872 = vmatprep.subr.mxu0 0.0
        %1873 = vmatpush1.msra.mxu0 %v1779
        %1874 = vmatprep.subr.mxu0 0.0
        %1875 = vmatpush1.msra.mxu0 %v1778
        %1876 = vmatprep.subr.mxu0 0.0
        %1877 = vmatpush1.msra.mxu0 %v1777
        %1878 = vmatprep.subr.mxu0 0.0
        %1879 = vmatpush1.msra.mxu0 %v1776
        %1880 = vmatprep.subr.mxu0 0.0
        %1881 = vmatpush1.msra.mxu0 %v1775
        %1882 = vmatprep.subr.mxu0 0.0
        %1883 = vmatpush1.msra.mxu0 %v1774
        %1884 = vmatprep.subr.mxu0 0.0
        %1885 = vmatpush1.msra.mxu0 %v1773
        %1886 = vmatprep.subr.mxu0 0.0
        %1887 = vmatpush1.msra.mxu0 %v1772
        %1888 = vmatprep.subr.mxu0 0.0
        %1889 = vmatpush2.msra.mxu0 0.0
        %1890 = vmatprep.subr.mxu0 0.0
        %1891 = vmatpush2.msra.mxu0 0.0
        %1892 = vmatprep.subr.mxu0 0.0
        %1893 = vmatpush2.msra.mxu0 0.0
        %1894 = vmatprep.subr.mxu0 0.0
        %1895 = vmatpush2.msra.mxu0 0.0
        %1896 = vmatprep.subr.mxu0 0.0
        %1897 = vmatpush2.msra.mxu0 0.0
        %1898 = vmatprep.subr.mxu0 0.0
        %1899 = vmatpush2.msra.mxu0 0.0
        %1900 = vmatprep.subr.mxu0 0.0
        %1901 = vmatpush2.msra.mxu0 0.0
        %1902 = vmatprep.subr.mxu0 0.0
        %1903 = vmatpush2.msra.mxu0 0.0
        %1904 = vmatprep.subr.mxu0 0.0
        %1905 = vmatpush2.msra.mxu0 %v1795
        %1906 = vmatprep.subr.mxu0 0.0
        %1907 = vmatpush2.msra.mxu0 %v1794
        %1908 = vmatprep.subr.mxu0 0.0
        %1909 = vmatpush2.msra.mxu0 %v1793
        %1910 = vmatprep.subr.mxu0 0.0
        %1911 = vmatpush2.msra.mxu0 %v1792
        %1912 = vmatprep.subr.mxu0 0.0
        %1913 = vmatpush2.msra.mxu0 %v1791
        %1914 = vmatprep.subr.mxu0 0.0
        %1915 = vmatpush2.msra.mxu0 %v1790
        %1916 = vmatprep.subr.mxu0 0.0
        %1917 = vmatpush2.msra.mxu0 %v1789
        %1918 = vmatprep.subr.mxu0 0.0
        %1919 = vmatpush2.msra.mxu0 %v1788
        %1920 = vmatprep.mubr.f32.mxu0 %v1797
        %1921 = vmatmul.mubr.f32.gmra.mxu0 %v1707
        %v1922 = vpop.f32.mrf.mxu0
        %v1923 = vadd.f32 0.0, %v1922
        %v1924 = vpop.f32.mrf.mxu0
        %1925 = vmatprep.mubr.f32.mxu0 %v1800
        %1926 = vmatmul.mubr.f32.gmra.mxu0 %v1709
        %v1927 = vpop.f32.mrf.mxu0
        %v1928 = vadd.f32 0.0, %v1927
        %v1929 = vpop.f32.mrf.mxu0
        %1930 = vmatprep.mubr.f32.mxu0 %v1803
        %1931 = vmatmul.mubr.f32.gmra.mxu0 %v1711
        %v1932 = vpop.f32.mrf.mxu0
        %v1933 = vadd.f32 0.0, %v1932
        %v1934 = vpop.f32.mrf.mxu0
        %1935 = vmatprep.mubr.f32.mxu0 %v1806
        %1936 = vmatmul.mubr.f32.gmra.mxu0 %v1713
        %v1937 = vpop.f32.mrf.mxu0
        %v1938 = vadd.f32 0.0, %v1937
        %v1939 = vpop.f32.mrf.mxu0
        %1940 = vmatprep.mubr.f32.mxu0 %v1809
        %1941 = vmatmul.mubr.f32.gmra.mxu0 %v1715
        %v1942 = vpop.f32.mrf.mxu0
        %v1943 = vadd.f32 0.0, %v1942
        %v1944 = vpop.f32.mrf.mxu0
        %1945 = vmatprep.mubr.f32.mxu0 %v1812
        %1946 = vmatmul.mubr.f32.gmra.mxu0 %v1717
        %v1947 = vpop.f32.mrf.mxu0
        %v1948 = vadd.f32 0.0, %v1947
        %v1949 = vpop.f32.mrf.mxu0
        %1950 = vmatprep.mubr.f32.mxu0 %v1815
        %1951 = vmatmul.mubr.f32.gmra.mxu0 %v1719
        %v1952 = vpop.f32.mrf.mxu0
        %v1953 = vadd.f32 0.0, %v1952
        %v1954 = vpop.f32.mrf.mxu0
        %1955 = vmatprep.mubr.f32.mxu0 %v1818
        %1956 = vmatmul.mubr.f32.gmra.mxu0 %v1721
        %v1957 = vpop.f32.mrf.mxu0
        %v1958 = vadd.f32 0.0, %v1957
        %v1959 = vpop.f32.mrf.mxu0
        %1960 = vmatprep.mubr.f32.mxu0 %v1821
        %1961 = vmatmul.mubr.f32.gmra.mxu0 %v1723
        %v1962 = vpop.f32.mrf.mxu0
        %v1963 = vadd.f32 0.0, %v1962
        %v1964 = vpop.f32.mrf.mxu0
        %1965 = vmatprep.mubr.f32.mxu0 %v1824
        %1966 = vmatmul.mubr.f32.gmra.mxu0 %v1725
        %v1967 = vpop.f32.mrf.mxu0
        %v1968 = vadd.f32 0.0, %v1967
        %v1969 = vpop.f32.mrf.mxu0
        %1970 = vmatprep.mubr.f32.mxu0 %v1827
        %1971 = vmatmul.mubr.f32.gmra.mxu0 %v1727
        %v1972 = vpop.f32.mrf.mxu0
        %v1973 = vadd.f32 0.0, %v1972
        %v1974 = vpop.f32.mrf.mxu0
        %1975 = vmatprep.mubr.f32.mxu0 %v1830
        %1976 = vmatmul.mubr.f32.gmra.mxu0 %v1729
        %v1977 = vpop.f32.mrf.mxu0
        %v1978 = vadd.f32 0.0, %v1977
        %v1979 = vpop.f32.mrf.mxu0
        %1980 = vmatprep.mubr.f32.mxu0 %v1833
        %1981 = vmatmul.mubr.f32.gmra.mxu0 %v1731
        %v1982 = vpop.f32.mrf.mxu0
        %v1983 = vadd.f32 0.0, %v1982
        %v1984 = vpop.f32.mrf.mxu0
        %1985 = vmatprep.mubr.f32.mxu0 %v1836
        %1986 = vmatmul.mubr.f32.gmra.mxu0 %v1733
        %v1987 = vpop.f32.mrf.mxu0
        %v1988 = vadd.f32 0.0, %v1987
        %v1989 = vpop.f32.mrf.mxu0
        %1990 = vmatprep.mubr.f32.mxu0 %v1839
        %1991 = vmatmul.mubr.f32.gmra.mxu0 %v1735
        %v1992 = vpop.f32.mrf.mxu0
        %v1993 = vadd.f32 0.0, %v1992
        %v1994 = vpop.f32.mrf.mxu0
        %1995 = vmatprep.mubr.f32.mxu0 %v1842
        %1996 = vmatmul.mubr.f32.gmra.mxu0 %v1737
        %v1997 = vpop.f32.mrf.mxu0
        %v1998 = vadd.f32 0.0, %v1997
        %v1999 = vpop.f32.mrf.mxu0
        %2000 = vmatprep.mubr.f32.mxu0 %v1845
        %2001 = vmatmul.mubr.f32.gmra.mxu0 %v1739
        %v2002 = vpop.f32.mrf.mxu0
        %v2003 = vadd.f32 0.0, %v2002
        %v2004 = vpop.f32.mrf.mxu0
        %2005 = vmatprep.mubr.f32.mxu0 %v1848
        %2006 = vmatmul.mubr.f32.gmra.mxu0 %v1741
        %v2007 = vpop.f32.mrf.mxu0
        %v2008 = vadd.f32 0.0, %v2007
        %v2009 = vpop.f32.mrf.mxu0
        %2010 = vmatprep.mubr.f32.mxu0 %v1851
        %2011 = vmatmul.mubr.f32.gmra.mxu0 %v1767
        %v2012 = vpop.f32.mrf.mxu0
        %v2013 = vadd.f32 0.0, %v2012
        %v2014 = vpop.f32.mrf.mxu0
        %2015 = vmatprep.mubr.f32.mxu0 %v1854
        %2016 = vmatmul.mubr.f32.gmra.mxu0 %v1769
        %v2017 = vpop.f32.mrf.mxu0
        %v2018 = vadd.f32 0.0, %v2017
        %v2019 = vpop.f32.mrf.mxu0
        %2020 = vdwg.mxu0
        %v2022 = vsel %vm1516, %v1704, 0
        %v2025 = vsel %vm1516, %v1706, 0
        %2027 = vmatprep.subr.mxu0 0.0
        %2028 = vmatpush1.msra.mxu0 %v1758
        %2029 = vmatprep.subr.mxu0 0.0
        %2030 = vmatpush1.msra.mxu0 %v1757
        %2031 = vmatprep.subr.mxu0 0.0
        %2032 = vmatpush1.msra.mxu0 %v1756
        %2033 = vmatprep.subr.mxu0 0.0
        %2034 = vmatpush1.msra.mxu0 %v1755
        %2035 = vmatprep.subr.mxu0 0.0
        %2036 = vmatpush1.msra.mxu0 %v1754
        %2037 = vmatprep.subr.mxu0 0.0
        %2038 = vmatpush1.msra.mxu0 %v1753
        %2039 = vmatprep.subr.mxu0 0.0
        %2040 = vmatpush1.msra.mxu0 %v1752
        %2041 = vmatprep.subr.mxu0 0.0
        %2042 = vmatpush1.msra.mxu0 %v1751
        %2043 = vmatprep.subr.mxu0 0.0
        %2044 = vmatpush1.msra.mxu0 %v1750
        %2045 = vmatprep.subr.mxu0 0.0
        %2046 = vmatpush1.msra.mxu0 %v1749
        %2047 = vmatprep.subr.mxu0 0.0
        %2048 = vmatpush1.msra.mxu0 %v1748
        %2049 = vmatprep.subr.mxu0 0.0
        %2050 = vmatpush1.msra.mxu0 %v1747
        %2051 = vmatprep.subr.mxu0 0.0
        %2052 = vmatpush1.msra.mxu0 %v1746
        %2053 = vmatprep.subr.mxu0 0.0
        %2054 = vmatpush1.msra.mxu0 %v1745
        %2055 = vmatprep.subr.mxu0 0.0
        %2056 = vmatpush1.msra.mxu0 %v1744
        %2057 = vmatprep.subr.mxu0 0.0
        %2058 = vmatpush1.msra.mxu0 %v1743
        %2059 = vmatprep.subr.mxu0 0.0
        %2060 = vmatpush2.msra.mxu0 0.0
        %2061 = vmatprep.subr.mxu0 0.0
        %2062 = vmatpush2.msra.mxu0 0.0
        %2063 = vmatprep.subr.mxu0 0.0
        %2064 = vmatpush2.msra.mxu0 0.0
        %2065 = vmatprep.subr.mxu0 0.0
        %2066 = vmatpush2.msra.mxu0 0.0
        %2067 = vmatprep.subr.mxu0 0.0
        %2068 = vmatpush2.msra.mxu0 0.0
        %2069 = vmatprep.subr.mxu0 0.0
        %2070 = vmatpush2.msra.mxu0 0.0
        %2071 = vmatprep.subr.mxu0 0.0
        %2072 = vmatpush2.msra.mxu0 0.0
        %2073 = vmatprep.subr.mxu0 0.0
        %2074 = vmatpush2.msra.mxu0 0.0
        %2075 = vmatprep.subr.mxu0 0.0
        %2076 = vmatpush2.msra.mxu0 %v1766
        %2077 = vmatprep.subr.mxu0 0.0
        %2078 = vmatpush2.msra.mxu0 %v1765
        %2079 = vmatprep.subr.mxu0 0.0
        %2080 = vmatpush2.msra.mxu0 %v1764
        %2081 = vmatprep.subr.mxu0 0.0
        %2082 = vmatpush2.msra.mxu0 %v1763
        %2083 = vmatprep.subr.mxu0 0.0
        %2084 = vmatpush2.msra.mxu0 %v1762
        %2085 = vmatprep.subr.mxu0 0.0
        %2086 = vmatpush2.msra.mxu0 %v1761
        %2087 = vmatprep.subr.mxu0 0.0
        %2088 = vmatpush2.msra.mxu0 %v1760
        %2089 = vmatprep.subr.mxu0 0.0
        %2090 = vmatpush2.msra.mxu0 %v1759
        %2091 = vmatprep.mubr.f32.mxu0 %v2022
        %2092 = vmatmul.mubr.f32.gmra.mxu0 %v1703
        %v2093 = vpop.f32.mrf.mxu0
        %v2094 = vadd.f32 %v1923, %v2093
        %v2095 = vpop.f32.mrf.mxu0
        %2096 = vmatprep.mubr.f32.mxu0 %v2025
        %2097 = vmatmul.mubr.f32.gmra.mxu0 %v1705
        %v2098 = vpop.f32.mrf.mxu0
        %v2099 = vadd.f32 %v1928, %v2098
        %v2100 = vpop.f32.mrf.mxu0
        %2101 = vmatprep.mubr.f32.mxu0 %v1797
        %2102 = vmatmul.mubr.f32.gmra.mxu0 %v1707
        %v2103 = vpop.f32.mrf.mxu0
        %v2104 = vadd.f32 %v1933, %v2103
        %v2105 = vpop.f32.mrf.mxu0
        %2106 = vmatprep.mubr.f32.mxu0 %v1800
        %2107 = vmatmul.mubr.f32.gmra.mxu0 %v1709
        %v2108 = vpop.f32.mrf.mxu0
        %v2109 = vadd.f32 %v1938, %v2108
        %v2110 = vpop.f32.mrf.mxu0
        %2111 = vmatprep.mubr.f32.mxu0 %v1803
        %2112 = vmatmul.mubr.f32.gmra.mxu0 %v1711
        %v2113 = vpop.f32.mrf.mxu0
        %v2114 = vadd.f32 %v1943, %v2113
        %v2115 = vpop.f32.mrf.mxu0
        %2116 = vmatprep.mubr.f32.mxu0 %v1806
        %2117 = vmatmul.mubr.f32.gmra.mxu0 %v1713
        %v2118 = vpop.f32.mrf.mxu0
        %v2119 = vadd.f32 %v1948, %v2118
        %v2120 = vpop.f32.mrf.mxu0
        %2121 = vmatprep.mubr.f32.mxu0 %v1809
        %2122 = vmatmul.mubr.f32.gmra.mxu0 %v1715
        %v2123 = vpop.f32.mrf.mxu0
        %v2124 = vadd.f32 %v1953, %v2123
        %v2125 = vpop.f32.mrf.mxu0
        %2126 = vmatprep.mubr.f32.mxu0 %v1812
        %2127 = vmatmul.mubr.f32.gmra.mxu0 %v1717
        %v2128 = vpop.f32.mrf.mxu0
        %v2129 = vadd.f32 %v1958, %v2128
        %v2130 = vpop.f32.mrf.mxu0
        %2131 = vmatprep.mubr.f32.mxu0 %v1815
        %2132 = vmatmul.mubr.f32.gmra.mxu0 %v1719
        %v2133 = vpop.f32.mrf.mxu0
        %v2134 = vadd.f32 %v1963, %v2133
        %v2135 = vpop.f32.mrf.mxu0
        %2136 = vmatprep.mubr.f32.mxu0 %v1818
        %2137 = vmatmul.mubr.f32.gmra.mxu0 %v1721
        %v2138 = vpop.f32.mrf.mxu0
        %v2139 = vadd.f32 %v1968, %v2138
        %v2140 = vpop.f32.mrf.mxu0
        %2141 = vmatprep.mubr.f32.mxu0 %v1821
        %2142 = vmatmul.mubr.f32.gmra.mxu0 %v1723
        %v2143 = vpop.f32.mrf.mxu0
        %v2144 = vadd.f32 %v1973, %v2143
        %v2145 = vpop.f32.mrf.mxu0
        %2146 = vmatprep.mubr.f32.mxu0 %v1824
        %2147 = vmatmul.mubr.f32.gmra.mxu0 %v1725
        %v2148 = vpop.f32.mrf.mxu0
        %v2149 = vadd.f32 %v1978, %v2148
        %v2150 = vpop.f32.mrf.mxu0
        %2151 = vmatprep.mubr.f32.mxu0 %v1827
        %2152 = vmatmul.mubr.f32.gmra.mxu0 %v1727
        %v2153 = vpop.f32.mrf.mxu0
        %v2154 = vadd.f32 %v1983, %v2153
        %v2155 = vpop.f32.mrf.mxu0
        %2156 = vmatprep.mubr.f32.mxu0 %v1830
        %2157 = vmatmul.mubr.f32.gmra.mxu0 %v1729
        %v2158 = vpop.f32.mrf.mxu0
        %v2159 = vadd.f32 %v1988, %v2158
        %v2160 = vpop.f32.mrf.mxu0
        %2161 = vmatprep.mubr.f32.mxu0 %v1833
        %2162 = vmatmul.mubr.f32.gmra.mxu0 %v1731
        %v2163 = vpop.f32.mrf.mxu0
        %v2164 = vadd.f32 %v1993, %v2163
        %v2165 = vpop.f32.mrf.mxu0
        %2166 = vmatprep.mubr.f32.mxu0 %v1836
        %2167 = vmatmul.mubr.f32.gmra.mxu0 %v1733
        %v2168 = vpop.f32.mrf.mxu0
        %v2169 = vadd.f32 %v1998, %v2168
        %v2170 = vpop.f32.mrf.mxu0
        %2171 = vmatprep.mubr.f32.mxu0 %v1839
        %2172 = vmatmul.mubr.f32.gmra.mxu0 %v1735
        %v2173 = vpop.f32.mrf.mxu0
        %v2174 = vadd.f32 %v2003, %v2173
        %v2175 = vpop.f32.mrf.mxu0
        %2176 = vmatprep.mubr.f32.mxu0 %v1842
        %2177 = vmatmul.mubr.f32.gmra.mxu0 %v1737
        %v2178 = vpop.f32.mrf.mxu0
        %v2179 = vadd.f32 %v2008, %v2178
        %v2180 = vpop.f32.mrf.mxu0
        %2181 = vmatprep.mubr.f32.mxu0 %v1845
        %2182 = vmatmul.mubr.f32.gmra.mxu0 %v1739
        %v2183 = vpop.f32.mrf.mxu0
        %v2184 = vadd.f32 %v2013, %v2183
        %v2185 = vpop.f32.mrf.mxu0
        %2186 = vmatprep.mubr.f32.mxu0 %v1848
        %2187 = vmatmul.mubr.f32.gmra.mxu0 %v1741
        %v2188 = vpop.f32.mrf.mxu0
        %v2189 = vadd.f32 %v2018, %v2188
        %v2190 = vpop.f32.mrf.mxu0
        %2191 = vdwg.mxu0
        %v2192 = vld [vmem:[#allocation2 + $0x40] sm:$0xff]
        %v2193 = vld [vmem:[#allocation2 + $0x48] sm:$0xff]
        %v2194 = vld [vmem:[#allocation2 + $0x50] sm:$0xff]
        %v2195 = vld [vmem:[#allocation2 + $0x58] sm:$0xff]
        %v2196 = vld [vmem:[#allocation2 + $0x60] sm:$0xff]
        %v2197 = vld [vmem:[#allocation2 + $0x68] sm:$0xff]
        %v2198 = vld [vmem:[#allocation2 + $0x70] sm:$0xff]
        %v2199 = vld [vmem:[#allocation2 + $0x78] sm:$0xff]
        %v2200 = vld [vmem:[#allocation2 + $0x80] sm:$0xff]
        %v2201 = vld [vmem:[#allocation2 + $0x88] sm:$0xff]
        %v2202 = vld [vmem:[#allocation2 + $0x90] sm:$0xff]
        %v2203 = vld [vmem:[#allocation2 + $0x98] sm:$0xff]
        %v2204 = vld [vmem:[#allocation2 + $0xa0] sm:$0xff]
        %v2205 = vld [vmem:[#allocation2 + $0xa8] sm:$0xff]
        %v2206 = vld [vmem:[#allocation2 + $0xb0] sm:$0xff]
        %v2207 = vld [vmem:[#allocation2 + $0xb8] sm:$0xff]
        %v2208 = vld [vmem:[#allocation2 + $0xc0] sm:$0xff]
        %v2209 = vld [vmem:[#allocation2 + $0xc8] sm:$0xff]
        %v2210 = vld [vmem:[#allocation2 + $0xd0] sm:$0xff]
        %v2211 = vld [vmem:[#allocation2 + $0xd8] sm:$0xff]
        %v2212 = vld [vmem:[#allocation2 + $0xe0] sm:$0xff]
        %v2213 = vld [vmem:[#allocation2 + $0xe8] sm:$0xff]
        %v2214 = vld [vmem:[#allocation2 + $0xf0] sm:$0xff]
        %v2215 = vld [vmem:[#allocation2 + $0xf8] sm:$0xff]
        %v2216 = vld [vmem:[#allocation2 + $0x100] sm:$0xff]
        %v2217 = vld [vmem:[#allocation2 + $0x108] sm:$0xff]
        %v2218 = vld [vmem:[#allocation2 + $0x110] sm:$0xff]
        %v2219 = vld [vmem:[#allocation2 + $0x118] sm:$0xff]
        %v2220 = vld [vmem:[#allocation2 + $0x120] sm:$0xff]
        %v2221 = vld [vmem:[#allocation2 + $0x128] sm:$0xff]
        %v2222 = vld [vmem:[#allocation2 + $0x130] sm:$0xff]
        %v2223 = vld [vmem:[#allocation2 + $0x138] sm:$0xff]
        %v2224 = vld [vmem:[#allocation2 + $0x140] sm:$0xff]
        %v2225 = vld [vmem:[#allocation2 + $0x148] sm:$0xff]
        %v2226 = vld [vmem:[#allocation2 + $0x150] sm:$0xff]
        %v2227 = vld [vmem:[#allocation2 + $0x158] sm:$0xff]
        %v2228 = vld [vmem:[#allocation2 + $0x160] sm:$0xff]
        %v2229 = vld [vmem:[#allocation2 + $0x168] sm:$0xff]
        %v2230 = vld [vmem:[#allocation2 + $0x170] sm:$0xff]
        %v2231 = vld [vmem:[#allocation2 + $0x178] sm:$0xff]
        %s2232 = scalar_lea.vmem %s3, 384
        %v2233 = vld [vmem:[%s2232] sm:$0xff]
        %v2234 = vld [vmem:[%s2232 + $0x8] sm:$0xff]
        %v2235 = vld [vmem:[%s2232 + $0x10] sm:$0xff]
        %v2236 = vld [vmem:[%s2232 + $0x18] sm:$0xff]
        %v2237 = vld [vmem:[%s2232 + $0x20] sm:$0xff]
        %v2238 = vld [vmem:[%s2232 + $0x28] sm:$0xff]
        %v2239 = vld [vmem:[%s2232 + $0x30] sm:$0xff]
        %v2240 = vld [vmem:[%s2232 + $0x38] sm:$0xff]
        %v2241 = vld [vmem:[%s2232 + $0x40] sm:$0xff]
        %v2242 = vld [vmem:[%s2232 + $0x48] sm:$0xff]
        %v2243 = vld [vmem:[%s2232 + $0x50] sm:$0xff]
        %v2244 = vld [vmem:[%s2232 + $0x58] sm:$0xff]
        %v2245 = vld [vmem:[%s2232 + $0x60] sm:$0xff]
        %v2246 = vld [vmem:[%s2232 + $0x68] sm:$0xff]
        %v2247 = vld [vmem:[%s2232 + $0x70] sm:$0xff]
        %v2248 = vld [vmem:[%s2232 + $0x78] sm:$0xff]
        %v2249 = vld [vmem:[%s2232 + $0x80] sm:$0xff]
        %v2250 = vld [vmem:[%s2232 + $0x88] sm:$0xff]
        %v2251 = vld [vmem:[%s2232 + $0x90] sm:$0xff]
        %v2252 = vld [vmem:[%s2232 + $0x98] sm:$0xff]
        %v2253 = vld [vmem:[%s2232 + $0xa0] sm:$0xff]
        %v2254 = vld [vmem:[%s2232 + $0xa8] sm:$0xff]
        %v2255 = vld [vmem:[%s2232 + $0xb0] sm:$0xff]
        %v2256 = vld [vmem:[%s2232 + $0xb8] sm:$0xff]
        %v2258 = vsel %vm1516, %v2193, 0
        %v2261 = vsel %vm1516, %v2195, 0
        %v2264 = vsel %vm1516, %v2197, 0
        %v2267 = vsel %vm1516, %v2199, 0
        %v2270 = vsel %vm1516, %v2201, 0
        %v2273 = vsel %vm1516, %v2203, 0
        %v2276 = vsel %vm1516, %v2205, 0
        %v2279 = vsel %vm1516, %v2207, 0
        %v2282 = vsel %vm1516, %v2209, 0
        %v2285 = vsel %vm1516, %v2211, 0
        %v2288 = vsel %vm1516, %v2213, 0
        %v2291 = vsel %vm1516, %v2215, 0
        %v2294 = vsel %vm1516, %v2217, 0
        %v2297 = vsel %vm1516, %v2219, 0
        %v2300 = vsel %vm1516, %v2221, 0
        %v2303 = vsel %vm1516, %v2223, 0
        %v2306 = vsel %vm1516, %v2225, 0
        %v2309 = vsel %vm1516, %v2227, 0
        %v2312 = vsel %vm1516, %v2229, 0
        %v2315 = vsel %vm1516, %v2231, 0
        %2317 = vmatprep.subr.mxu0 0.0
        %2318 = vmatpush1.msra.mxu0 %v2248
        %2319 = vmatprep.subr.mxu0 0.0
        %2320 = vmatpush1.msra.mxu0 %v2247
        %2321 = vmatprep.subr.mxu0 0.0
        %2322 = vmatpush1.msra.mxu0 %v2246
        %2323 = vmatprep.subr.mxu0 0.0
        %2324 = vmatpush1.msra.mxu0 %v2245
        %2325 = vmatprep.subr.mxu0 0.0
        %2326 = vmatpush1.msra.mxu0 %v2244
        %2327 = vmatprep.subr.mxu0 0.0
        %2328 = vmatpush1.msra.mxu0 %v2243
        %2329 = vmatprep.subr.mxu0 0.0
        %2330 = vmatpush1.msra.mxu0 %v2242
        %2331 = vmatprep.subr.mxu0 0.0
        %2332 = vmatpush1.msra.mxu0 %v2241
        %2333 = vmatprep.subr.mxu0 0.0
        %2334 = vmatpush1.msra.mxu0 %v2240
        %2335 = vmatprep.subr.mxu0 0.0
        %2336 = vmatpush1.msra.mxu0 %v2239
        %2337 = vmatprep.subr.mxu0 0.0
        %2338 = vmatpush1.msra.mxu0 %v2238
        %2339 = vmatprep.subr.mxu0 0.0
        %2340 = vmatpush1.msra.mxu0 %v2237
        %2341 = vmatprep.subr.mxu0 0.0
        %2342 = vmatpush1.msra.mxu0 %v2236
        %2343 = vmatprep.subr.mxu0 0.0
        %2344 = vmatpush1.msra.mxu0 %v2235
        %2345 = vmatprep.subr.mxu0 0.0
        %2346 = vmatpush1.msra.mxu0 %v2234
        %2347 = vmatprep.subr.mxu0 0.0
        %2348 = vmatpush1.msra.mxu0 %v2233
        %2349 = vmatprep.subr.mxu0 0.0
        %2350 = vmatpush2.msra.mxu0 0.0
        %2351 = vmatprep.subr.mxu0 0.0
        %2352 = vmatpush2.msra.mxu0 0.0
        %2353 = vmatprep.subr.mxu0 0.0
        %2354 = vmatpush2.msra.mxu0 0.0
        %2355 = vmatprep.subr.mxu0 0.0
        %2356 = vmatpush2.msra.mxu0 0.0
        %2357 = vmatprep.subr.mxu0 0.0
        %2358 = vmatpush2.msra.mxu0 0.0
        %2359 = vmatprep.subr.mxu0 0.0
        %2360 = vmatpush2.msra.mxu0 0.0
        %2361 = vmatprep.subr.mxu0 0.0
        %2362 = vmatpush2.msra.mxu0 0.0
        %2363 = vmatprep.subr.mxu0 0.0
        %2364 = vmatpush2.msra.mxu0 0.0
        %2365 = vmatprep.subr.mxu0 0.0
        %2366 = vmatpush2.msra.mxu0 %v2256
        %2367 = vmatprep.subr.mxu0 0.0
        %2368 = vmatpush2.msra.mxu0 %v2255
        %2369 = vmatprep.subr.mxu0 0.0
        %2370 = vmatpush2.msra.mxu0 %v2254
        %2371 = vmatprep.subr.mxu0 0.0
        %2372 = vmatpush2.msra.mxu0 %v2253
        %2373 = vmatprep.subr.mxu0 0.0
        %2374 = vmatpush2.msra.mxu0 %v2252
        %2375 = vmatprep.subr.mxu0 0.0
        %2376 = vmatpush2.msra.mxu0 %v2251
        %2377 = vmatprep.subr.mxu0 0.0
        %2378 = vmatpush2.msra.mxu0 %v2250
        %2379 = vmatprep.subr.mxu0 0.0
        %2380 = vmatpush2.msra.mxu0 %v2249
        %2381 = vmatprep.mubr.f32.mxu0 %v2258
        %2382 = vmatmul.mubr.f32.gmra.mxu0 %v2192
        %v2383 = vpop.f32.mrf.mxu0
        %v2384 = vadd.f32 0.0, %v2383
        %v2385 = vpop.f32.mrf.mxu0
        %2386 = vmatprep.mubr.f32.mxu0 %v2261
        %2387 = vmatmul.mubr.f32.gmra.mxu0 %v2194
        %v2388 = vpop.f32.mrf.mxu0
        %v2389 = vadd.f32 0.0, %v2388
        %v2390 = vpop.f32.mrf.mxu0
        %2391 = vmatprep.mubr.f32.mxu0 %v2264
        %2392 = vmatmul.mubr.f32.gmra.mxu0 %v2196
        %v2393 = vpop.f32.mrf.mxu0
        %v2394 = vadd.f32 0.0, %v2393
        %v2395 = vpop.f32.mrf.mxu0
        %2396 = vmatprep.mubr.f32.mxu0 %v2267
        %2397 = vmatmul.mubr.f32.gmra.mxu0 %v2198
        %v2398 = vpop.f32.mrf.mxu0
        %v2399 = vadd.f32 0.0, %v2398
        %v2400 = vpop.f32.mrf.mxu0
        %2401 = vmatprep.mubr.f32.mxu0 %v2270
        %2402 = vmatmul.mubr.f32.gmra.mxu0 %v2200
        %v2403 = vpop.f32.mrf.mxu0
        %v2404 = vadd.f32 0.0, %v2403
        %v2405 = vpop.f32.mrf.mxu0
        %2406 = vmatprep.mubr.f32.mxu0 %v2273
        %2407 = vmatmul.mubr.f32.gmra.mxu0 %v2202
        %v2408 = vpop.f32.mrf.mxu0
        %v2409 = vadd.f32 0.0, %v2408
        %v2410 = vpop.f32.mrf.mxu0
        %2411 = vmatprep.mubr.f32.mxu0 %v2276
        %2412 = vmatmul.mubr.f32.gmra.mxu0 %v2204
        %v2413 = vpop.f32.mrf.mxu0
        %v2414 = vadd.f32 0.0, %v2413
        %v2415 = vpop.f32.mrf.mxu0
        %2416 = vmatprep.mubr.f32.mxu0 %v2279
        %2417 = vmatmul.mubr.f32.gmra.mxu0 %v2206
        %v2418 = vpop.f32.mrf.mxu0
        %v2419 = vadd.f32 0.0, %v2418
        %v2420 = vpop.f32.mrf.mxu0
        %2421 = vmatprep.mubr.f32.mxu0 %v2282
        %2422 = vmatmul.mubr.f32.gmra.mxu0 %v2208
        %v2423 = vpop.f32.mrf.mxu0
        %v2424 = vadd.f32 0.0, %v2423
        %v2425 = vpop.f32.mrf.mxu0
        %2426 = vmatprep.mubr.f32.mxu0 %v2285
        %2427 = vmatmul.mubr.f32.gmra.mxu0 %v2210
        %v2428 = vpop.f32.mrf.mxu0
        %v2429 = vadd.f32 0.0, %v2428
        %v2430 = vpop.f32.mrf.mxu0
        %2431 = vmatprep.mubr.f32.mxu0 %v2288
        %2432 = vmatmul.mubr.f32.gmra.mxu0 %v2212
        %v2433 = vpop.f32.mrf.mxu0
        %v2434 = vadd.f32 0.0, %v2433
        %v2435 = vpop.f32.mrf.mxu0
        %2436 = vmatprep.mubr.f32.mxu0 %v2291
        %2437 = vmatmul.mubr.f32.gmra.mxu0 %v2214
        %v2438 = vpop.f32.mrf.mxu0
        %v2439 = vadd.f32 0.0, %v2438
        %v2440 = vpop.f32.mrf.mxu0
        %2441 = vmatprep.mubr.f32.mxu0 %v2294
        %2442 = vmatmul.mubr.f32.gmra.mxu0 %v2216
        %v2443 = vpop.f32.mrf.mxu0
        %v2444 = vadd.f32 0.0, %v2443
        %v2445 = vpop.f32.mrf.mxu0
        %2446 = vmatprep.mubr.f32.mxu0 %v2297
        %2447 = vmatmul.mubr.f32.gmra.mxu0 %v2218
        %v2448 = vpop.f32.mrf.mxu0
        %v2449 = vadd.f32 0.0, %v2448
        %v2450 = vpop.f32.mrf.mxu0
        %2451 = vmatprep.mubr.f32.mxu0 %v2300
        %2452 = vmatmul.mubr.f32.gmra.mxu0 %v2220
        %v2453 = vpop.f32.mrf.mxu0
        %v2454 = vadd.f32 0.0, %v2453
        %v2455 = vpop.f32.mrf.mxu0
        %2456 = vmatprep.mubr.f32.mxu0 %v2303
        %2457 = vmatmul.mubr.f32.gmra.mxu0 %v2222
        %v2458 = vpop.f32.mrf.mxu0
        %v2459 = vadd.f32 0.0, %v2458
        %v2460 = vpop.f32.mrf.mxu0
        %2461 = vmatprep.mubr.f32.mxu0 %v2306
        %2462 = vmatmul.mubr.f32.gmra.mxu0 %v2224
        %v2463 = vpop.f32.mrf.mxu0
        %v2464 = vadd.f32 0.0, %v2463
        %v2465 = vpop.f32.mrf.mxu0
        %2466 = vmatprep.mubr.f32.mxu0 %v2309
        %2467 = vmatmul.mubr.f32.gmra.mxu0 %v2226
        %v2468 = vpop.f32.mrf.mxu0
        %v2469 = vadd.f32 0.0, %v2468
        %v2470 = vpop.f32.mrf.mxu0
        %2471 = vmatprep.mubr.f32.mxu0 %v2312
        %2472 = vmatmul.mubr.f32.gmra.mxu0 %v2228
        %v2473 = vpop.f32.mrf.mxu0
        %v2474 = vadd.f32 0.0, %v2473
        %v2475 = vpop.f32.mrf.mxu0
        %2476 = vmatprep.mubr.f32.mxu0 %v2315
        %2477 = vmatmul.mubr.f32.gmra.mxu0 %v2230
        %v2478 = vpop.f32.mrf.mxu0
        %v2479 = vadd.f32 0.0, %v2478
        %v2480 = vpop.f32.mrf.mxu0
        %2481 = vdwg.mxu0
        %v2482 = vadd.f32 %v2094, %v2384
        %v2483 = vadd.f32 %v2099, %v2389
        %v2484 = vadd.f32 %v2104, %v2394
        %v2485 = vadd.f32 %v2109, %v2399
        %v2486 = vadd.f32 %v2114, %v2404
        %v2487 = vadd.f32 %v2119, %v2409
        %v2488 = vadd.f32 %v2124, %v2414
        %v2489 = vadd.f32 %v2129, %v2419
        %v2490 = vadd.f32 %v2134, %v2424
        %v2491 = vadd.f32 %v2139, %v2429
        %v2492 = vadd.f32 %v2144, %v2434
        %v2493 = vadd.f32 %v2149, %v2439
        %v2494 = vadd.f32 %v2154, %v2444
        %v2495 = vadd.f32 %v2159, %v2449
        %v2496 = vadd.f32 %v2164, %v2454
        %v2497 = vadd.f32 %v2169, %v2459
        %v2498 = vadd.f32 %v2174, %v2464
        %v2499 = vadd.f32 %v2179, %v2469
        %v2500 = vadd.f32 %v2184, %v2474
        %v2501 = vadd.f32 %v2189, %v2479
        %v2502 = vld [vmem:[%s4] sm:$0x1]
        %v2504 = vlaneseq
        %v2505 = vshrl.u32 %v2504, 7
        %v2506 = vsub.s32 0, %v2505
        %v2507 = vrot.slane %v2502, %v2506
        %v2509 = vadd.f32 %v2482, %v2507
        %v2510 = vadd.f32 %v2483, %v2507
        %v2511 = vadd.f32 %v2484, %v2507
        %v2512 = vadd.f32 %v2485, %v2507
        %v2513 = vadd.f32 %v2486, %v2507
        %v2514 = vadd.f32 %v2487, %v2507
        %v2515 = vadd.f32 %v2488, %v2507
        %v2516 = vadd.f32 %v2489, %v2507
        %v2517 = vadd.f32 %v2490, %v2507
        %v2518 = vadd.f32 %v2491, %v2507
        %v2519 = vadd.f32 %v2492, %v2507
        %v2520 = vadd.f32 %v2493, %v2507
        %v2521 = vadd.f32 %v2494, %v2507
        %v2522 = vadd.f32 %v2495, %v2507
        %v2523 = vadd.f32 %v2496, %v2507
        %v2524 = vadd.f32 %v2497, %v2507
        %v2525 = vadd.f32 %v2498, %v2507
        %v2526 = vadd.f32 %v2499, %v2507
        %v2527 = vadd.f32 %v2500, %v2507
        %v2528 = vadd.f32 %v2501, %v2507
        %v2529 = vmax.f32 %v2509, 0.0
        %v2530 = vmax.f32 %v2510, 0.0
        %v2531 = vmax.f32 %v2511, 0.0
        %v2532 = vmax.f32 %v2512, 0.0
        %v2533 = vmax.f32 %v2513, 0.0
        %v2534 = vmax.f32 %v2514, 0.0
        %v2535 = vmax.f32 %v2515, 0.0
        %v2536 = vmax.f32 %v2516, 0.0
        %v2537 = vmax.f32 %v2517, 0.0
        %v2538 = vmax.f32 %v2518, 0.0
        %v2539 = vmax.f32 %v2519, 0.0
        %v2540 = vmax.f32 %v2520, 0.0
        %v2541 = vmax.f32 %v2521, 0.0
        %v2542 = vmax.f32 %v2522, 0.0
        %v2543 = vmax.f32 %v2523, 0.0
        %v2544 = vmax.f32 %v2524, 0.0
        %v2545 = vmax.f32 %v2525, 0.0
        %v2546 = vmax.f32 %v2526, 0.0
        %v2547 = vmax.f32 %v2527, 0.0
        %v2548 = vmax.f32 %v2528, 0.0
        %v2549 = vsel %vm1393, %v2529, 0.0
        %v2550 = vsel %vm1394, %v2530, 0.0
        %v2551 = vsel %vm1395, %v2531, 0.0
        %v2552 = vsel %vm1396, %v2532, 0.0
        %v2553 = vsel %vm1397, %v2533, 0.0
        %v2554 = vsel %vm1398, %v2534, 0.0
        %v2555 = vsel %vm1399, %v2535, 0.0
        %v2556 = vsel %vm1400, %v2536, 0.0
        %v2557 = vsel %vm1401, %v2537, 0.0
        %v2558 = vsel %vm1402, %v2538, 0.0
        %v2559 = vsel %vm1403, %v2539, 0.0
        %v2560 = vsel %vm1404, %v2540, 0.0
        %v2561 = vsel %vm1405, %v2541, 0.0
        %v2562 = vsel %vm1406, %v2542, 0.0
        %v2563 = vsel %vm1407, %v2543, 0.0
        %v2564 = vsel %vm1408, %v2544, 0.0
        %v2565 = vsel %vm1409, %v2545, 0.0
        %v2566 = vsel %vm1410, %v2546, 0.0
        %v2567 = vsel %vm1411, %v2547, 0.0
        %v2568 = vsel %vm1412, %v2548, 0.0
        %v2589 = vrot.slane %v2549, 7
        %v2590 = vrot.slane %v2550, 7
        %v2591 = vsel %vm1453, %v2589, %v2590
        %v2592 = vrot.slane %v2551, 7
        %v2593 = vsel %vm1453, %v2590, %v2592
        %v2594 = vrot.slane %v2552, 7
        %v2595 = vsel %vm1453, %v2592, %v2594
        %v2596 = vrot.slane %v2553, 7
        %v2597 = vsel %vm1453, %v2594, %v2596
        %v2598 = vrot.slane %v2554, 7
        %v2599 = vsel %vm1453, %v2596, %v2598
        %v2600 = vrot.slane %v2555, 7
        %v2601 = vsel %vm1453, %v2598, %v2600
        %v2602 = vrot.slane %v2556, 7
        %v2603 = vsel %vm1453, %v2600, %v2602
        %v2604 = vrot.slane %v2557, 7
        %v2605 = vsel %vm1453, %v2602, %v2604
        %v2606 = vrot.slane %v2558, 7
        %v2607 = vsel %vm1453, %v2604, %v2606
        %v2608 = vrot.slane %v2559, 7
        %v2609 = vsel %vm1453, %v2606, %v2608
        %v2610 = vrot.slane %v2560, 7
        %v2611 = vsel %vm1453, %v2608, %v2610
        %v2612 = vrot.slane %v2561, 7
        %v2613 = vsel %vm1453, %v2610, %v2612
        %v2614 = vrot.slane %v2562, 7
        %v2615 = vsel %vm1453, %v2612, %v2614
        %v2616 = vrot.slane %v2563, 7
        %v2617 = vsel %vm1453, %v2614, %v2616
        %v2618 = vrot.slane %v2564, 7
        %v2619 = vsel %vm1453, %v2616, %v2618
        %v2620 = vrot.slane %v2565, 7
        %v2621 = vsel %vm1453, %v2618, %v2620
        %v2622 = vrot.slane %v2566, 7
        %v2623 = vsel %vm1453, %v2620, %v2622
        %v2624 = vrot.slane %v2567, 7
        %v2625 = vsel %vm1453, %v2622, %v2624
        %v2626 = vrot.slane %v2568, 7
        %v2627 = vsel %vm1453, %v2624, %v2626
        %2649 = vst [vmem:[#allocation3 + $0x30] sm:$0xfe] %v2589
        %2650 = vst [vmem:[#allocation3 + $0x48] sm:$0xff] %v2591
        %2651 = vst [vmem:[#allocation3 + $0x60] sm:$0xff] %v2593
        %2652 = vst [vmem:[#allocation3 + $0x78] sm:$0xff] %v2595
        %2653 = vst [vmem:[#allocation3 + $0x90] sm:$0xff] %v2597
        %2654 = vst [vmem:[#allocation3 + $0xa8] sm:$0xff] %v2599
        %2655 = vst [vmem:[#allocation3 + $0xc0] sm:$0xff] %v2601
        %2656 = vst [vmem:[#allocation3 + $0xd8] sm:$0xff] %v2603
        %2657 = vst [vmem:[#allocation3 + $0xf0] sm:$0xff] %v2605
        %2658 = vst [vmem:[#allocation3 + $0x108] sm:$0xff] %v2607
        %2659 = vst [vmem:[#allocation3 + $0x120] sm:$0xff] %v2609
        %2660 = vst [vmem:[#allocation3 + $0x138] sm:$0xff] %v2611
        %2661 = vst [vmem:[#allocation3 + $0x150] sm:$0xff] %v2613
        %2662 = vst [vmem:[#allocation3 + $0x168] sm:$0xff] %v2615
        %2663 = vst [vmem:[#allocation3 + $0x180] sm:$0xff] %v2617
        %2664 = vst [vmem:[#allocation3 + $0x198] sm:$0xff] %v2619
        %2665 = vst [vmem:[#allocation3 + $0x1b0] sm:$0xff] %v2621
        %2666 = vst [vmem:[#allocation3 + $0x1c8] sm:$0xff] %v2623
        %2667 = vst [vmem:[#allocation3 + $0x1e0] sm:$0xff] %v2625
        %2668 = vst [vmem:[#allocation3 + $0x1f8] sm:$0xff] %v2627
        %2669 = vst [vmem:[#allocation3 + $0x210] sm:$0x1] %v2626
        %2670 = vst [vmem:[#allocation3 + $0x38] sm:$0xff] %v2549
        %2671 = vst [vmem:[#allocation3 + $0x50] sm:$0xff] %v2550
        %2672 = vst [vmem:[#allocation3 + $0x68] sm:$0xff] %v2551
        %2673 = vst [vmem:[#allocation3 + $0x80] sm:$0xff] %v2552
        %2674 = vst [vmem:[#allocation3 + $0x98] sm:$0xff] %v2553
        %2675 = vst [vmem:[#allocation3 + $0xb0] sm:$0xff] %v2554
        %2676 = vst [vmem:[#allocation3 + $0xc8] sm:$0xff] %v2555
        %2677 = vst [vmem:[#allocation3 + $0xe0] sm:$0xff] %v2556
        %2678 = vst [vmem:[#allocation3 + $0xf8] sm:$0xff] %v2557
        %2679 = vst [vmem:[#allocation3 + $0x110] sm:$0xff] %v2558
        %2680 = vst [vmem:[#allocation3 + $0x128] sm:$0xff] %v2559
        %2681 = vst [vmem:[#allocation3 + $0x140] sm:$0xff] %v2560
        %2682 = vst [vmem:[#allocation3 + $0x158] sm:$0xff] %v2561
        %2683 = vst [vmem:[#allocation3 + $0x170] sm:$0xff] %v2562
        %2684 = vst [vmem:[#allocation3 + $0x188] sm:$0xff] %v2563
        %2685 = vst [vmem:[#allocation3 + $0x1a0] sm:$0xff] %v2564
        %2686 = vst [vmem:[#allocation3 + $0x1b8] sm:$0xff] %v2565
        %2687 = vst [vmem:[#allocation3 + $0x1d0] sm:$0xff] %v2566
        %2688 = vst [vmem:[#allocation3 + $0x1e8] sm:$0xff] %v2567
        %2689 = vst [vmem:[#allocation3 + $0x200] sm:$0xff] %v2568
        %v2690 = vrot.slane %v2549, 1
        %v2691 = vrot.slane %v2550, 1
        %v2692 = vsel %vm1619, %v2690, %v2691
        %v2693 = vrot.slane %v2551, 1
        %v2694 = vsel %vm1619, %v2691, %v2693
        %v2695 = vrot.slane %v2552, 1
        %v2696 = vsel %vm1619, %v2693, %v2695
        %v2697 = vrot.slane %v2553, 1
        %v2698 = vsel %vm1619, %v2695, %v2697
        %v2699 = vrot.slane %v2554, 1
        %v2700 = vsel %vm1619, %v2697, %v2699
        %v2701 = vrot.slane %v2555, 1
        %v2702 = vsel %vm1619, %v2699, %v2701
        %v2703 = vrot.slane %v2556, 1
        %v2704 = vsel %vm1619, %v2701, %v2703
        %v2705 = vrot.slane %v2557, 1
        %v2706 = vsel %vm1619, %v2703, %v2705
        %v2707 = vrot.slane %v2558, 1
        %v2708 = vsel %vm1619, %v2705, %v2707
        %v2709 = vrot.slane %v2559, 1
        %v2710 = vsel %vm1619, %v2707, %v2709
        %v2711 = vrot.slane %v2560, 1
        %v2712 = vsel %vm1619, %v2709, %v2711
        %v2713 = vrot.slane %v2561, 1
        %v2714 = vsel %vm1619, %v2711, %v2713
        %v2715 = vrot.slane %v2562, 1
        %v2716 = vsel %vm1619, %v2713, %v2715
        %v2717 = vrot.slane %v2563, 1
        %v2718 = vsel %vm1619, %v2715, %v2717
        %v2719 = vrot.slane %v2564, 1
        %v2720 = vsel %vm1619, %v2717, %v2719
        %v2721 = vrot.slane %v2565, 1
        %v2722 = vsel %vm1619, %v2719, %v2721
        %v2723 = vrot.slane %v2566, 1
        %v2724 = vsel %vm1619, %v2721, %v2723
        %v2725 = vrot.slane %v2567, 1
        %v2726 = vsel %vm1619, %v2723, %v2725
        %v2727 = vrot.slane %v2568, 1
        %v2728 = vsel %vm1619, %v2725, %v2727
        %2750 = vst [vmem:[#allocation3 + $0x28] sm:$0x80] %v2690
        %2751 = vst [vmem:[#allocation3 + $0x40] sm:$0xff] %v2692
        %2752 = vst [vmem:[#allocation3 + $0x58] sm:$0xff] %v2694
        %2753 = vst [vmem:[#allocation3 + $0x70] sm:$0xff] %v2696
        %2754 = vst [vmem:[#allocation3 + $0x88] sm:$0xff] %v2698
        %2755 = vst [vmem:[#allocation3 + $0xa0] sm:$0xff] %v2700
        %2756 = vst [vmem:[#allocation3 + $0xb8] sm:$0xff] %v2702
        %2757 = vst [vmem:[#allocation3 + $0xd0] sm:$0xff] %v2704
        %2758 = vst [vmem:[#allocation3 + $0xe8] sm:$0xff] %v2706
        %2759 = vst [vmem:[#allocation3 + $0x100] sm:$0xff] %v2708
        %2760 = vst [vmem:[#allocation3 + $0x118] sm:$0xff] %v2710
        %2761 = vst [vmem:[#allocation3 + $0x130] sm:$0xff] %v2712
        %2762 = vst [vmem:[#allocation3 + $0x148] sm:$0xff] %v2714
        %2763 = vst [vmem:[#allocation3 + $0x160] sm:$0xff] %v2716
        %2764 = vst [vmem:[#allocation3 + $0x178] sm:$0xff] %v2718
        %2765 = vst [vmem:[#allocation3 + $0x190] sm:$0xff] %v2720
        %2766 = vst [vmem:[#allocation3 + $0x1a8] sm:$0xff] %v2722
        %2767 = vst [vmem:[#allocation3 + $0x1c0] sm:$0xff] %v2724
        %2768 = vst [vmem:[#allocation3 + $0x1d8] sm:$0xff] %v2726
        %2769 = vst [vmem:[#allocation3 + $0x1f0] sm:$0xff] %v2728
        %2770 = vst [vmem:[#allocation3 + $0x208] sm:$0x7f] %v2727
        %v2771 = vld [vmem:[#allocation3] sm:$0xff]
        %v2772 = vld [vmem:[#allocation3 + $0x8] sm:$0xff]
        %v2773 = vld [vmem:[#allocation3 + $0x10] sm:$0xff]
        %v2774 = vld [vmem:[#allocation3 + $0x18] sm:$0xff]
        %v2775 = vld [vmem:[#allocation3 + $0x20] sm:$0xff]
        %v2776 = vld [vmem:[#allocation3 + $0x28] sm:$0xff]
        %v2777 = vld [vmem:[#allocation3 + $0x30] sm:$0xff]
        %v2778 = vld [vmem:[#allocation3 + $0x38] sm:$0xff]
        %v2779 = vld [vmem:[#allocation3 + $0x40] sm:$0xff]
        %v2780 = vld [vmem:[#allocation3 + $0x48] sm:$0xff]
        %v2781 = vld [vmem:[#allocation3 + $0x50] sm:$0xff]
        %v2782 = vld [vmem:[#allocation3 + $0x58] sm:$0xff]
        %v2783 = vld [vmem:[#allocation3 + $0x60] sm:$0xff]
        %v2784 = vld [vmem:[#allocation3 + $0x68] sm:$0xff]
        %v2785 = vld [vmem:[#allocation3 + $0x70] sm:$0xff]
        %v2786 = vld [vmem:[#allocation3 + $0x78] sm:$0xff]
        %v2787 = vld [vmem:[#allocation3 + $0x80] sm:$0xff]
        %v2788 = vld [vmem:[#allocation3 + $0x88] sm:$0xff]
        %v2789 = vld [vmem:[#allocation3 + $0x90] sm:$0xff]
        %v2790 = vld [vmem:[#allocation3 + $0x98] sm:$0xff]
        %v2791 = vld [vmem:[#allocation3 + $0xa0] sm:$0xff]
        %v2792 = vld [vmem:[#allocation3 + $0xa8] sm:$0xff]
        %v2793 = vld [vmem:[#allocation3 + $0xb0] sm:$0xff]
        %v2794 = vld [vmem:[#allocation3 + $0xb8] sm:$0xff]
        %v2795 = vld [vmem:[#allocation3 + $0xc0] sm:$0xff]
        %v2796 = vld [vmem:[#allocation3 + $0xc8] sm:$0xff]
        %v2797 = vld [vmem:[#allocation3 + $0xd0] sm:$0xff]
        %v2798 = vld [vmem:[#allocation3 + $0xd8] sm:$0xff]
        %v2799 = vld [vmem:[#allocation3 + $0xe0] sm:$0xff]
        %v2800 = vld [vmem:[#allocation3 + $0xe8] sm:$0xff]
        %v2801 = vld [vmem:[#allocation3 + $0xf0] sm:$0xff]
        %v2802 = vld [vmem:[#allocation3 + $0xf8] sm:$0xff]
        %v2803 = vld [vmem:[#allocation3 + $0x100] sm:$0xff]
        %v2804 = vld [vmem:[#allocation3 + $0x108] sm:$0xff]
        %v2805 = vld [vmem:[#allocation3 + $0x110] sm:$0xff]
        %v2806 = vld [vmem:[#allocation3 + $0x118] sm:$0xff]
        %v2807 = vld [vmem:[#allocation3 + $0x120] sm:$0xff]
        %v2808 = vld [vmem:[#allocation3 + $0x128] sm:$0xff]
        %v2809 = vld [vmem:[#allocation3 + $0x130] sm:$0xff]
        %v2810 = vld [vmem:[#allocation3 + $0x138] sm:$0xff]
        %v2811 = vld [vmem:[#allocation3 + $0x140] sm:$0xff]
        %v2812 = vld [vmem:[#allocation3 + $0x148] sm:$0xff]
        %v2813 = vld [vmem:[#allocation3 + $0x150] sm:$0xff]
        %v2814 = vld [vmem:[#allocation3 + $0x158] sm:$0xff]
        %v2815 = vld [vmem:[#allocation3 + $0x160] sm:$0xff]
        %v2816 = vld [vmem:[#allocation3 + $0x168] sm:$0xff]
        %v2817 = vld [vmem:[#allocation3 + $0x170] sm:$0xff]
        %v2818 = vld [vmem:[#allocation3 + $0x178] sm:$0xff]
        %v2819 = vld [vmem:[#allocation3 + $0x180] sm:$0xff]
        %v2820 = vld [vmem:[#allocation3 + $0x188] sm:$0xff]
        %v2821 = vld [vmem:[#allocation3 + $0x190] sm:$0xff]
        %v2822 = vld [vmem:[#allocation3 + $0x198] sm:$0xff]
        %v2823 = vld [vmem:[#allocation3 + $0x1a0] sm:$0xff]
        %v2824 = vld [vmem:[#allocation3 + $0x1a8] sm:$0xff]
        %v2825 = vld [vmem:[#allocation3 + $0x1b0] sm:$0xff]
        %v2826 = vld [vmem:[#allocation3 + $0x1b8] sm:$0xff]
        %v2827 = vld [vmem:[#allocation3 + $0x1c0] sm:$0xff]
        %v2828 = vld [vmem:[#allocation3 + $0x1c8] sm:$0xff]
        %v2829 = vld [vmem:[#allocation3 + $0x1d0] sm:$0xff]
        %v2830 = vld [vmem:[#allocation3 + $0x1d8] sm:$0xff]
        %v2831 = vld [vmem:[%s5] sm:$0xff]
        %v2832 = vld [vmem:[%s5 + $0x8] sm:$0xff]
        %v2833 = vld [vmem:[%s5 + $0x10] sm:$0xff]
        %v2834 = vld [vmem:[%s5 + $0x18] sm:$0xff]
        %v2835 = vld [vmem:[%s5 + $0x20] sm:$0xff]
        %v2836 = vld [vmem:[%s5 + $0x28] sm:$0xff]
        %v2837 = vld [vmem:[%s5 + $0x30] sm:$0xff]
        %v2838 = vld [vmem:[%s5 + $0x38] sm:$0xff]
        %v2839 = vld [vmem:[%s5 + $0x40] sm:$0xff]
        %v2840 = vld [vmem:[%s5 + $0x48] sm:$0xff]
        %v2841 = vld [vmem:[%s5 + $0x50] sm:$0xff]
        %v2842 = vld [vmem:[%s5 + $0x58] sm:$0xff]
        %v2843 = vld [vmem:[%s5 + $0x60] sm:$0xff]
        %v2844 = vld [vmem:[%s5 + $0x68] sm:$0xff]
        %v2845 = vld [vmem:[%s5 + $0x70] sm:$0xff]
        %v2846 = vld [vmem:[%s5 + $0x78] sm:$0xff]
        %v2847 = vld [vmem:[%s5 + $0x80] sm:$0xff]
        %v2848 = vld [vmem:[%s5 + $0x88] sm:$0xff]
        %v2849 = vld [vmem:[%s5 + $0x90] sm:$0xff]
        %v2850 = vld [vmem:[%s5 + $0x98] sm:$0xff]
        %v2851 = vld [vmem:[%s5 + $0xa0] sm:$0xff]
        %v2852 = vld [vmem:[%s5 + $0xa8] sm:$0xff]
        %v2853 = vld [vmem:[%s5 + $0xb0] sm:$0xff]
        %v2854 = vld [vmem:[%s5 + $0xb8] sm:$0xff]
        %v2855 = vld [vmem:[%s5 + $0xc0] sm:$0xff]
        %v2856 = vld [vmem:[%s5 + $0xc8] sm:$0xff]
        %v2857 = vld [vmem:[%s5 + $0xd0] sm:$0xff]
        %v2858 = vld [vmem:[%s5 + $0xd8] sm:$0xff]
        %v2859 = vld [vmem:[%s5 + $0xe0] sm:$0xff]
        %v2860 = vld [vmem:[%s5 + $0xe8] sm:$0xff]
        %v2861 = vld [vmem:[%s5 + $0xf0] sm:$0xff]
        %v2862 = vld [vmem:[%s5 + $0xf8] sm:$0xff]
        %v2863 = vld [vmem:[%s5 + $0x100] sm:$0xff]
        %v2864 = vld [vmem:[%s5 + $0x108] sm:$0xff]
        %v2865 = vld [vmem:[%s5 + $0x110] sm:$0xff]
        %v2866 = vld [vmem:[%s5 + $0x118] sm:$0xff]
        %v2867 = vld [vmem:[%s5 + $0x120] sm:$0xff]
        %v2868 = vld [vmem:[%s5 + $0x128] sm:$0xff]
        %v2869 = vld [vmem:[%s5 + $0x130] sm:$0xff]
        %v2870 = vld [vmem:[%s5 + $0x138] sm:$0xff]
        %v2871 = vld [vmem:[%s5 + $0x140] sm:$0xff]
        %v2872 = vld [vmem:[%s5 + $0x148] sm:$0xff]
        %v2873 = vld [vmem:[%s5 + $0x150] sm:$0xff]
        %v2874 = vld [vmem:[%s5 + $0x158] sm:$0xff]
        %v2875 = vld [vmem:[%s5 + $0x160] sm:$0xff]
        %v2876 = vld [vmem:[%s5 + $0x168] sm:$0xff]
        %v2877 = vld [vmem:[%s5 + $0x170] sm:$0xff]
        %v2878 = vld [vmem:[%s5 + $0x178] sm:$0xff]
        %v2879 = vld [vmem:[%s5 + $0x180] sm:$0xff]
        %v2880 = vld [vmem:[%s5 + $0x188] sm:$0xff]
        %v2881 = vld [vmem:[%s5 + $0x190] sm:$0xff]
        %v2882 = vld [vmem:[%s5 + $0x198] sm:$0xff]
        %v2883 = vld [vmem:[%s5 + $0x1a0] sm:$0xff]
        %v2884 = vld [vmem:[%s5 + $0x1a8] sm:$0xff]
        %v2885 = vld [vmem:[%s5 + $0x1b0] sm:$0xff]
        %v2886 = vld [vmem:[%s5 + $0x1b8] sm:$0xff]
        %v2887 = vld [vmem:[%s5 + $0x1c0] sm:$0xff]
        %v2888 = vld [vmem:[%s5 + $0x1c8] sm:$0xff]
        %v2889 = vld [vmem:[%s5 + $0x1d0] sm:$0xff]
        %v2890 = vld [vmem:[%s5 + $0x1d8] sm:$0xff]
        %v2891 = vld [vmem:[%s5 + $0x1e0] sm:$0xff]
        %v2892 = vld [vmem:[%s5 + $0x1e8] sm:$0xff]
        %v2893 = vld [vmem:[%s5 + $0x1f0] sm:$0xff]
        %v2894 = vld [vmem:[%s5 + $0x1f8] sm:$0xff]
        %v2895 = vld [vmem:[%s5 + $0x200] sm:$0xff]
        %v2896 = vld [vmem:[%s5 + $0x208] sm:$0xff]
        %v2897 = vld [vmem:[%s5 + $0x210] sm:$0xff]
        %v2898 = vld [vmem:[%s5 + $0x218] sm:$0xff]
        %v2899 = vld [vmem:[%s5 + $0x220] sm:$0xff]
        %v2900 = vld [vmem:[%s5 + $0x228] sm:$0xff]
        %v2901 = vld [vmem:[%s5 + $0x230] sm:$0xff]
        %v2902 = vld [vmem:[%s5 + $0x238] sm:$0xff]
        %v2903 = vld [vmem:[%s5 + $0x240] sm:$0xff]
        %v2904 = vld [vmem:[%s5 + $0x248] sm:$0xff]
        %v2905 = vld [vmem:[%s5 + $0x250] sm:$0xff]
        %v2906 = vld [vmem:[%s5 + $0x258] sm:$0xff]
        %v2907 = vld [vmem:[%s5 + $0x260] sm:$0xff]
        %v2908 = vld [vmem:[%s5 + $0x268] sm:$0xff]
        %v2909 = vld [vmem:[%s5 + $0x270] sm:$0xff]
        %v2910 = vld [vmem:[%s5 + $0x278] sm:$0xff]
        %v2911 = vld [vmem:[%s5 + $0x280] sm:$0xff]
        %v2912 = vld [vmem:[%s5 + $0x288] sm:$0xff]
        %v2913 = vld [vmem:[%s5 + $0x290] sm:$0xff]
        %v2914 = vld [vmem:[%s5 + $0x298] sm:$0xff]
        %v2915 = vld [vmem:[%s5 + $0x2a0] sm:$0xff]
        %v2916 = vld [vmem:[%s5 + $0x2a8] sm:$0xff]
        %v2917 = vld [vmem:[%s5 + $0x2b0] sm:$0xff]
        %v2918 = vld [vmem:[%s5 + $0x2b8] sm:$0xff]
        %v2919 = vld [vmem:[%s5 + $0x2c0] sm:$0xff]
        %v2920 = vld [vmem:[%s5 + $0x2c8] sm:$0xff]
        %v2921 = vld [vmem:[%s5 + $0x2d0] sm:$0xff]
        %v2922 = vld [vmem:[%s5 + $0x2d8] sm:$0xff]
        %v2923 = vld [vmem:[%s5 + $0x2e0] sm:$0xff]
        %v2924 = vld [vmem:[%s5 + $0x2e8] sm:$0xff]
        %v2925 = vld [vmem:[%s5 + $0x2f0] sm:$0xff]
        %v2926 = vld [vmem:[%s5 + $0x2f8] sm:$0xff]
        %v2927 = vld [vmem:[#allocation3 + $0x1e0] sm:$0xff]
        %v2928 = vld [vmem:[#allocation3 + $0x1e8] sm:$0xff]
        %v2929 = vld [vmem:[#allocation3 + $0x1f0] sm:$0xff]
        %v2930 = vld [vmem:[#allocation3 + $0x1f8] sm:$0xff]
        %v2931 = vld [vmem:[#allocation3 + $0x200] sm:$0xff]
        %v2932 = vld [vmem:[#allocation3 + $0x208] sm:$0xff]
        %s2933 = scalar_lea.vmem %s5, 768
        %v2934 = vld [vmem:[%s2933] sm:$0xff]
        %v2935 = vld [vmem:[%s2933 + $0x8] sm:$0xff]
        %v2936 = vld [vmem:[%s2933 + $0x10] sm:$0xff]
        %v2937 = vld [vmem:[%s2933 + $0x18] sm:$0xff]
        %v2938 = vld [vmem:[%s2933 + $0x20] sm:$0xff]
        %v2939 = vld [vmem:[%s2933 + $0x28] sm:$0xff]
        %v2940 = vld [vmem:[%s2933 + $0x30] sm:$0xff]
        %v2941 = vld [vmem:[%s2933 + $0x38] sm:$0xff]
        %v2942 = vld [vmem:[%s2933 + $0x40] sm:$0xff]
        %v2943 = vld [vmem:[%s2933 + $0x48] sm:$0xff]
        %v2944 = vld [vmem:[%s2933 + $0x50] sm:$0xff]
        %v2945 = vld [vmem:[%s2933 + $0x58] sm:$0xff]
        %v2946 = vld [vmem:[%s2933 + $0x60] sm:$0xff]
        %v2947 = vld [vmem:[%s2933 + $0x68] sm:$0xff]
        %v2948 = vld [vmem:[%s2933 + $0x70] sm:$0xff]
        %v2949 = vld [vmem:[%s2933 + $0x78] sm:$0xff]
        %v2950 = vld [vmem:[%s2933 + $0x80] sm:$0xff]
        %v2951 = vld [vmem:[%s2933 + $0x88] sm:$0xff]
        %v2952 = vld [vmem:[%s2933 + $0x90] sm:$0xff]
        %v2953 = vld [vmem:[%s2933 + $0x98] sm:$0xff]
        %v2954 = vld [vmem:[%s2933 + $0xa0] sm:$0xff]
        %v2955 = vld [vmem:[%s2933 + $0xa8] sm:$0xff]
        %v2956 = vld [vmem:[%s2933 + $0xb0] sm:$0xff]
        %v2957 = vld [vmem:[%s2933 + $0xb8] sm:$0xff]
        %v2958 = vld [vmem:[%s2933 + $0xc0] sm:$0xff]
        %v2959 = vld [vmem:[%s2933 + $0xc8] sm:$0xff]
        %v2960 = vld [vmem:[%s2933 + $0xd0] sm:$0xff]
        %v2961 = vld [vmem:[%s2933 + $0xd8] sm:$0xff]
        %v2962 = vld [vmem:[%s2933 + $0xe0] sm:$0xff]
        %v2963 = vld [vmem:[%s2933 + $0xe8] sm:$0xff]
        %v2964 = vld [vmem:[%s2933 + $0xf0] sm:$0xff]
        %v2965 = vld [vmem:[%s2933 + $0xf8] sm:$0xff]
        %v2966 = vld [vmem:[%s2933 + $0x100] sm:$0xff]
        %v2967 = vld [vmem:[%s2933 + $0x108] sm:$0xff]
        %v2968 = vld [vmem:[%s2933 + $0x110] sm:$0xff]
        %v2969 = vld [vmem:[%s2933 + $0x118] sm:$0xff]
        %v2970 = vld [vmem:[%s2933 + $0x120] sm:$0xff]
        %v2971 = vld [vmem:[%s2933 + $0x128] sm:$0xff]
        %v2972 = vld [vmem:[%s2933 + $0x130] sm:$0xff]
        %v2973 = vld [vmem:[%s2933 + $0x138] sm:$0xff]
        %v2974 = vld [vmem:[%s2933 + $0x140] sm:$0xff]
        %v2975 = vld [vmem:[%s2933 + $0x148] sm:$0xff]
        %v2976 = vld [vmem:[%s2933 + $0x150] sm:$0xff]
        %v2977 = vld [vmem:[%s2933 + $0x158] sm:$0xff]
        %v2978 = vld [vmem:[%s2933 + $0x160] sm:$0xff]
        %v2979 = vld [vmem:[%s2933 + $0x168] sm:$0xff]
        %v2980 = vld [vmem:[%s2933 + $0x170] sm:$0xff]
        %v2981 = vld [vmem:[%s2933 + $0x178] sm:$0xff]
        %v2982 = vld [vmem:[%s2933 + $0x180] sm:$0xff]
        %v2983 = vld [vmem:[%s2933 + $0x188] sm:$0xff]
        %v2984 = vld [vmem:[%s2933 + $0x190] sm:$0xff]
        %v2985 = vld [vmem:[%s2933 + $0x198] sm:$0xff]
        %v2986 = vld [vmem:[%s2933 + $0x1a0] sm:$0xff]
        %v2987 = vld [vmem:[%s2933 + $0x1a8] sm:$0xff]
        %v2988 = vld [vmem:[%s2933 + $0x1b0] sm:$0xff]
        %v2989 = vld [vmem:[%s2933 + $0x1b8] sm:$0xff]
        %v2990 = vld [vmem:[%s2933 + $0x1c0] sm:$0xff]
        %v2991 = vld [vmem:[%s2933 + $0x1c8] sm:$0xff]
        %v2992 = vld [vmem:[%s2933 + $0x1d0] sm:$0xff]
        %v2993 = vld [vmem:[%s2933 + $0x1d8] sm:$0xff]
        %v2994 = vld [vmem:[%s2933 + $0x1e0] sm:$0xff]
        %v2995 = vld [vmem:[%s2933 + $0x1e8] sm:$0xff]
        %v2996 = vld [vmem:[%s2933 + $0x1f0] sm:$0xff]
        %v2997 = vld [vmem:[%s2933 + $0x1f8] sm:$0xff]
        %v2998 = vld [vmem:[%s2933 + $0x200] sm:$0xff]
        %v2999 = vld [vmem:[%s2933 + $0x208] sm:$0xff]
        %v3000 = vld [vmem:[%s2933 + $0x210] sm:$0xff]
        %v3001 = vld [vmem:[%s2933 + $0x218] sm:$0xff]
        %v3002 = vld [vmem:[%s2933 + $0x220] sm:$0xff]
        %v3003 = vld [vmem:[%s2933 + $0x228] sm:$0xff]
        %v3004 = vld [vmem:[%s2933 + $0x230] sm:$0xff]
        %v3005 = vld [vmem:[%s2933 + $0x238] sm:$0xff]
        %v3006 = vld [vmem:[%s2933 + $0x240] sm:$0xff]
        %v3007 = vld [vmem:[%s2933 + $0x248] sm:$0xff]
        %v3008 = vld [vmem:[%s2933 + $0x250] sm:$0xff]
        %v3009 = vld [vmem:[%s2933 + $0x258] sm:$0xff]
        %v3010 = vld [vmem:[%s2933 + $0x260] sm:$0xff]
        %v3011 = vld [vmem:[%s2933 + $0x268] sm:$0xff]
        %v3012 = vld [vmem:[%s2933 + $0x270] sm:$0xff]
        %v3013 = vld [vmem:[%s2933 + $0x278] sm:$0xff]
        %v3014 = vld [vmem:[%s2933 + $0x280] sm:$0xff]
        %v3015 = vld [vmem:[%s2933 + $0x288] sm:$0xff]
        %v3016 = vld [vmem:[%s2933 + $0x290] sm:$0xff]
        %v3017 = vld [vmem:[%s2933 + $0x298] sm:$0xff]
        %v3018 = vld [vmem:[%s2933 + $0x2a0] sm:$0xff]
        %v3019 = vld [vmem:[%s2933 + $0x2a8] sm:$0xff]
        %v3020 = vld [vmem:[%s2933 + $0x2b0] sm:$0xff]
        %v3021 = vld [vmem:[%s2933 + $0x2b8] sm:$0xff]
        %v3022 = vld [vmem:[%s2933 + $0x2c0] sm:$0xff]
        %v3023 = vld [vmem:[%s2933 + $0x2c8] sm:$0xff]
        %v3024 = vld [vmem:[%s2933 + $0x2d0] sm:$0xff]
        %v3025 = vld [vmem:[%s2933 + $0x2d8] sm:$0xff]
        %v3026 = vld [vmem:[%s2933 + $0x2e0] sm:$0xff]
        %v3027 = vld [vmem:[%s2933 + $0x2e8] sm:$0xff]
        %v3028 = vld [vmem:[%s2933 + $0x2f0] sm:$0xff]
        %v3029 = vld [vmem:[%s2933 + $0x2f8] sm:$0xff]
        %3030 = vmatprep.subr.mxu0 %v2965
        %3031 = vmatpush1.msra.mxu0 %v2964
        %3032 = vmatprep.subr.mxu0 %v2963
        %3033 = vmatpush1.msra.mxu0 %v2962
        %3034 = vmatprep.subr.mxu0 %v2961
        %3035 = vmatpush1.msra.mxu0 %v2960
        %3036 = vmatprep.subr.mxu0 %v2959
        %3037 = vmatpush1.msra.mxu0 %v2958
        %3038 = vmatprep.subr.mxu0 %v2957
        %3039 = vmatpush1.msra.mxu0 %v2956
        %3040 = vmatprep.subr.mxu0 %v2955
        %3041 = vmatpush1.msra.mxu0 %v2954
        %3042 = vmatprep.subr.mxu0 %v2953
        %3043 = vmatpush1.msra.mxu0 %v2952
        %3044 = vmatprep.subr.mxu0 %v2951
        %3045 = vmatpush1.msra.mxu0 %v2950
        %3046 = vmatprep.subr.mxu0 %v2949
        %3047 = vmatpush1.msra.mxu0 %v2948
        %3048 = vmatprep.subr.mxu0 %v2947
        %3049 = vmatpush1.msra.mxu0 %v2946
        %3050 = vmatprep.subr.mxu0 %v2945
        %3051 = vmatpush1.msra.mxu0 %v2944
        %3052 = vmatprep.subr.mxu0 %v2943
        %3053 = vmatpush1.msra.mxu0 %v2942
        %3054 = vmatprep.subr.mxu0 %v2941
        %3055 = vmatpush1.msra.mxu0 %v2940
        %3056 = vmatprep.subr.mxu0 %v2939
        %3057 = vmatpush1.msra.mxu0 %v2938
        %3058 = vmatprep.subr.mxu0 %v2937
        %3059 = vmatpush1.msra.mxu0 %v2936
        %3060 = vmatprep.subr.mxu0 %v2935
        %3061 = vmatpush1.msra.mxu0 %v2934
        %3062 = vmatprep.subr.mxu0 %v2997
        %3063 = vmatpush2.msra.mxu0 %v2996
        %3064 = vmatprep.subr.mxu0 %v2995
        %3065 = vmatpush2.msra.mxu0 %v2994
        %3066 = vmatprep.subr.mxu0 %v2993
        %3067 = vmatpush2.msra.mxu0 %v2992
        %3068 = vmatprep.subr.mxu0 %v2991
        %3069 = vmatpush2.msra.mxu0 %v2990
        %3070 = vmatprep.subr.mxu0 %v2989
        %3071 = vmatpush2.msra.mxu0 %v2988
        %3072 = vmatprep.subr.mxu0 %v2987
        %3073 = vmatpush2.msra.mxu0 %v2986
        %3074 = vmatprep.subr.mxu0 %v2985
        %3075 = vmatpush2.msra.mxu0 %v2984
        %3076 = vmatprep.subr.mxu0 %v2983
        %3077 = vmatpush2.msra.mxu0 %v2982
        %3078 = vmatprep.subr.mxu0 %v2981
        %3079 = vmatpush2.msra.mxu0 %v2980
        %3080 = vmatprep.subr.mxu0 %v2979
        %3081 = vmatpush2.msra.mxu0 %v2978
        %3082 = vmatprep.subr.mxu0 %v2977
        %3083 = vmatpush2.msra.mxu0 %v2976
        %3084 = vmatprep.subr.mxu0 %v2975
        %3085 = vmatpush2.msra.mxu0 %v2974
        %3086 = vmatprep.subr.mxu0 %v2973
        %3087 = vmatpush2.msra.mxu0 %v2972
        %3088 = vmatprep.subr.mxu0 %v2971
        %3089 = vmatpush2.msra.mxu0 %v2970
        %3090 = vmatprep.subr.mxu0 %v2969
        %3091 = vmatpush2.msra.mxu0 %v2968
        %3092 = vmatprep.subr.mxu0 %v2967
        %3093 = vmatpush2.msra.mxu0 %v2966
        %3094 = vmatprep.mubr.f32.mxu0 %v2778
        %3095 = vmatmul.mubr.f32.gmra.mxu0 %v2777
        %v3096 = vpop.f32.mrf.mxu0
        %v3097 = vadd.f32 0.0, %v3096
        %v3098 = vpop.f32.mrf.mxu0
        %v3099 = vadd.f32 0.0, %v3098
        %3100 = vmatprep.mubr.f32.mxu0 %v2781
        %3101 = vmatmul.mubr.f32.gmra.mxu0 %v2780
        %v3102 = vpop.f32.mrf.mxu0
        %v3103 = vadd.f32 0.0, %v3102
        %v3104 = vpop.f32.mrf.mxu0
        %v3105 = vadd.f32 0.0, %v3104
        %3106 = vmatprep.mubr.f32.mxu0 %v2784
        %3107 = vmatmul.mubr.f32.gmra.mxu0 %v2783
        %v3108 = vpop.f32.mrf.mxu0
        %v3109 = vadd.f32 0.0, %v3108
        %v3110 = vpop.f32.mrf.mxu0
        %v3111 = vadd.f32 0.0, %v3110
        %3112 = vmatprep.mubr.f32.mxu0 %v2787
        %3113 = vmatmul.mubr.f32.gmra.mxu0 %v2786
        %v3114 = vpop.f32.mrf.mxu0
        %v3115 = vadd.f32 0.0, %v3114
        %v3116 = vpop.f32.mrf.mxu0
        %v3117 = vadd.f32 0.0, %v3116
        %3118 = vmatprep.mubr.f32.mxu0 %v2790
        %3119 = vmatmul.mubr.f32.gmra.mxu0 %v2789
        %v3120 = vpop.f32.mrf.mxu0
        %v3121 = vadd.f32 0.0, %v3120
        %v3122 = vpop.f32.mrf.mxu0
        %v3123 = vadd.f32 0.0, %v3122
        %3124 = vmatprep.mubr.f32.mxu0 %v2793
        %3125 = vmatmul.mubr.f32.gmra.mxu0 %v2792
        %v3126 = vpop.f32.mrf.mxu0
        %v3127 = vadd.f32 0.0, %v3126
        %v3128 = vpop.f32.mrf.mxu0
        %v3129 = vadd.f32 0.0, %v3128
        %3130 = vmatprep.mubr.f32.mxu0 %v2796
        %3131 = vmatmul.mubr.f32.gmra.mxu0 %v2795
        %v3132 = vpop.f32.mrf.mxu0
        %v3133 = vadd.f32 0.0, %v3132
        %v3134 = vpop.f32.mrf.mxu0
        %v3135 = vadd.f32 0.0, %v3134
        %3136 = vmatprep.mubr.f32.mxu0 %v2799
        %3137 = vmatmul.mubr.f32.gmra.mxu0 %v2798
        %v3138 = vpop.f32.mrf.mxu0
        %v3139 = vadd.f32 0.0, %v3138
        %v3140 = vpop.f32.mrf.mxu0
        %v3141 = vadd.f32 0.0, %v3140
        %3142 = vmatprep.mubr.f32.mxu0 %v2802
        %3143 = vmatmul.mubr.f32.gmra.mxu0 %v2801
        %v3144 = vpop.f32.mrf.mxu0
        %v3145 = vadd.f32 0.0, %v3144
        %v3146 = vpop.f32.mrf.mxu0
        %v3147 = vadd.f32 0.0, %v3146
        %3148 = vmatprep.mubr.f32.mxu0 %v2805
        %3149 = vmatmul.mubr.f32.gmra.mxu0 %v2804
        %v3150 = vpop.f32.mrf.mxu0
        %v3151 = vadd.f32 0.0, %v3150
        %v3152 = vpop.f32.mrf.mxu0
        %v3153 = vadd.f32 0.0, %v3152
        %3154 = vmatprep.mubr.f32.mxu0 %v2808
        %3155 = vmatmul.mubr.f32.gmra.mxu0 %v2807
        %v3156 = vpop.f32.mrf.mxu0
        %v3157 = vadd.f32 0.0, %v3156
        %v3158 = vpop.f32.mrf.mxu0
        %v3159 = vadd.f32 0.0, %v3158
        %3160 = vmatprep.mubr.f32.mxu0 %v2811
        %3161 = vmatmul.mubr.f32.gmra.mxu0 %v2810
        %v3162 = vpop.f32.mrf.mxu0
        %v3163 = vadd.f32 0.0, %v3162
        %v3164 = vpop.f32.mrf.mxu0
        %v3165 = vadd.f32 0.0, %v3164
        %3166 = vmatprep.mubr.f32.mxu0 %v2814
        %3167 = vmatmul.mubr.f32.gmra.mxu0 %v2813
        %v3168 = vpop.f32.mrf.mxu0
        %v3169 = vadd.f32 0.0, %v3168
        %v3170 = vpop.f32.mrf.mxu0
        %v3171 = vadd.f32 0.0, %v3170
        %3172 = vmatprep.mubr.f32.mxu0 %v2817
        %3173 = vmatmul.mubr.f32.gmra.mxu0 %v2816
        %v3174 = vpop.f32.mrf.mxu0
        %v3175 = vadd.f32 0.0, %v3174
        %v3176 = vpop.f32.mrf.mxu0
        %v3177 = vadd.f32 0.0, %v3176
        %3178 = vmatprep.mubr.f32.mxu0 %v2820
        %3179 = vmatmul.mubr.f32.gmra.mxu0 %v2819
        %v3180 = vpop.f32.mrf.mxu0
        %v3181 = vadd.f32 0.0, %v3180
        %v3182 = vpop.f32.mrf.mxu0
        %v3183 = vadd.f32 0.0, %v3182
        %3184 = vmatprep.mubr.f32.mxu0 %v2823
        %3185 = vmatmul.mubr.f32.gmra.mxu0 %v2822
        %v3186 = vpop.f32.mrf.mxu0
        %v3187 = vadd.f32 0.0, %v3186
        %v3188 = vpop.f32.mrf.mxu0
        %v3189 = vadd.f32 0.0, %v3188
        %3190 = vmatprep.mubr.f32.mxu0 %v2826
        %3191 = vmatmul.mubr.f32.gmra.mxu0 %v2825
        %v3192 = vpop.f32.mrf.mxu0
        %v3193 = vadd.f32 0.0, %v3192
        %v3194 = vpop.f32.mrf.mxu0
        %v3195 = vadd.f32 0.0, %v3194
        %3196 = vmatprep.mubr.f32.mxu0 %v2829
        %3197 = vmatmul.mubr.f32.gmra.mxu0 %v2828
        %v3198 = vpop.f32.mrf.mxu0
        %v3199 = vadd.f32 0.0, %v3198
        %v3200 = vpop.f32.mrf.mxu0
        %v3201 = vadd.f32 0.0, %v3200
        %3202 = vmatprep.mubr.f32.mxu0 %v2928
        %3203 = vmatmul.mubr.f32.gmra.mxu0 %v2927
        %v3204 = vpop.f32.mrf.mxu0
        %v3205 = vadd.f32 0.0, %v3204
        %v3206 = vpop.f32.mrf.mxu0
        %v3207 = vadd.f32 0.0, %v3206
        %3208 = vmatprep.mubr.f32.mxu0 %v2931
        %3209 = vmatmul.mubr.f32.gmra.mxu0 %v2930
        %v3210 = vpop.f32.mrf.mxu0
        %v3211 = vadd.f32 0.0, %v3210
        %v3212 = vpop.f32.mrf.mxu0
        %v3213 = vadd.f32 0.0, %v3212
        %3214 = vdwg.mxu0
        %3215 = vmatprep.subr.mxu0 %v3029
        %3216 = vmatpush1.msra.mxu0 %v3028
        %3217 = vmatprep.subr.mxu0 %v3027
        %3218 = vmatpush1.msra.mxu0 %v3026
        %3219 = vmatprep.subr.mxu0 %v3025
        %3220 = vmatpush1.msra.mxu0 %v3024
        %3221 = vmatprep.subr.mxu0 %v3023
        %3222 = vmatpush1.msra.mxu0 %v3022
        %3223 = vmatprep.subr.mxu0 %v3021
        %3224 = vmatpush1.msra.mxu0 %v3020
        %3225 = vmatprep.subr.mxu0 %v3019
        %3226 = vmatpush1.msra.mxu0 %v3018
        %3227 = vmatprep.subr.mxu0 %v3017
        %3228 = vmatpush1.msra.mxu0 %v3016
        %3229 = vmatprep.subr.mxu0 %v3015
        %3230 = vmatpush1.msra.mxu0 %v3014
        %3231 = vmatprep.subr.mxu0 %v3013
        %3232 = vmatpush1.msra.mxu0 %v3012
        %3233 = vmatprep.subr.mxu0 %v3011
        %3234 = vmatpush1.msra.mxu0 %v3010
        %3235 = vmatprep.subr.mxu0 %v3009
        %3236 = vmatpush1.msra.mxu0 %v3008
        %3237 = vmatprep.subr.mxu0 %v3007
        %3238 = vmatpush1.msra.mxu0 %v3006
        %3239 = vmatprep.subr.mxu0 %v3005
        %3240 = vmatpush1.msra.mxu0 %v3004
        %3241 = vmatprep.subr.mxu0 %v3003
        %3242 = vmatpush1.msra.mxu0 %v3002
        %3243 = vmatprep.subr.mxu0 %v3001
        %3244 = vmatpush1.msra.mxu0 %v3000
        %3245 = vmatprep.subr.mxu0 %v2999
        %3246 = vmatpush1.msra.mxu0 %v2998
        %3247 = vmatprep.subr.mxu0 0.0
        %3248 = vmatpush2.msra.mxu0 0.0
        %3249 = vmatprep.subr.mxu0 0.0
        %3250 = vmatpush2.msra.mxu0 0.0
        %3251 = vmatprep.subr.mxu0 0.0
        %3252 = vmatpush2.msra.mxu0 0.0
        %3253 = vmatprep.subr.mxu0 0.0
        %3254 = vmatpush2.msra.mxu0 0.0
        %3255 = vmatprep.subr.mxu0 0.0
        %3256 = vmatpush2.msra.mxu0 0.0
        %3257 = vmatprep.subr.mxu0 0.0
        %3258 = vmatpush2.msra.mxu0 0.0
        %3259 = vmatprep.subr.mxu0 0.0
        %3260 = vmatpush2.msra.mxu0 0.0
        %3261 = vmatprep.subr.mxu0 0.0
        %3262 = vmatpush2.msra.mxu0 0.0
        %3263 = vmatprep.subr.mxu0 0.0
        %3264 = vmatpush2.msra.mxu0 0.0
        %3265 = vmatprep.subr.mxu0 0.0
        %3266 = vmatpush2.msra.mxu0 0.0
        %3267 = vmatprep.subr.mxu0 0.0
        %3268 = vmatpush2.msra.mxu0 0.0
        %3269 = vmatprep.subr.mxu0 0.0
        %3270 = vmatpush2.msra.mxu0 0.0
        %3271 = vmatprep.subr.mxu0 0.0
        %3272 = vmatpush2.msra.mxu0 0.0
        %3273 = vmatprep.subr.mxu0 0.0
        %3274 = vmatpush2.msra.mxu0 0.0
        %3275 = vmatprep.subr.mxu0 0.0
        %3276 = vmatpush2.msra.mxu0 0.0
        %3277 = vmatprep.subr.mxu0 0.0
        %3278 = vmatpush2.msra.mxu0 0.0
        %3279 = vmatprep.mubr.f32.mxu0 0.0
        %3280 = vmatmul.mubr.f32.gmra.mxu0 %v2779
        %v3281 = vpop.f32.mrf.mxu0
        %v3282 = vadd.f32 %v3097, %v3281
        %v3283 = vpop.f32.mrf.mxu0
        %v3284 = vadd.f32 %v3099, %v3283
        %3285 = vmatprep.mubr.f32.mxu0 0.0
        %3286 = vmatmul.mubr.f32.gmra.mxu0 %v2782
        %v3287 = vpop.f32.mrf.mxu0
        %v3288 = vadd.f32 %v3103, %v3287
        %v3289 = vpop.f32.mrf.mxu0
        %v3290 = vadd.f32 %v3105, %v3289
        %3291 = vmatprep.mubr.f32.mxu0 0.0
        %3292 = vmatmul.mubr.f32.gmra.mxu0 %v2785
        %v3293 = vpop.f32.mrf.mxu0
        %v3294 = vadd.f32 %v3109, %v3293
        %v3295 = vpop.f32.mrf.mxu0
        %v3296 = vadd.f32 %v3111, %v3295
        %3297 = vmatprep.mubr.f32.mxu0 0.0
        %3298 = vmatmul.mubr.f32.gmra.mxu0 %v2788
        %v3299 = vpop.f32.mrf.mxu0
        %v3300 = vadd.f32 %v3115, %v3299
        %v3301 = vpop.f32.mrf.mxu0
        %v3302 = vadd.f32 %v3117, %v3301
        %3303 = vmatprep.mubr.f32.mxu0 0.0
        %3304 = vmatmul.mubr.f32.gmra.mxu0 %v2791
        %v3305 = vpop.f32.mrf.mxu0
        %v3306 = vadd.f32 %v3121, %v3305
        %v3307 = vpop.f32.mrf.mxu0
        %v3308 = vadd.f32 %v3123, %v3307
        %3309 = vmatprep.mubr.f32.mxu0 0.0
        %3310 = vmatmul.mubr.f32.gmra.mxu0 %v2794
        %v3311 = vpop.f32.mrf.mxu0
        %v3312 = vadd.f32 %v3127, %v3311
        %v3313 = vpop.f32.mrf.mxu0
        %v3314 = vadd.f32 %v3129, %v3313
        %3315 = vmatprep.mubr.f32.mxu0 0.0
        %3316 = vmatmul.mubr.f32.gmra.mxu0 %v2797
        %v3317 = vpop.f32.mrf.mxu0
        %v3318 = vadd.f32 %v3133, %v3317
        %v3319 = vpop.f32.mrf.mxu0
        %v3320 = vadd.f32 %v3135, %v3319
        %3321 = vmatprep.mubr.f32.mxu0 0.0
        %3322 = vmatmul.mubr.f32.gmra.mxu0 %v2800
        %v3323 = vpop.f32.mrf.mxu0
        %v3324 = vadd.f32 %v3139, %v3323
        %v3325 = vpop.f32.mrf.mxu0
        %v3326 = vadd.f32 %v3141, %v3325
        %3327 = vmatprep.mubr.f32.mxu0 0.0
        %3328 = vmatmul.mubr.f32.gmra.mxu0 %v2803
        %v3329 = vpop.f32.mrf.mxu0
        %v3330 = vadd.f32 %v3145, %v3329
        %v3331 = vpop.f32.mrf.mxu0
        %v3332 = vadd.f32 %v3147, %v3331
        %3333 = vmatprep.mubr.f32.mxu0 0.0
        %3334 = vmatmul.mubr.f32.gmra.mxu0 %v2806
        %v3335 = vpop.f32.mrf.mxu0
        %v3336 = vadd.f32 %v3151, %v3335
        %v3337 = vpop.f32.mrf.mxu0
        %v3338 = vadd.f32 %v3153, %v3337
        %3339 = vmatprep.mubr.f32.mxu0 0.0
        %3340 = vmatmul.mubr.f32.gmra.mxu0 %v2809
        %v3341 = vpop.f32.mrf.mxu0
        %v3342 = vadd.f32 %v3157, %v3341
        %v3343 = vpop.f32.mrf.mxu0
        %v3344 = vadd.f32 %v3159, %v3343
        %3345 = vmatprep.mubr.f32.mxu0 0.0
        %3346 = vmatmul.mubr.f32.gmra.mxu0 %v2812
        %v3347 = vpop.f32.mrf.mxu0
        %v3348 = vadd.f32 %v3163, %v3347
        %v3349 = vpop.f32.mrf.mxu0
        %v3350 = vadd.f32 %v3165, %v3349
        %3351 = vmatprep.mubr.f32.mxu0 0.0
        %3352 = vmatmul.mubr.f32.gmra.mxu0 %v2815
        %v3353 = vpop.f32.mrf.mxu0
        %v3354 = vadd.f32 %v3169, %v3353
        %v3355 = vpop.f32.mrf.mxu0
        %v3356 = vadd.f32 %v3171, %v3355
        %3357 = vmatprep.mubr.f32.mxu0 0.0
        %3358 = vmatmul.mubr.f32.gmra.mxu0 %v2818
        %v3359 = vpop.f32.mrf.mxu0
        %v3360 = vadd.f32 %v3175, %v3359
        %v3361 = vpop.f32.mrf.mxu0
        %v3362 = vadd.f32 %v3177, %v3361
        %3363 = vmatprep.mubr.f32.mxu0 0.0
        %3364 = vmatmul.mubr.f32.gmra.mxu0 %v2821
        %v3365 = vpop.f32.mrf.mxu0
        %v3366 = vadd.f32 %v3181, %v3365
        %v3367 = vpop.f32.mrf.mxu0
        %v3368 = vadd.f32 %v3183, %v3367
        %3369 = vmatprep.mubr.f32.mxu0 0.0
        %3370 = vmatmul.mubr.f32.gmra.mxu0 %v2824
        %v3371 = vpop.f32.mrf.mxu0
        %v3372 = vadd.f32 %v3187, %v3371
        %v3373 = vpop.f32.mrf.mxu0
        %v3374 = vadd.f32 %v3189, %v3373
        %3375 = vmatprep.mubr.f32.mxu0 0.0
        %3376 = vmatmul.mubr.f32.gmra.mxu0 %v2827
        %v3377 = vpop.f32.mrf.mxu0
        %v3378 = vadd.f32 %v3193, %v3377
        %v3379 = vpop.f32.mrf.mxu0
        %v3380 = vadd.f32 %v3195, %v3379
        %3381 = vmatprep.mubr.f32.mxu0 0.0
        %3382 = vmatmul.mubr.f32.gmra.mxu0 %v2830
        %v3383 = vpop.f32.mrf.mxu0
        %v3384 = vadd.f32 %v3199, %v3383
        %v3385 = vpop.f32.mrf.mxu0
        %v3386 = vadd.f32 %v3201, %v3385
        %3387 = vmatprep.mubr.f32.mxu0 0.0
        %3388 = vmatmul.mubr.f32.gmra.mxu0 %v2929
        %v3389 = vpop.f32.mrf.mxu0
        %v3390 = vadd.f32 %v3205, %v3389
        %v3391 = vpop.f32.mrf.mxu0
        %v3392 = vadd.f32 %v3207, %v3391
        %3393 = vmatprep.mubr.f32.mxu0 0.0
        %3394 = vmatmul.mubr.f32.gmra.mxu0 %v2932
        %v3395 = vpop.f32.mrf.mxu0
        %v3396 = vadd.f32 %v3211, %v3395
        %v3397 = vpop.f32.mrf.mxu0
        %v3398 = vadd.f32 %v3213, %v3397
        %3399 = vdwg.mxu0
        %3400 = vmatprep.subr.mxu0 %v2862
        %3401 = vmatpush1.msra.mxu0 %v2861
        %3402 = vmatprep.subr.mxu0 %v2860
        %3403 = vmatpush1.msra.mxu0 %v2859
        %3404 = vmatprep.subr.mxu0 %v2858
        %3405 = vmatpush1.msra.mxu0 %v2857
        %3406 = vmatprep.subr.mxu0 %v2856
        %3407 = vmatpush1.msra.mxu0 %v2855
        %3408 = vmatprep.subr.mxu0 %v2854
        %3409 = vmatpush1.msra.mxu0 %v2853
        %3410 = vmatprep.subr.mxu0 %v2852
        %3411 = vmatpush1.msra.mxu0 %v2851
        %3412 = vmatprep.subr.mxu0 %v2850
        %3413 = vmatpush1.msra.mxu0 %v2849
        %3414 = vmatprep.subr.mxu0 %v2848
        %3415 = vmatpush1.msra.mxu0 %v2847
        %3416 = vmatprep.subr.mxu0 %v2846
        %3417 = vmatpush1.msra.mxu0 %v2845
        %3418 = vmatprep.subr.mxu0 %v2844
        %3419 = vmatpush1.msra.mxu0 %v2843
        %3420 = vmatprep.subr.mxu0 %v2842
        %3421 = vmatpush1.msra.mxu0 %v2841
        %3422 = vmatprep.subr.mxu0 %v2840
        %3423 = vmatpush1.msra.mxu0 %v2839
        %3424 = vmatprep.subr.mxu0 %v2838
        %3425 = vmatpush1.msra.mxu0 %v2837
        %3426 = vmatprep.subr.mxu0 %v2836
        %3427 = vmatpush1.msra.mxu0 %v2835
        %3428 = vmatprep.subr.mxu0 %v2834
        %3429 = vmatpush1.msra.mxu0 %v2833
        %3430 = vmatprep.subr.mxu0 %v2832
        %3431 = vmatpush1.msra.mxu0 %v2831
        %3432 = vmatprep.subr.mxu0 %v2894
        %3433 = vmatpush2.msra.mxu0 %v2893
        %3434 = vmatprep.subr.mxu0 %v2892
        %3435 = vmatpush2.msra.mxu0 %v2891
        %3436 = vmatprep.subr.mxu0 %v2890
        %3437 = vmatpush2.msra.mxu0 %v2889
        %3438 = vmatprep.subr.mxu0 %v2888
        %3439 = vmatpush2.msra.mxu0 %v2887
        %3440 = vmatprep.subr.mxu0 %v2886
        %3441 = vmatpush2.msra.mxu0 %v2885
        %3442 = vmatprep.subr.mxu0 %v2884
        %3443 = vmatpush2.msra.mxu0 %v2883
        %3444 = vmatprep.subr.mxu0 %v2882
        %3445 = vmatpush2.msra.mxu0 %v2881
        %3446 = vmatprep.subr.mxu0 %v2880
        %3447 = vmatpush2.msra.mxu0 %v2879
        %3448 = vmatprep.subr.mxu0 %v2878
        %3449 = vmatpush2.msra.mxu0 %v2877
        %3450 = vmatprep.subr.mxu0 %v2876
        %3451 = vmatpush2.msra.mxu0 %v2875
        %3452 = vmatprep.subr.mxu0 %v2874
        %3453 = vmatpush2.msra.mxu0 %v2873
        %3454 = vmatprep.subr.mxu0 %v2872
        %3455 = vmatpush2.msra.mxu0 %v2871
        %3456 = vmatprep.subr.mxu0 %v2870
        %3457 = vmatpush2.msra.mxu0 %v2869
        %3458 = vmatprep.subr.mxu0 %v2868
        %3459 = vmatpush2.msra.mxu0 %v2867
        %3460 = vmatprep.subr.mxu0 %v2866
        %3461 = vmatpush2.msra.mxu0 %v2865
        %3462 = vmatprep.subr.mxu0 %v2864
        %3463 = vmatpush2.msra.mxu0 %v2863
        %3464 = vmatprep.mubr.f32.mxu0 %v2772
        %3465 = vmatmul.mubr.f32.gmra.mxu0 %v2771
        %v3466 = vpop.f32.mrf.mxu0
        %v3467 = vadd.f32 %v3282, %v3466
        %v3468 = vpop.f32.mrf.mxu0
        %v3469 = vadd.f32 %v3284, %v3468
        %3470 = vmatprep.mubr.f32.mxu0 %v2775
        %3471 = vmatmul.mubr.f32.gmra.mxu0 %v2774
        %v3472 = vpop.f32.mrf.mxu0
        %v3473 = vadd.f32 %v3288, %v3472
        %v3474 = vpop.f32.mrf.mxu0
        %v3475 = vadd.f32 %v3290, %v3474
        %3476 = vmatprep.mubr.f32.mxu0 %v2778
        %3477 = vmatmul.mubr.f32.gmra.mxu0 %v2777
        %v3478 = vpop.f32.mrf.mxu0
        %v3479 = vadd.f32 %v3294, %v3478
        %v3480 = vpop.f32.mrf.mxu0
        %v3481 = vadd.f32 %v3296, %v3480
        %3482 = vmatprep.mubr.f32.mxu0 %v2781
        %3483 = vmatmul.mubr.f32.gmra.mxu0 %v2780
        %v3484 = vpop.f32.mrf.mxu0
        %v3485 = vadd.f32 %v3300, %v3484
        %v3486 = vpop.f32.mrf.mxu0
        %v3487 = vadd.f32 %v3302, %v3486
        %3488 = vmatprep.mubr.f32.mxu0 %v2784
        %3489 = vmatmul.mubr.f32.gmra.mxu0 %v2783
        %v3490 = vpop.f32.mrf.mxu0
        %v3491 = vadd.f32 %v3306, %v3490
        %v3492 = vpop.f32.mrf.mxu0
        %v3493 = vadd.f32 %v3308, %v3492
        %3494 = vmatprep.mubr.f32.mxu0 %v2787
        %3495 = vmatmul.mubr.f32.gmra.mxu0 %v2786
        %v3496 = vpop.f32.mrf.mxu0
        %v3497 = vadd.f32 %v3312, %v3496
        %v3498 = vpop.f32.mrf.mxu0
        %v3499 = vadd.f32 %v3314, %v3498
        %3500 = vmatprep.mubr.f32.mxu0 %v2790
        %3501 = vmatmul.mubr.f32.gmra.mxu0 %v2789
        %v3502 = vpop.f32.mrf.mxu0
        %v3503 = vadd.f32 %v3318, %v3502
        %v3504 = vpop.f32.mrf.mxu0
        %v3505 = vadd.f32 %v3320, %v3504
        %3506 = vmatprep.mubr.f32.mxu0 %v2793
        %3507 = vmatmul.mubr.f32.gmra.mxu0 %v2792
        %v3508 = vpop.f32.mrf.mxu0
        %v3509 = vadd.f32 %v3324, %v3508
        %v3510 = vpop.f32.mrf.mxu0
        %v3511 = vadd.f32 %v3326, %v3510
        %3512 = vmatprep.mubr.f32.mxu0 %v2796
        %3513 = vmatmul.mubr.f32.gmra.mxu0 %v2795
        %v3514 = vpop.f32.mrf.mxu0
        %v3515 = vadd.f32 %v3330, %v3514
        %v3516 = vpop.f32.mrf.mxu0
        %v3517 = vadd.f32 %v3332, %v3516
        %3518 = vmatprep.mubr.f32.mxu0 %v2799
        %3519 = vmatmul.mubr.f32.gmra.mxu0 %v2798
        %v3520 = vpop.f32.mrf.mxu0
        %v3521 = vadd.f32 %v3336, %v3520
        %v3522 = vpop.f32.mrf.mxu0
        %v3523 = vadd.f32 %v3338, %v3522
        %3524 = vmatprep.mubr.f32.mxu0 %v2802
        %3525 = vmatmul.mubr.f32.gmra.mxu0 %v2801
        %v3526 = vpop.f32.mrf.mxu0
        %v3527 = vadd.f32 %v3342, %v3526
        %v3528 = vpop.f32.mrf.mxu0
        %v3529 = vadd.f32 %v3344, %v3528
        %3530 = vmatprep.mubr.f32.mxu0 %v2805
        %3531 = vmatmul.mubr.f32.gmra.mxu0 %v2804
        %v3532 = vpop.f32.mrf.mxu0
        %v3533 = vadd.f32 %v3348, %v3532
        %v3534 = vpop.f32.mrf.mxu0
        %v3535 = vadd.f32 %v3350, %v3534
        %3536 = vmatprep.mubr.f32.mxu0 %v2808
        %3537 = vmatmul.mubr.f32.gmra.mxu0 %v2807
        %v3538 = vpop.f32.mrf.mxu0
        %v3539 = vadd.f32 %v3354, %v3538
        %v3540 = vpop.f32.mrf.mxu0
        %v3541 = vadd.f32 %v3356, %v3540
        %3542 = vmatprep.mubr.f32.mxu0 %v2811
        %3543 = vmatmul.mubr.f32.gmra.mxu0 %v2810
        %v3544 = vpop.f32.mrf.mxu0
        %v3545 = vadd.f32 %v3360, %v3544
        %v3546 = vpop.f32.mrf.mxu0
        %v3547 = vadd.f32 %v3362, %v3546
        %3548 = vmatprep.mubr.f32.mxu0 %v2814
        %3549 = vmatmul.mubr.f32.gmra.mxu0 %v2813
        %v3550 = vpop.f32.mrf.mxu0
        %v3551 = vadd.f32 %v3366, %v3550
        %v3552 = vpop.f32.mrf.mxu0
        %v3553 = vadd.f32 %v3368, %v3552
        %3554 = vmatprep.mubr.f32.mxu0 %v2817
        %3555 = vmatmul.mubr.f32.gmra.mxu0 %v2816
        %v3556 = vpop.f32.mrf.mxu0
        %v3557 = vadd.f32 %v3372, %v3556
        %v3558 = vpop.f32.mrf.mxu0
        %v3559 = vadd.f32 %v3374, %v3558
        %3560 = vmatprep.mubr.f32.mxu0 %v2820
        %3561 = vmatmul.mubr.f32.gmra.mxu0 %v2819
        %v3562 = vpop.f32.mrf.mxu0
        %v3563 = vadd.f32 %v3378, %v3562
        %v3564 = vpop.f32.mrf.mxu0
        %v3565 = vadd.f32 %v3380, %v3564
        %3566 = vmatprep.mubr.f32.mxu0 %v2823
        %3567 = vmatmul.mubr.f32.gmra.mxu0 %v2822
        %v3568 = vpop.f32.mrf.mxu0
        %v3569 = vadd.f32 %v3384, %v3568
        %v3570 = vpop.f32.mrf.mxu0
        %v3571 = vadd.f32 %v3386, %v3570
        %3572 = vmatprep.mubr.f32.mxu0 %v2826
        %3573 = vmatmul.mubr.f32.gmra.mxu0 %v2825
        %v3574 = vpop.f32.mrf.mxu0
        %v3575 = vadd.f32 %v3390, %v3574
        %v3576 = vpop.f32.mrf.mxu0
        %v3577 = vadd.f32 %v3392, %v3576
        %3578 = vmatprep.mubr.f32.mxu0 %v2829
        %3579 = vmatmul.mubr.f32.gmra.mxu0 %v2828
        %v3580 = vpop.f32.mrf.mxu0
        %v3581 = vadd.f32 %v3396, %v3580
        %v3582 = vpop.f32.mrf.mxu0
        %v3583 = vadd.f32 %v3398, %v3582
        %3584 = vdwg.mxu0
        %3585 = vmatprep.subr.mxu0 %v2926
        %3586 = vmatpush1.msra.mxu0 %v2925
        %3587 = vmatprep.subr.mxu0 %v2924
        %3588 = vmatpush1.msra.mxu0 %v2923
        %3589 = vmatprep.subr.mxu0 %v2922
        %3590 = vmatpush1.msra.mxu0 %v2921
        %3591 = vmatprep.subr.mxu0 %v2920
        %3592 = vmatpush1.msra.mxu0 %v2919
        %3593 = vmatprep.subr.mxu0 %v2918
        %3594 = vmatpush1.msra.mxu0 %v2917
        %3595 = vmatprep.subr.mxu0 %v2916
        %3596 = vmatpush1.msra.mxu0 %v2915
        %3597 = vmatprep.subr.mxu0 %v2914
        %3598 = vmatpush1.msra.mxu0 %v2913
        %3599 = vmatprep.subr.mxu0 %v2912
        %3600 = vmatpush1.msra.mxu0 %v2911
        %3601 = vmatprep.subr.mxu0 %v2910
        %3602 = vmatpush1.msra.mxu0 %v2909
        %3603 = vmatprep.subr.mxu0 %v2908
        %3604 = vmatpush1.msra.mxu0 %v2907
        %3605 = vmatprep.subr.mxu0 %v2906
        %3606 = vmatpush1.msra.mxu0 %v2905
        %3607 = vmatprep.subr.mxu0 %v2904
        %3608 = vmatpush1.msra.mxu0 %v2903
        %3609 = vmatprep.subr.mxu0 %v2902
        %3610 = vmatpush1.msra.mxu0 %v2901
        %3611 = vmatprep.subr.mxu0 %v2900
        %3612 = vmatpush1.msra.mxu0 %v2899
        %3613 = vmatprep.subr.mxu0 %v2898
        %3614 = vmatpush1.msra.mxu0 %v2897
        %3615 = vmatprep.subr.mxu0 %v2896
        %3616 = vmatpush1.msra.mxu0 %v2895
        %3617 = vmatprep.subr.mxu0 0.0
        %3618 = vmatpush2.msra.mxu0 0.0
        %3619 = vmatprep.subr.mxu0 0.0
        %3620 = vmatpush2.msra.mxu0 0.0
        %3621 = vmatprep.subr.mxu0 0.0
        %3622 = vmatpush2.msra.mxu0 0.0
        %3623 = vmatprep.subr.mxu0 0.0
        %3624 = vmatpush2.msra.mxu0 0.0
        %3625 = vmatprep.subr.mxu0 0.0
        %3626 = vmatpush2.msra.mxu0 0.0
        %3627 = vmatprep.subr.mxu0 0.0
        %3628 = vmatpush2.msra.mxu0 0.0
        %3629 = vmatprep.subr.mxu0 0.0
        %3630 = vmatpush2.msra.mxu0 0.0
        %3631 = vmatprep.subr.mxu0 0.0
        %3632 = vmatpush2.msra.mxu0 0.0
        %3633 = vmatprep.subr.mxu0 0.0
        %3634 = vmatpush2.msra.mxu0 0.0
        %3635 = vmatprep.subr.mxu0 0.0
        %3636 = vmatpush2.msra.mxu0 0.0
        %3637 = vmatprep.subr.mxu0 0.0
        %3638 = vmatpush2.msra.mxu0 0.0
        %3639 = vmatprep.subr.mxu0 0.0
        %3640 = vmatpush2.msra.mxu0 0.0
        %3641 = vmatprep.subr.mxu0 0.0
        %3642 = vmatpush2.msra.mxu0 0.0
        %3643 = vmatprep.subr.mxu0 0.0
        %3644 = vmatpush2.msra.mxu0 0.0
        %3645 = vmatprep.subr.mxu0 0.0
        %3646 = vmatpush2.msra.mxu0 0.0
        %3647 = vmatprep.subr.mxu0 0.0
        %3648 = vmatpush2.msra.mxu0 0.0
        %3649 = vmatprep.mubr.f32.mxu0 0.0
        %3650 = vmatmul.mubr.f32.gmra.mxu0 %v2773
        %v3651 = vpop.f32.mrf.mxu0
        %v3652 = vadd.f32 %v3467, %v3651
        %v3653 = vpop.f32.mrf.mxu0
        %v3654 = vadd.f32 %v3469, %v3653
        %3655 = vmatprep.mubr.f32.mxu0 0.0
        %3656 = vmatmul.mubr.f32.gmra.mxu0 %v2776
        %v3657 = vpop.f32.mrf.mxu0
        %v3658 = vadd.f32 %v3473, %v3657
        %v3659 = vpop.f32.mrf.mxu0
        %v3660 = vadd.f32 %v3475, %v3659
        %3661 = vmatprep.mubr.f32.mxu0 0.0
        %3662 = vmatmul.mubr.f32.gmra.mxu0 %v2779
        %v3663 = vpop.f32.mrf.mxu0
        %v3664 = vadd.f32 %v3479, %v3663
        %v3665 = vpop.f32.mrf.mxu0
        %v3666 = vadd.f32 %v3481, %v3665
        %3667 = vmatprep.mubr.f32.mxu0 0.0
        %3668 = vmatmul.mubr.f32.gmra.mxu0 %v2782
        %v3669 = vpop.f32.mrf.mxu0
        %v3670 = vadd.f32 %v3485, %v3669
        %v3671 = vpop.f32.mrf.mxu0
        %v3672 = vadd.f32 %v3487, %v3671
        %3673 = vmatprep.mubr.f32.mxu0 0.0
        %3674 = vmatmul.mubr.f32.gmra.mxu0 %v2785
        %v3675 = vpop.f32.mrf.mxu0
        %v3676 = vadd.f32 %v3491, %v3675
        %v3677 = vpop.f32.mrf.mxu0
        %v3678 = vadd.f32 %v3493, %v3677
        %3679 = vmatprep.mubr.f32.mxu0 0.0
        %3680 = vmatmul.mubr.f32.gmra.mxu0 %v2788
        %v3681 = vpop.f32.mrf.mxu0
        %v3682 = vadd.f32 %v3497, %v3681
        %v3683 = vpop.f32.mrf.mxu0
        %v3684 = vadd.f32 %v3499, %v3683
        %3685 = vmatprep.mubr.f32.mxu0 0.0
        %3686 = vmatmul.mubr.f32.gmra.mxu0 %v2791
        %v3687 = vpop.f32.mrf.mxu0
        %v3688 = vadd.f32 %v3503, %v3687
        %v3689 = vpop.f32.mrf.mxu0
        %v3690 = vadd.f32 %v3505, %v3689
        %3691 = vmatprep.mubr.f32.mxu0 0.0
        %3692 = vmatmul.mubr.f32.gmra.mxu0 %v2794
        %v3693 = vpop.f32.mrf.mxu0
        %v3694 = vadd.f32 %v3509, %v3693
        %v3695 = vpop.f32.mrf.mxu0
        %v3696 = vadd.f32 %v3511, %v3695
        %3697 = vmatprep.mubr.f32.mxu0 0.0
        %3698 = vmatmul.mubr.f32.gmra.mxu0 %v2797
        %v3699 = vpop.f32.mrf.mxu0
        %v3700 = vadd.f32 %v3515, %v3699
        %v3701 = vpop.f32.mrf.mxu0
        %v3702 = vadd.f32 %v3517, %v3701
        %3703 = vmatprep.mubr.f32.mxu0 0.0
        %3704 = vmatmul.mubr.f32.gmra.mxu0 %v2800
        %v3705 = vpop.f32.mrf.mxu0
        %v3706 = vadd.f32 %v3521, %v3705
        %v3707 = vpop.f32.mrf.mxu0
        %v3708 = vadd.f32 %v3523, %v3707
        %3709 = vmatprep.mubr.f32.mxu0 0.0
        %3710 = vmatmul.mubr.f32.gmra.mxu0 %v2803
        %v3711 = vpop.f32.mrf.mxu0
        %v3712 = vadd.f32 %v3527, %v3711
        %v3713 = vpop.f32.mrf.mxu0
        %v3714 = vadd.f32 %v3529, %v3713
        %3715 = vmatprep.mubr.f32.mxu0 0.0
        %3716 = vmatmul.mubr.f32.gmra.mxu0 %v2806
        %v3717 = vpop.f32.mrf.mxu0
        %v3718 = vadd.f32 %v3533, %v3717
        %v3719 = vpop.f32.mrf.mxu0
        %v3720 = vadd.f32 %v3535, %v3719
        %3721 = vmatprep.mubr.f32.mxu0 0.0
        %3722 = vmatmul.mubr.f32.gmra.mxu0 %v2809
        %v3723 = vpop.f32.mrf.mxu0
        %v3724 = vadd.f32 %v3539, %v3723
        %v3725 = vpop.f32.mrf.mxu0
        %v3726 = vadd.f32 %v3541, %v3725
        %3727 = vmatprep.mubr.f32.mxu0 0.0
        %3728 = vmatmul.mubr.f32.gmra.mxu0 %v2812
        %v3729 = vpop.f32.mrf.mxu0
        %v3730 = vadd.f32 %v3545, %v3729
        %v3731 = vpop.f32.mrf.mxu0
        %v3732 = vadd.f32 %v3547, %v3731
        %3733 = vmatprep.mubr.f32.mxu0 0.0
        %3734 = vmatmul.mubr.f32.gmra.mxu0 %v2815
        %v3735 = vpop.f32.mrf.mxu0
        %v3736 = vadd.f32 %v3551, %v3735
        %v3737 = vpop.f32.mrf.mxu0
        %v3738 = vadd.f32 %v3553, %v3737
        %3739 = vmatprep.mubr.f32.mxu0 0.0
        %3740 = vmatmul.mubr.f32.gmra.mxu0 %v2818
        %v3741 = vpop.f32.mrf.mxu0
        %v3742 = vadd.f32 %v3557, %v3741
        %v3743 = vpop.f32.mrf.mxu0
        %v3744 = vadd.f32 %v3559, %v3743
        %3745 = vmatprep.mubr.f32.mxu0 0.0
        %3746 = vmatmul.mubr.f32.gmra.mxu0 %v2821
        %v3747 = vpop.f32.mrf.mxu0
        %v3748 = vadd.f32 %v3563, %v3747
        %v3749 = vpop.f32.mrf.mxu0
        %v3750 = vadd.f32 %v3565, %v3749
        %3751 = vmatprep.mubr.f32.mxu0 0.0
        %3752 = vmatmul.mubr.f32.gmra.mxu0 %v2824
        %v3753 = vpop.f32.mrf.mxu0
        %v3754 = vadd.f32 %v3569, %v3753
        %v3755 = vpop.f32.mrf.mxu0
        %v3756 = vadd.f32 %v3571, %v3755
        %3757 = vmatprep.mubr.f32.mxu0 0.0
        %3758 = vmatmul.mubr.f32.gmra.mxu0 %v2827
        %v3759 = vpop.f32.mrf.mxu0
        %v3760 = vadd.f32 %v3575, %v3759
        %v3761 = vpop.f32.mrf.mxu0
        %v3762 = vadd.f32 %v3577, %v3761
        %3763 = vmatprep.mubr.f32.mxu0 0.0
        %3764 = vmatmul.mubr.f32.gmra.mxu0 %v2830
        %v3765 = vpop.f32.mrf.mxu0
        %v3766 = vadd.f32 %v3581, %v3765
        %v3767 = vpop.f32.mrf.mxu0
        %v3768 = vadd.f32 %v3583, %v3767
        %3769 = vdwg.mxu0
        %v3770 = vld [vmem:[#allocation3 + $0x60] sm:$0xff]
        %v3771 = vld [vmem:[#allocation3 + $0x68] sm:$0xff]
        %v3772 = vld [vmem:[#allocation3 + $0x70] sm:$0xff]
        %v3773 = vld [vmem:[#allocation3 + $0x78] sm:$0xff]
        %v3774 = vld [vmem:[#allocation3 + $0x80] sm:$0xff]
        %v3775 = vld [vmem:[#allocation3 + $0x88] sm:$0xff]
        %v3776 = vld [vmem:[#allocation3 + $0x90] sm:$0xff]
        %v3777 = vld [vmem:[#allocation3 + $0x98] sm:$0xff]
        %v3778 = vld [vmem:[#allocation3 + $0xa0] sm:$0xff]
        %v3779 = vld [vmem:[#allocation3 + $0xa8] sm:$0xff]
        %v3780 = vld [vmem:[#allocation3 + $0xb0] sm:$0xff]
        %v3781 = vld [vmem:[#allocation3 + $0xb8] sm:$0xff]
        %v3782 = vld [vmem:[#allocation3 + $0xc0] sm:$0xff]
        %v3783 = vld [vmem:[#allocation3 + $0xc8] sm:$0xff]
        %v3784 = vld [vmem:[#allocation3 + $0xd0] sm:$0xff]
        %v3785 = vld [vmem:[#allocation3 + $0xd8] sm:$0xff]
        %v3786 = vld [vmem:[#allocation3 + $0xe0] sm:$0xff]
        %v3787 = vld [vmem:[#allocation3 + $0xe8] sm:$0xff]
        %v3788 = vld [vmem:[#allocation3 + $0xf0] sm:$0xff]
        %v3789 = vld [vmem:[#allocation3 + $0xf8] sm:$0xff]
        %v3790 = vld [vmem:[#allocation3 + $0x100] sm:$0xff]
        %v3791 = vld [vmem:[#allocation3 + $0x108] sm:$0xff]
        %v3792 = vld [vmem:[#allocation3 + $0x110] sm:$0xff]
        %v3793 = vld [vmem:[#allocation3 + $0x118] sm:$0xff]
        %v3794 = vld [vmem:[#allocation3 + $0x120] sm:$0xff]
        %v3795 = vld [vmem:[#allocation3 + $0x128] sm:$0xff]
        %v3796 = vld [vmem:[#allocation3 + $0x130] sm:$0xff]
        %v3797 = vld [vmem:[#allocation3 + $0x138] sm:$0xff]
        %v3798 = vld [vmem:[#allocation3 + $0x140] sm:$0xff]
        %v3799 = vld [vmem:[#allocation3 + $0x148] sm:$0xff]
        %v3800 = vld [vmem:[#allocation3 + $0x150] sm:$0xff]
        %v3801 = vld [vmem:[#allocation3 + $0x158] sm:$0xff]
        %v3802 = vld [vmem:[#allocation3 + $0x160] sm:$0xff]
        %v3803 = vld [vmem:[#allocation3 + $0x168] sm:$0xff]
        %v3804 = vld [vmem:[#allocation3 + $0x170] sm:$0xff]
        %v3805 = vld [vmem:[#allocation3 + $0x178] sm:$0xff]
        %v3806 = vld [vmem:[#allocation3 + $0x180] sm:$0xff]
        %v3807 = vld [vmem:[#allocation3 + $0x188] sm:$0xff]
        %v3808 = vld [vmem:[#allocation3 + $0x190] sm:$0xff]
        %v3809 = vld [vmem:[#allocation3 + $0x198] sm:$0xff]
        %v3810 = vld [vmem:[#allocation3 + $0x1a0] sm:$0xff]
        %v3811 = vld [vmem:[#allocation3 + $0x1a8] sm:$0xff]
        %v3812 = vld [vmem:[#allocation3 + $0x1b0] sm:$0xff]
        %v3813 = vld [vmem:[#allocation3 + $0x1b8] sm:$0xff]
        %v3814 = vld [vmem:[#allocation3 + $0x1c0] sm:$0xff]
        %v3815 = vld [vmem:[#allocation3 + $0x1c8] sm:$0xff]
        %v3816 = vld [vmem:[#allocation3 + $0x1d0] sm:$0xff]
        %v3817 = vld [vmem:[#allocation3 + $0x1d8] sm:$0xff]
        %v3818 = vld [vmem:[#allocation3 + $0x1e0] sm:$0xff]
        %v3819 = vld [vmem:[#allocation3 + $0x1e8] sm:$0xff]
        %v3820 = vld [vmem:[#allocation3 + $0x1f0] sm:$0xff]
        %v3821 = vld [vmem:[#allocation3 + $0x1f8] sm:$0xff]
        %v3822 = vld [vmem:[#allocation3 + $0x200] sm:$0xff]
        %v3823 = vld [vmem:[#allocation3 + $0x208] sm:$0xff]
        %v3824 = vld [vmem:[#allocation3 + $0x210] sm:$0xff]
        %v3825 = vld [vmem:[#allocation3 + $0x218] sm:$0xff]
        %v3826 = vld [vmem:[#allocation3 + $0x220] sm:$0xff]
        %v3827 = vld [vmem:[#allocation3 + $0x228] sm:$0xff]
        %v3828 = vld [vmem:[#allocation3 + $0x230] sm:$0xff]
        %v3829 = vld [vmem:[#allocation3 + $0x238] sm:$0xff]
        %s3830 = scalar_lea.vmem %s5, 1536
        %v3831 = vld [vmem:[%s3830] sm:$0xff]
        %v3832 = vld [vmem:[%s3830 + $0x8] sm:$0xff]
        %v3833 = vld [vmem:[%s3830 + $0x10] sm:$0xff]
        %v3834 = vld [vmem:[%s3830 + $0x18] sm:$0xff]
        %v3835 = vld [vmem:[%s3830 + $0x20] sm:$0xff]
        %v3836 = vld [vmem:[%s3830 + $0x28] sm:$0xff]
        %v3837 = vld [vmem:[%s3830 + $0x30] sm:$0xff]
        %v3838 = vld [vmem:[%s3830 + $0x38] sm:$0xff]
        %v3839 = vld [vmem:[%s3830 + $0x40] sm:$0xff]
        %v3840 = vld [vmem:[%s3830 + $0x48] sm:$0xff]
        %v3841 = vld [vmem:[%s3830 + $0x50] sm:$0xff]
        %v3842 = vld [vmem:[%s3830 + $0x58] sm:$0xff]
        %v3843 = vld [vmem:[%s3830 + $0x60] sm:$0xff]
        %v3844 = vld [vmem:[%s3830 + $0x68] sm:$0xff]
        %v3845 = vld [vmem:[%s3830 + $0x70] sm:$0xff]
        %v3846 = vld [vmem:[%s3830 + $0x78] sm:$0xff]
        %v3847 = vld [vmem:[%s3830 + $0x80] sm:$0xff]
        %v3848 = vld [vmem:[%s3830 + $0x88] sm:$0xff]
        %v3849 = vld [vmem:[%s3830 + $0x90] sm:$0xff]
        %v3850 = vld [vmem:[%s3830 + $0x98] sm:$0xff]
        %v3851 = vld [vmem:[%s3830 + $0xa0] sm:$0xff]
        %v3852 = vld [vmem:[%s3830 + $0xa8] sm:$0xff]
        %v3853 = vld [vmem:[%s3830 + $0xb0] sm:$0xff]
        %v3854 = vld [vmem:[%s3830 + $0xb8] sm:$0xff]
        %v3855 = vld [vmem:[%s3830 + $0xc0] sm:$0xff]
        %v3856 = vld [vmem:[%s3830 + $0xc8] sm:$0xff]
        %v3857 = vld [vmem:[%s3830 + $0xd0] sm:$0xff]
        %v3858 = vld [vmem:[%s3830 + $0xd8] sm:$0xff]
        %v3859 = vld [vmem:[%s3830 + $0xe0] sm:$0xff]
        %v3860 = vld [vmem:[%s3830 + $0xe8] sm:$0xff]
        %v3861 = vld [vmem:[%s3830 + $0xf0] sm:$0xff]
        %v3862 = vld [vmem:[%s3830 + $0xf8] sm:$0xff]
        %v3863 = vld [vmem:[%s3830 + $0x100] sm:$0xff]
        %v3864 = vld [vmem:[%s3830 + $0x108] sm:$0xff]
        %v3865 = vld [vmem:[%s3830 + $0x110] sm:$0xff]
        %v3866 = vld [vmem:[%s3830 + $0x118] sm:$0xff]
        %v3867 = vld [vmem:[%s3830 + $0x120] sm:$0xff]
        %v3868 = vld [vmem:[%s3830 + $0x128] sm:$0xff]
        %v3869 = vld [vmem:[%s3830 + $0x130] sm:$0xff]
        %v3870 = vld [vmem:[%s3830 + $0x138] sm:$0xff]
        %v3871 = vld [vmem:[%s3830 + $0x140] sm:$0xff]
        %v3872 = vld [vmem:[%s3830 + $0x148] sm:$0xff]
        %v3873 = vld [vmem:[%s3830 + $0x150] sm:$0xff]
        %v3874 = vld [vmem:[%s3830 + $0x158] sm:$0xff]
        %v3875 = vld [vmem:[%s3830 + $0x160] sm:$0xff]
        %v3876 = vld [vmem:[%s3830 + $0x168] sm:$0xff]
        %v3877 = vld [vmem:[%s3830 + $0x170] sm:$0xff]
        %v3878 = vld [vmem:[%s3830 + $0x178] sm:$0xff]
        %v3879 = vld [vmem:[%s3830 + $0x180] sm:$0xff]
        %v3880 = vld [vmem:[%s3830 + $0x188] sm:$0xff]
        %v3881 = vld [vmem:[%s3830 + $0x190] sm:$0xff]
        %v3882 = vld [vmem:[%s3830 + $0x198] sm:$0xff]
        %v3883 = vld [vmem:[%s3830 + $0x1a0] sm:$0xff]
        %v3884 = vld [vmem:[%s3830 + $0x1a8] sm:$0xff]
        %v3885 = vld [vmem:[%s3830 + $0x1b0] sm:$0xff]
        %v3886 = vld [vmem:[%s3830 + $0x1b8] sm:$0xff]
        %v3887 = vld [vmem:[%s3830 + $0x1c0] sm:$0xff]
        %v3888 = vld [vmem:[%s3830 + $0x1c8] sm:$0xff]
        %v3889 = vld [vmem:[%s3830 + $0x1d0] sm:$0xff]
        %v3890 = vld [vmem:[%s3830 + $0x1d8] sm:$0xff]
        %v3891 = vld [vmem:[%s3830 + $0x1e0] sm:$0xff]
        %v3892 = vld [vmem:[%s3830 + $0x1e8] sm:$0xff]
        %v3893 = vld [vmem:[%s3830 + $0x1f0] sm:$0xff]
        %v3894 = vld [vmem:[%s3830 + $0x1f8] sm:$0xff]
        %v3895 = vld [vmem:[%s3830 + $0x200] sm:$0xff]
        %v3896 = vld [vmem:[%s3830 + $0x208] sm:$0xff]
        %v3897 = vld [vmem:[%s3830 + $0x210] sm:$0xff]
        %v3898 = vld [vmem:[%s3830 + $0x218] sm:$0xff]
        %v3899 = vld [vmem:[%s3830 + $0x220] sm:$0xff]
        %v3900 = vld [vmem:[%s3830 + $0x228] sm:$0xff]
        %v3901 = vld [vmem:[%s3830 + $0x230] sm:$0xff]
        %v3902 = vld [vmem:[%s3830 + $0x238] sm:$0xff]
        %v3903 = vld [vmem:[%s3830 + $0x240] sm:$0xff]
        %v3904 = vld [vmem:[%s3830 + $0x248] sm:$0xff]
        %v3905 = vld [vmem:[%s3830 + $0x250] sm:$0xff]
        %v3906 = vld [vmem:[%s3830 + $0x258] sm:$0xff]
        %v3907 = vld [vmem:[%s3830 + $0x260] sm:$0xff]
        %v3908 = vld [vmem:[%s3830 + $0x268] sm:$0xff]
        %v3909 = vld [vmem:[%s3830 + $0x270] sm:$0xff]
        %v3910 = vld [vmem:[%s3830 + $0x278] sm:$0xff]
        %v3911 = vld [vmem:[%s3830 + $0x280] sm:$0xff]
        %v3912 = vld [vmem:[%s3830 + $0x288] sm:$0xff]
        %v3913 = vld [vmem:[%s3830 + $0x290] sm:$0xff]
        %v3914 = vld [vmem:[%s3830 + $0x298] sm:$0xff]
        %v3915 = vld [vmem:[%s3830 + $0x2a0] sm:$0xff]
        %v3916 = vld [vmem:[%s3830 + $0x2a8] sm:$0xff]
        %v3917 = vld [vmem:[%s3830 + $0x2b0] sm:$0xff]
        %v3918 = vld [vmem:[%s3830 + $0x2b8] sm:$0xff]
        %v3919 = vld [vmem:[%s3830 + $0x2c0] sm:$0xff]
        %v3920 = vld [vmem:[%s3830 + $0x2c8] sm:$0xff]
        %v3921 = vld [vmem:[%s3830 + $0x2d0] sm:$0xff]
        %v3922 = vld [vmem:[%s3830 + $0x2d8] sm:$0xff]
        %v3923 = vld [vmem:[%s3830 + $0x2e0] sm:$0xff]
        %v3924 = vld [vmem:[%s3830 + $0x2e8] sm:$0xff]
        %v3925 = vld [vmem:[%s3830 + $0x2f0] sm:$0xff]
        %v3926 = vld [vmem:[%s3830 + $0x2f8] sm:$0xff]
        %3927 = vmatprep.subr.mxu0 %v3862
        %3928 = vmatpush1.msra.mxu0 %v3861
        %3929 = vmatprep.subr.mxu0 %v3860
        %3930 = vmatpush1.msra.mxu0 %v3859
        %3931 = vmatprep.subr.mxu0 %v3858
        %3932 = vmatpush1.msra.mxu0 %v3857
        %3933 = vmatprep.subr.mxu0 %v3856
        %3934 = vmatpush1.msra.mxu0 %v3855
        %3935 = vmatprep.subr.mxu0 %v3854
        %3936 = vmatpush1.msra.mxu0 %v3853
        %3937 = vmatprep.subr.mxu0 %v3852
        %3938 = vmatpush1.msra.mxu0 %v3851
        %3939 = vmatprep.subr.mxu0 %v3850
        %3940 = vmatpush1.msra.mxu0 %v3849
        %3941 = vmatprep.subr.mxu0 %v3848
        %3942 = vmatpush1.msra.mxu0 %v3847
        %3943 = vmatprep.subr.mxu0 %v3846
        %3944 = vmatpush1.msra.mxu0 %v3845
        %3945 = vmatprep.subr.mxu0 %v3844
        %3946 = vmatpush1.msra.mxu0 %v3843
        %3947 = vmatprep.subr.mxu0 %v3842
        %3948 = vmatpush1.msra.mxu0 %v3841
        %3949 = vmatprep.subr.mxu0 %v3840
        %3950 = vmatpush1.msra.mxu0 %v3839
        %3951 = vmatprep.subr.mxu0 %v3838
        %3952 = vmatpush1.msra.mxu0 %v3837
        %3953 = vmatprep.subr.mxu0 %v3836
        %3954 = vmatpush1.msra.mxu0 %v3835
        %3955 = vmatprep.subr.mxu0 %v3834
        %3956 = vmatpush1.msra.mxu0 %v3833
        %3957 = vmatprep.subr.mxu0 %v3832
        %3958 = vmatpush1.msra.mxu0 %v3831
        %3959 = vmatprep.subr.mxu0 %v3894
        %3960 = vmatpush2.msra.mxu0 %v3893
        %3961 = vmatprep.subr.mxu0 %v3892
        %3962 = vmatpush2.msra.mxu0 %v3891
        %3963 = vmatprep.subr.mxu0 %v3890
        %3964 = vmatpush2.msra.mxu0 %v3889
        %3965 = vmatprep.subr.mxu0 %v3888
        %3966 = vmatpush2.msra.mxu0 %v3887
        %3967 = vmatprep.subr.mxu0 %v3886
        %3968 = vmatpush2.msra.mxu0 %v3885
        %3969 = vmatprep.subr.mxu0 %v3884
        %3970 = vmatpush2.msra.mxu0 %v3883
        %3971 = vmatprep.subr.mxu0 %v3882
        %3972 = vmatpush2.msra.mxu0 %v3881
        %3973 = vmatprep.subr.mxu0 %v3880
        %3974 = vmatpush2.msra.mxu0 %v3879
        %3975 = vmatprep.subr.mxu0 %v3878
        %3976 = vmatpush2.msra.mxu0 %v3877
        %3977 = vmatprep.subr.mxu0 %v3876
        %3978 = vmatpush2.msra.mxu0 %v3875
        %3979 = vmatprep.subr.mxu0 %v3874
        %3980 = vmatpush2.msra.mxu0 %v3873
        %3981 = vmatprep.subr.mxu0 %v3872
        %3982 = vmatpush2.msra.mxu0 %v3871
        %3983 = vmatprep.subr.mxu0 %v3870
        %3984 = vmatpush2.msra.mxu0 %v3869
        %3985 = vmatprep.subr.mxu0 %v3868
        %3986 = vmatpush2.msra.mxu0 %v3867
        %3987 = vmatprep.subr.mxu0 %v3866
        %3988 = vmatpush2.msra.mxu0 %v3865
        %3989 = vmatprep.subr.mxu0 %v3864
        %3990 = vmatpush2.msra.mxu0 %v3863
        %3991 = vmatprep.mubr.f32.mxu0 %v3771
        %3992 = vmatmul.mubr.f32.gmra.mxu0 %v3770
        %v3993 = vpop.f32.mrf.mxu0
        %v3994 = vadd.f32 0.0, %v3993
        %v3995 = vpop.f32.mrf.mxu0
        %v3996 = vadd.f32 0.0, %v3995
        %3997 = vmatprep.mubr.f32.mxu0 %v3774
        %3998 = vmatmul.mubr.f32.gmra.mxu0 %v3773
        %v3999 = vpop.f32.mrf.mxu0
        %v4000 = vadd.f32 0.0, %v3999
        %v4001 = vpop.f32.mrf.mxu0
        %v4002 = vadd.f32 0.0, %v4001
        %4003 = vmatprep.mubr.f32.mxu0 %v3777
        %4004 = vmatmul.mubr.f32.gmra.mxu0 %v3776
        %v4005 = vpop.f32.mrf.mxu0
        %v4006 = vadd.f32 0.0, %v4005
        %v4007 = vpop.f32.mrf.mxu0
        %v4008 = vadd.f32 0.0, %v4007
        %4009 = vmatprep.mubr.f32.mxu0 %v3780
        %4010 = vmatmul.mubr.f32.gmra.mxu0 %v3779
        %v4011 = vpop.f32.mrf.mxu0
        %v4012 = vadd.f32 0.0, %v4011
        %v4013 = vpop.f32.mrf.mxu0
        %v4014 = vadd.f32 0.0, %v4013
        %4015 = vmatprep.mubr.f32.mxu0 %v3783
        %4016 = vmatmul.mubr.f32.gmra.mxu0 %v3782
        %v4017 = vpop.f32.mrf.mxu0
        %v4018 = vadd.f32 0.0, %v4017
        %v4019 = vpop.f32.mrf.mxu0
        %v4020 = vadd.f32 0.0, %v4019
        %4021 = vmatprep.mubr.f32.mxu0 %v3786
        %4022 = vmatmul.mubr.f32.gmra.mxu0 %v3785
        %v4023 = vpop.f32.mrf.mxu0
        %v4024 = vadd.f32 0.0, %v4023
        %v4025 = vpop.f32.mrf.mxu0
        %v4026 = vadd.f32 0.0, %v4025
        %4027 = vmatprep.mubr.f32.mxu0 %v3789
        %4028 = vmatmul.mubr.f32.gmra.mxu0 %v3788
        %v4029 = vpop.f32.mrf.mxu0
        %v4030 = vadd.f32 0.0, %v4029
        %v4031 = vpop.f32.mrf.mxu0
        %v4032 = vadd.f32 0.0, %v4031
        %4033 = vmatprep.mubr.f32.mxu0 %v3792
        %4034 = vmatmul.mubr.f32.gmra.mxu0 %v3791
        %v4035 = vpop.f32.mrf.mxu0
        %v4036 = vadd.f32 0.0, %v4035
        %v4037 = vpop.f32.mrf.mxu0
        %v4038 = vadd.f32 0.0, %v4037
        %4039 = vmatprep.mubr.f32.mxu0 %v3795
        %4040 = vmatmul.mubr.f32.gmra.mxu0 %v3794
        %v4041 = vpop.f32.mrf.mxu0
        %v4042 = vadd.f32 0.0, %v4041
        %v4043 = vpop.f32.mrf.mxu0
        %v4044 = vadd.f32 0.0, %v4043
        %4045 = vmatprep.mubr.f32.mxu0 %v3798
        %4046 = vmatmul.mubr.f32.gmra.mxu0 %v3797
        %v4047 = vpop.f32.mrf.mxu0
        %v4048 = vadd.f32 0.0, %v4047
        %v4049 = vpop.f32.mrf.mxu0
        %v4050 = vadd.f32 0.0, %v4049
        %4051 = vmatprep.mubr.f32.mxu0 %v3801
        %4052 = vmatmul.mubr.f32.gmra.mxu0 %v3800
        %v4053 = vpop.f32.mrf.mxu0
        %v4054 = vadd.f32 0.0, %v4053
        %v4055 = vpop.f32.mrf.mxu0
        %v4056 = vadd.f32 0.0, %v4055
        %4057 = vmatprep.mubr.f32.mxu0 %v3804
        %4058 = vmatmul.mubr.f32.gmra.mxu0 %v3803
        %v4059 = vpop.f32.mrf.mxu0
        %v4060 = vadd.f32 0.0, %v4059
        %v4061 = vpop.f32.mrf.mxu0
        %v4062 = vadd.f32 0.0, %v4061
        %4063 = vmatprep.mubr.f32.mxu0 %v3807
        %4064 = vmatmul.mubr.f32.gmra.mxu0 %v3806
        %v4065 = vpop.f32.mrf.mxu0
        %v4066 = vadd.f32 0.0, %v4065
        %v4067 = vpop.f32.mrf.mxu0
        %v4068 = vadd.f32 0.0, %v4067
        %4069 = vmatprep.mubr.f32.mxu0 %v3810
        %4070 = vmatmul.mubr.f32.gmra.mxu0 %v3809
        %v4071 = vpop.f32.mrf.mxu0
        %v4072 = vadd.f32 0.0, %v4071
        %v4073 = vpop.f32.mrf.mxu0
        %v4074 = vadd.f32 0.0, %v4073
        %4075 = vmatprep.mubr.f32.mxu0 %v3813
        %4076 = vmatmul.mubr.f32.gmra.mxu0 %v3812
        %v4077 = vpop.f32.mrf.mxu0
        %v4078 = vadd.f32 0.0, %v4077
        %v4079 = vpop.f32.mrf.mxu0
        %v4080 = vadd.f32 0.0, %v4079
        %4081 = vmatprep.mubr.f32.mxu0 %v3816
        %4082 = vmatmul.mubr.f32.gmra.mxu0 %v3815
        %v4083 = vpop.f32.mrf.mxu0
        %v4084 = vadd.f32 0.0, %v4083
        %v4085 = vpop.f32.mrf.mxu0
        %v4086 = vadd.f32 0.0, %v4085
        %4087 = vmatprep.mubr.f32.mxu0 %v3819
        %4088 = vmatmul.mubr.f32.gmra.mxu0 %v3818
        %v4089 = vpop.f32.mrf.mxu0
        %v4090 = vadd.f32 0.0, %v4089
        %v4091 = vpop.f32.mrf.mxu0
        %v4092 = vadd.f32 0.0, %v4091
        %4093 = vmatprep.mubr.f32.mxu0 %v3822
        %4094 = vmatmul.mubr.f32.gmra.mxu0 %v3821
        %v4095 = vpop.f32.mrf.mxu0
        %v4096 = vadd.f32 0.0, %v4095
        %v4097 = vpop.f32.mrf.mxu0
        %v4098 = vadd.f32 0.0, %v4097
        %4099 = vmatprep.mubr.f32.mxu0 %v3825
        %4100 = vmatmul.mubr.f32.gmra.mxu0 %v3824
        %v4101 = vpop.f32.mrf.mxu0
        %v4102 = vadd.f32 0.0, %v4101
        %v4103 = vpop.f32.mrf.mxu0
        %v4104 = vadd.f32 0.0, %v4103
        %4105 = vmatprep.mubr.f32.mxu0 %v3828
        %4106 = vmatmul.mubr.f32.gmra.mxu0 %v3827
        %v4107 = vpop.f32.mrf.mxu0
        %v4108 = vadd.f32 0.0, %v4107
        %v4109 = vpop.f32.mrf.mxu0
        %v4110 = vadd.f32 0.0, %v4109
        %4111 = vdwg.mxu0
        %4112 = vmatprep.subr.mxu0 %v3926
        %4113 = vmatpush1.msra.mxu0 %v3925
        %4114 = vmatprep.subr.mxu0 %v3924
        %4115 = vmatpush1.msra.mxu0 %v3923
        %4116 = vmatprep.subr.mxu0 %v3922
        %4117 = vmatpush1.msra.mxu0 %v3921
        %4118 = vmatprep.subr.mxu0 %v3920
        %4119 = vmatpush1.msra.mxu0 %v3919
        %4120 = vmatprep.subr.mxu0 %v3918
        %4121 = vmatpush1.msra.mxu0 %v3917
        %4122 = vmatprep.subr.mxu0 %v3916
        %4123 = vmatpush1.msra.mxu0 %v3915
        %4124 = vmatprep.subr.mxu0 %v3914
        %4125 = vmatpush1.msra.mxu0 %v3913
        %4126 = vmatprep.subr.mxu0 %v3912
        %4127 = vmatpush1.msra.mxu0 %v3911
        %4128 = vmatprep.subr.mxu0 %v3910
        %4129 = vmatpush1.msra.mxu0 %v3909
        %4130 = vmatprep.subr.mxu0 %v3908
        %4131 = vmatpush1.msra.mxu0 %v3907
        %4132 = vmatprep.subr.mxu0 %v3906
        %4133 = vmatpush1.msra.mxu0 %v3905
        %4134 = vmatprep.subr.mxu0 %v3904
        %4135 = vmatpush1.msra.mxu0 %v3903
        %4136 = vmatprep.subr.mxu0 %v3902
        %4137 = vmatpush1.msra.mxu0 %v3901
        %4138 = vmatprep.subr.mxu0 %v3900
        %4139 = vmatpush1.msra.mxu0 %v3899
        %4140 = vmatprep.subr.mxu0 %v3898
        %4141 = vmatpush1.msra.mxu0 %v3897
        %4142 = vmatprep.subr.mxu0 %v3896
        %4143 = vmatpush1.msra.mxu0 %v3895
        %4144 = vmatprep.subr.mxu0 0.0
        %4145 = vmatpush2.msra.mxu0 0.0
        %4146 = vmatprep.subr.mxu0 0.0
        %4147 = vmatpush2.msra.mxu0 0.0
        %4148 = vmatprep.subr.mxu0 0.0
        %4149 = vmatpush2.msra.mxu0 0.0
        %4150 = vmatprep.subr.mxu0 0.0
        %4151 = vmatpush2.msra.mxu0 0.0
        %4152 = vmatprep.subr.mxu0 0.0
        %4153 = vmatpush2.msra.mxu0 0.0
        %4154 = vmatprep.subr.mxu0 0.0
        %4155 = vmatpush2.msra.mxu0 0.0
        %4156 = vmatprep.subr.mxu0 0.0
        %4157 = vmatpush2.msra.mxu0 0.0
        %4158 = vmatprep.subr.mxu0 0.0
        %4159 = vmatpush2.msra.mxu0 0.0
        %4160 = vmatprep.subr.mxu0 0.0
        %4161 = vmatpush2.msra.mxu0 0.0
        %4162 = vmatprep.subr.mxu0 0.0
        %4163 = vmatpush2.msra.mxu0 0.0
        %4164 = vmatprep.subr.mxu0 0.0
        %4165 = vmatpush2.msra.mxu0 0.0
        %4166 = vmatprep.subr.mxu0 0.0
        %4167 = vmatpush2.msra.mxu0 0.0
        %4168 = vmatprep.subr.mxu0 0.0
        %4169 = vmatpush2.msra.mxu0 0.0
        %4170 = vmatprep.subr.mxu0 0.0
        %4171 = vmatpush2.msra.mxu0 0.0
        %4172 = vmatprep.subr.mxu0 0.0
        %4173 = vmatpush2.msra.mxu0 0.0
        %4174 = vmatprep.subr.mxu0 0.0
        %4175 = vmatpush2.msra.mxu0 0.0
        %4176 = vmatprep.mubr.f32.mxu0 0.0
        %4177 = vmatmul.mubr.f32.gmra.mxu0 %v3772
        %v4178 = vpop.f32.mrf.mxu0
        %v4179 = vadd.f32 %v3994, %v4178
        %v4180 = vpop.f32.mrf.mxu0
        %v4181 = vadd.f32 %v3996, %v4180
        %4182 = vmatprep.mubr.f32.mxu0 0.0
        %4183 = vmatmul.mubr.f32.gmra.mxu0 %v3775
        %v4184 = vpop.f32.mrf.mxu0
        %v4185 = vadd.f32 %v4000, %v4184
        %v4186 = vpop.f32.mrf.mxu0
        %v4187 = vadd.f32 %v4002, %v4186
        %4188 = vmatprep.mubr.f32.mxu0 0.0
        %4189 = vmatmul.mubr.f32.gmra.mxu0 %v3778
        %v4190 = vpop.f32.mrf.mxu0
        %v4191 = vadd.f32 %v4006, %v4190
        %v4192 = vpop.f32.mrf.mxu0
        %v4193 = vadd.f32 %v4008, %v4192
        %4194 = vmatprep.mubr.f32.mxu0 0.0
        %4195 = vmatmul.mubr.f32.gmra.mxu0 %v3781
        %v4196 = vpop.f32.mrf.mxu0
        %v4197 = vadd.f32 %v4012, %v4196
        %v4198 = vpop.f32.mrf.mxu0
        %v4199 = vadd.f32 %v4014, %v4198
        %4200 = vmatprep.mubr.f32.mxu0 0.0
        %4201 = vmatmul.mubr.f32.gmra.mxu0 %v3784
        %v4202 = vpop.f32.mrf.mxu0
        %v4203 = vadd.f32 %v4018, %v4202
        %v4204 = vpop.f32.mrf.mxu0
        %v4205 = vadd.f32 %v4020, %v4204
        %4206 = vmatprep.mubr.f32.mxu0 0.0
        %4207 = vmatmul.mubr.f32.gmra.mxu0 %v3787
        %v4208 = vpop.f32.mrf.mxu0
        %v4209 = vadd.f32 %v4024, %v4208
        %v4210 = vpop.f32.mrf.mxu0
        %v4211 = vadd.f32 %v4026, %v4210
        %4212 = vmatprep.mubr.f32.mxu0 0.0
        %4213 = vmatmul.mubr.f32.gmra.mxu0 %v3790
        %v4214 = vpop.f32.mrf.mxu0
        %v4215 = vadd.f32 %v4030, %v4214
        %v4216 = vpop.f32.mrf.mxu0
        %v4217 = vadd.f32 %v4032, %v4216
        %4218 = vmatprep.mubr.f32.mxu0 0.0
        %4219 = vmatmul.mubr.f32.gmra.mxu0 %v3793
        %v4220 = vpop.f32.mrf.mxu0
        %v4221 = vadd.f32 %v4036, %v4220
        %v4222 = vpop.f32.mrf.mxu0
        %v4223 = vadd.f32 %v4038, %v4222
        %4224 = vmatprep.mubr.f32.mxu0 0.0
        %4225 = vmatmul.mubr.f32.gmra.mxu0 %v3796
        %v4226 = vpop.f32.mrf.mxu0
        %v4227 = vadd.f32 %v4042, %v4226
        %v4228 = vpop.f32.mrf.mxu0
        %v4229 = vadd.f32 %v4044, %v4228
        %4230 = vmatprep.mubr.f32.mxu0 0.0
        %4231 = vmatmul.mubr.f32.gmra.mxu0 %v3799
        %v4232 = vpop.f32.mrf.mxu0
        %v4233 = vadd.f32 %v4048, %v4232
        %v4234 = vpop.f32.mrf.mxu0
        %v4235 = vadd.f32 %v4050, %v4234
        %4236 = vmatprep.mubr.f32.mxu0 0.0
        %4237 = vmatmul.mubr.f32.gmra.mxu0 %v3802
        %v4238 = vpop.f32.mrf.mxu0
        %v4239 = vadd.f32 %v4054, %v4238
        %v4240 = vpop.f32.mrf.mxu0
        %v4241 = vadd.f32 %v4056, %v4240
        %4242 = vmatprep.mubr.f32.mxu0 0.0
        %4243 = vmatmul.mubr.f32.gmra.mxu0 %v3805
        %v4244 = vpop.f32.mrf.mxu0
        %v4245 = vadd.f32 %v4060, %v4244
        %v4246 = vpop.f32.mrf.mxu0
        %v4247 = vadd.f32 %v4062, %v4246
        %4248 = vmatprep.mubr.f32.mxu0 0.0
        %4249 = vmatmul.mubr.f32.gmra.mxu0 %v3808
        %v4250 = vpop.f32.mrf.mxu0
        %v4251 = vadd.f32 %v4066, %v4250
        %v4252 = vpop.f32.mrf.mxu0
        %v4253 = vadd.f32 %v4068, %v4252
        %4254 = vmatprep.mubr.f32.mxu0 0.0
        %4255 = vmatmul.mubr.f32.gmra.mxu0 %v3811
        %v4256 = vpop.f32.mrf.mxu0
        %v4257 = vadd.f32 %v4072, %v4256
        %v4258 = vpop.f32.mrf.mxu0
        %v4259 = vadd.f32 %v4074, %v4258
        %4260 = vmatprep.mubr.f32.mxu0 0.0
        %4261 = vmatmul.mubr.f32.gmra.mxu0 %v3814
        %v4262 = vpop.f32.mrf.mxu0
        %v4263 = vadd.f32 %v4078, %v4262
        %v4264 = vpop.f32.mrf.mxu0
        %v4265 = vadd.f32 %v4080, %v4264
        %4266 = vmatprep.mubr.f32.mxu0 0.0
        %4267 = vmatmul.mubr.f32.gmra.mxu0 %v3817
        %v4268 = vpop.f32.mrf.mxu0
        %v4269 = vadd.f32 %v4084, %v4268
        %v4270 = vpop.f32.mrf.mxu0
        %v4271 = vadd.f32 %v4086, %v4270
        %4272 = vmatprep.mubr.f32.mxu0 0.0
        %4273 = vmatmul.mubr.f32.gmra.mxu0 %v3820
        %v4274 = vpop.f32.mrf.mxu0
        %v4275 = vadd.f32 %v4090, %v4274
        %v4276 = vpop.f32.mrf.mxu0
        %v4277 = vadd.f32 %v4092, %v4276
        %4278 = vmatprep.mubr.f32.mxu0 0.0
        %4279 = vmatmul.mubr.f32.gmra.mxu0 %v3823
        %v4280 = vpop.f32.mrf.mxu0
        %v4281 = vadd.f32 %v4096, %v4280
        %v4282 = vpop.f32.mrf.mxu0
        %v4283 = vadd.f32 %v4098, %v4282
        %4284 = vmatprep.mubr.f32.mxu0 0.0
        %4285 = vmatmul.mubr.f32.gmra.mxu0 %v3826
        %v4286 = vpop.f32.mrf.mxu0
        %v4287 = vadd.f32 %v4102, %v4286
        %v4288 = vpop.f32.mrf.mxu0
        %v4289 = vadd.f32 %v4104, %v4288
        %4290 = vmatprep.mubr.f32.mxu0 0.0
        %4291 = vmatmul.mubr.f32.gmra.mxu0 %v3829
        %v4292 = vpop.f32.mrf.mxu0
        %v4293 = vadd.f32 %v4108, %v4292
        %v4294 = vpop.f32.mrf.mxu0
        %v4295 = vadd.f32 %v4110, %v4294
        %4296 = vdwg.mxu0
        %v4297 = vadd.f32 %v3652, %v4179
        %v4298 = vadd.f32 %v3654, %v4181
        %v4299 = vadd.f32 %v3658, %v4185
        %v4300 = vadd.f32 %v3660, %v4187
        %v4301 = vadd.f32 %v3664, %v4191
        %v4302 = vadd.f32 %v3666, %v4193
        %v4303 = vadd.f32 %v3670, %v4197
        %v4304 = vadd.f32 %v3672, %v4199
        %v4305 = vadd.f32 %v3676, %v4203
        %v4306 = vadd.f32 %v3678, %v4205
        %v4307 = vadd.f32 %v3682, %v4209
        %v4308 = vadd.f32 %v3684, %v4211
        %v4309 = vadd.f32 %v3688, %v4215
        %v4310 = vadd.f32 %v3690, %v4217
        %v4311 = vadd.f32 %v3694, %v4221
        %v4312 = vadd.f32 %v3696, %v4223
        %v4313 = vadd.f32 %v3700, %v4227
        %v4314 = vadd.f32 %v3702, %v4229
        %v4315 = vadd.f32 %v3706, %v4233
        %v4316 = vadd.f32 %v3708, %v4235
        %v4317 = vadd.f32 %v3712, %v4239
        %v4318 = vadd.f32 %v3714, %v4241
        %v4319 = vadd.f32 %v3718, %v4245
        %v4320 = vadd.f32 %v3720, %v4247
        %v4321 = vadd.f32 %v3724, %v4251
        %v4322 = vadd.f32 %v3726, %v4253
        %v4323 = vadd.f32 %v3730, %v4257
        %v4324 = vadd.f32 %v3732, %v4259
        %v4325 = vadd.f32 %v3736, %v4263
        %v4326 = vadd.f32 %v3738, %v4265
        %v4327 = vadd.f32 %v3742, %v4269
        %v4328 = vadd.f32 %v3744, %v4271
        %v4329 = vadd.f32 %v3748, %v4275
        %v4330 = vadd.f32 %v3750, %v4277
        %v4331 = vadd.f32 %v3754, %v4281
        %v4332 = vadd.f32 %v3756, %v4283
        %v4333 = vadd.f32 %v3760, %v4287
        %v4334 = vadd.f32 %v3762, %v4289
        %v4335 = vadd.f32 %v3766, %v4293
        %v4336 = vadd.f32 %v3768, %v4295
        %v4337 = vld [vmem:[%s6] sm:$0x3]
        %v4339 = vlaneseq
        %v4340 = vshrl.u32 %v4339, 7
        %v4341 = vsub.s32 0, %v4340
        %v4342 = vrot.slane %v4337, %v4341
        %v4343 = vlaneseq
        %v4344 = vshrl.u32 %v4343, 7
        %v4345 = vsub.s32 1, %v4344
        %v4346 = vrot.slane %v4337, %v4345
        %v4349 = vadd.f32 %v4297, %v4342
        %v4350 = vadd.f32 %v4298, %v4346
        %v4351 = vadd.f32 %v4299, %v4342
        %v4352 = vadd.f32 %v4300, %v4346
        %v4353 = vadd.f32 %v4301, %v4342
        %v4354 = vadd.f32 %v4302, %v4346
        %v4355 = vadd.f32 %v4303, %v4342
        %v4356 = vadd.f32 %v4304, %v4346
        %v4357 = vadd.f32 %v4305, %v4342
        %v4358 = vadd.f32 %v4306, %v4346
        %v4359 = vadd.f32 %v4307, %v4342
        %v4360 = vadd.f32 %v4308, %v4346
        %v4361 = vadd.f32 %v4309, %v4342
        %v4362 = vadd.f32 %v4310, %v4346
        %v4363 = vadd.f32 %v4311, %v4342
        %v4364 = vadd.f32 %v4312, %v4346
        %v4365 = vadd.f32 %v4313, %v4342
        %v4366 = vadd.f32 %v4314, %v4346
        %v4367 = vadd.f32 %v4315, %v4342
        %v4368 = vadd.f32 %v4316, %v4346
        %v4369 = vadd.f32 %v4317, %v4342
        %v4370 = vadd.f32 %v4318, %v4346
        %v4371 = vadd.f32 %v4319, %v4342
        %v4372 = vadd.f32 %v4320, %v4346
        %v4373 = vadd.f32 %v4321, %v4342
        %v4374 = vadd.f32 %v4322, %v4346
        %v4375 = vadd.f32 %v4323, %v4342
        %v4376 = vadd.f32 %v4324, %v4346
        %v4377 = vadd.f32 %v4325, %v4342
        %v4378 = vadd.f32 %v4326, %v4346
        %v4379 = vadd.f32 %v4327, %v4342
        %v4380 = vadd.f32 %v4328, %v4346
        %v4381 = vadd.f32 %v4329, %v4342
        %v4382 = vadd.f32 %v4330, %v4346
        %v4383 = vadd.f32 %v4331, %v4342
        %v4384 = vadd.f32 %v4332, %v4346
        %v4385 = vadd.f32 %v4333, %v4342
        %v4386 = vadd.f32 %v4334, %v4346
        %v4387 = vadd.f32 %v4335, %v4342
        %v4388 = vadd.f32 %v4336, %v4346
        %v4389 = vmax.f32 %v4349, 0.0
        %v4390 = vmax.f32 %v4350, 0.0
        %v4391 = vmax.f32 %v4351, 0.0
        %v4392 = vmax.f32 %v4352, 0.0
        %v4393 = vmax.f32 %v4353, 0.0
        %v4394 = vmax.f32 %v4354, 0.0
        %v4395 = vmax.f32 %v4355, 0.0
        %v4396 = vmax.f32 %v4356, 0.0
        %v4397 = vmax.f32 %v4357, 0.0
        %v4398 = vmax.f32 %v4358, 0.0
        %v4399 = vmax.f32 %v4359, 0.0
        %v4400 = vmax.f32 %v4360, 0.0
        %v4401 = vmax.f32 %v4361, 0.0
        %v4402 = vmax.f32 %v4362, 0.0
        %v4403 = vmax.f32 %v4363, 0.0
        %v4404 = vmax.f32 %v4364, 0.0
        %v4405 = vmax.f32 %v4365, 0.0
        %v4406 = vmax.f32 %v4366, 0.0
        %v4407 = vmax.f32 %v4367, 0.0
        %v4408 = vmax.f32 %v4368, 0.0
        %v4409 = vmax.f32 %v4369, 0.0
        %v4410 = vmax.f32 %v4370, 0.0
        %v4411 = vmax.f32 %v4371, 0.0
        %v4412 = vmax.f32 %v4372, 0.0
        %v4413 = vmax.f32 %v4373, 0.0
        %v4414 = vmax.f32 %v4374, 0.0
        %v4415 = vmax.f32 %v4375, 0.0
        %v4416 = vmax.f32 %v4376, 0.0
        %v4417 = vmax.f32 %v4377, 0.0
        %v4418 = vmax.f32 %v4378, 0.0
        %v4419 = vmax.f32 %v4379, 0.0
        %v4420 = vmax.f32 %v4380, 0.0
        %v4421 = vmax.f32 %v4381, 0.0
        %v4422 = vmax.f32 %v4382, 0.0
        %v4423 = vmax.f32 %v4383, 0.0
        %v4424 = vmax.f32 %v4384, 0.0
        %v4425 = vmax.f32 %v4385, 0.0
        %v4426 = vmax.f32 %v4386, 0.0
        %v4427 = vmax.f32 %v4387, 0.0
        %v4428 = vmax.f32 %v4388, 0.0
        %v4429 = vsel %vm1393, %v4389, 0.0
        %v4430 = vsel %vm1393, %v4390, 0.0
        %v4431 = vsel %vm1394, %v4391, 0.0
        %v4432 = vsel %vm1394, %v4392, 0.0
        %v4433 = vsel %vm1395, %v4393, 0.0
        %v4434 = vsel %vm1395, %v4394, 0.0
        %v4435 = vsel %vm1396, %v4395, 0.0
        %v4436 = vsel %vm1396, %v4396, 0.0
        %v4437 = vsel %vm1397, %v4397, 0.0
        %v4438 = vsel %vm1397, %v4398, 0.0
        %v4439 = vsel %vm1398, %v4399, 0.0
        %v4440 = vsel %vm1398, %v4400, 0.0
        %v4441 = vsel %vm1399, %v4401, 0.0
        %v4442 = vsel %vm1399, %v4402, 0.0
        %v4443 = vsel %vm1400, %v4403, 0.0
        %v4444 = vsel %vm1400, %v4404, 0.0
        %v4445 = vsel %vm1401, %v4405, 0.0
        %v4446 = vsel %vm1401, %v4406, 0.0
        %v4447 = vsel %vm1402, %v4407, 0.0
        %v4448 = vsel %vm1402, %v4408, 0.0
        %v4449 = vsel %vm1403, %v4409, 0.0
        %v4450 = vsel %vm1403, %v4410, 0.0
        %v4451 = vsel %vm1404, %v4411, 0.0
        %v4452 = vsel %vm1404, %v4412, 0.0
        %v4453 = vsel %vm1405, %v4413, 0.0
        %v4454 = vsel %vm1405, %v4414, 0.0
        %v4455 = vsel %vm1406, %v4415, 0.0
        %v4456 = vsel %vm1406, %v4416, 0.0
        %v4457 = vsel %vm1407, %v4417, 0.0
        %v4458 = vsel %vm1407, %v4418, 0.0
        %v4459 = vsel %vm1408, %v4419, 0.0
        %v4460 = vsel %vm1408, %v4420, 0.0
        %v4461 = vsel %vm1409, %v4421, 0.0
        %v4462 = vsel %vm1409, %v4422, 0.0
        %v4463 = vsel %vm1410, %v4423, 0.0
        %v4464 = vsel %vm1410, %v4424, 0.0
        %v4465 = vsel %vm1411, %v4425, 0.0
        %v4466 = vsel %vm1411, %v4426, 0.0
        %v4467 = vsel %vm1412, %v4427, 0.0
        %v4468 = vsel %vm1412, %v4428, 0.0
        %v4469 = vadd.f32 %v4429, %v4431
        %v4470 = vadd.f32 %v4469, %v4433
        %v4471 = vadd.f32 %v4470, %v4435
        %v4472 = vadd.f32 %v4471, %v4437
        %v4473 = vadd.f32 %v4472, %v4439
        %v4474 = vadd.f32 %v4473, %v4441
        %v4475 = vadd.f32 %v4474, %v4443
        %v4476 = vadd.f32 %v4475, %v4445
        %v4477 = vadd.f32 %v4476, %v4447
        %v4478 = vadd.f32 %v4477, %v4449
        %v4479 = vadd.f32 %v4478, %v4451
        %v4480 = vadd.f32 %v4479, %v4453
        %v4481 = vadd.f32 %v4480, %v4455
        %v4482 = vadd.f32 %v4481, %v4457
        %v4483 = vadd.f32 %v4482, %v4459
        %v4484 = vadd.f32 %v4483, %v4461
        %v4485 = vadd.f32 %v4484, %v4463
        %v4486 = vadd.f32 %v4485, %v4465
        %v4487 = vadd.f32 %v4486, %v4467
        %v4488 = vrot.slane %v4487, 4
        %v4489 = vadd.f32 %v4487, %v4488
        %v4490 = vrot.slane %v4489, 2
        %v4491 = vadd.f32 %v4489, %v4490
        %v4492 = vrot.slane %v4491, 1
        %v4493 = vadd.f32 %v4491, %v4492
        %v4494 = vadd.f32 %v4430, %v4432
        %v4495 = vadd.f32 %v4494, %v4434
        %v4496 = vadd.f32 %v4495, %v4436
        %v4497 = vadd.f32 %v4496, %v4438
        %v4498 = vadd.f32 %v4497, %v4440
        %v4499 = vadd.f32 %v4498, %v4442
        %v4500 = vadd.f32 %v4499, %v4444
        %v4501 = vadd.f32 %v4500, %v4446
        %v4502 = vadd.f32 %v4501, %v4448
        %v4503 = vadd.f32 %v4502, %v4450
        %v4504 = vadd.f32 %v4503, %v4452
        %v4505 = vadd.f32 %v4504, %v4454
        %v4506 = vadd.f32 %v4505, %v4456
        %v4507 = vadd.f32 %v4506, %v4458
        %v4508 = vadd.f32 %v4507, %v4460
        %v4509 = vadd.f32 %v4508, %v4462
        %v4510 = vadd.f32 %v4509, %v4464
        %v4511 = vadd.f32 %v4510, %v4466
        %v4512 = vadd.f32 %v4511, %v4468
        %v4513 = vrot.slane %v4512, 4
        %v4514 = vadd.f32 %v4512, %v4513
        %v4515 = vrot.slane %v4514, 2
        %v4516 = vadd.f32 %v4514, %v4515
        %v4517 = vrot.slane %v4516, 1
        %v4518 = vadd.f32 %v4516, %v4517
        %v4519 = vld [vmem:[%s7] sm:$0xff]
        %v4520 = vld [vmem:[%s7 + $0x8] sm:$0xff]
        %v4521 = vld [vmem:[%s7 + $0x10] sm:$0xff]
        %v4522 = vld [vmem:[%s7 + $0x18] sm:$0xff]
        %v4523 = vld [vmem:[%s7 + $0x20] sm:$0xff]
        %v4524 = vld [vmem:[%s7 + $0x28] sm:$0xff]
        %v4525 = vld [vmem:[%s7 + $0x30] sm:$0xff]
        %v4526 = vld [vmem:[%s7 + $0x38] sm:$0xff]
        %v4527 = vld [vmem:[%s7 + $0x40] sm:$0xff]
        %v4528 = vld [vmem:[%s7 + $0x48] sm:$0xff]
        %v4529 = vld [vmem:[%s7 + $0x50] sm:$0xff]
        %v4530 = vld [vmem:[%s7 + $0x58] sm:$0xff]
        %v4531 = vld [vmem:[%s7 + $0x60] sm:$0xff]
        %v4532 = vld [vmem:[%s7 + $0x68] sm:$0xff]
        %v4533 = vld [vmem:[%s7 + $0x70] sm:$0xff]
        %v4534 = vld [vmem:[%s7 + $0x78] sm:$0xff]
        %v4535 = vld [vmem:[%s7 + $0x80] sm:$0xff]
        %v4536 = vld [vmem:[%s7 + $0x88] sm:$0xff]
        %v4537 = vld [vmem:[%s7 + $0x90] sm:$0xff]
        %v4538 = vld [vmem:[%s7 + $0x98] sm:$0xff]
        %v4539 = vld [vmem:[%s7 + $0xa0] sm:$0xff]
        %v4540 = vld [vmem:[%s7 + $0xa8] sm:$0xff]
        %v4541 = vld [vmem:[%s7 + $0xb0] sm:$0xff]
        %v4542 = vld [vmem:[%s7 + $0xb8] sm:$0xff]
        %v4543 = vld [vmem:[%s7 + $0xc0] sm:$0xff]
        %v4544 = vld [vmem:[%s7 + $0xc8] sm:$0xff]
        %v4545 = vld [vmem:[%s7 + $0xd0] sm:$0xff]
        %v4546 = vld [vmem:[%s7 + $0xd8] sm:$0xff]
        %v4547 = vld [vmem:[%s7 + $0xe0] sm:$0xff]
        %v4548 = vld [vmem:[%s7 + $0xe8] sm:$0xff]
        %v4549 = vld [vmem:[%s7 + $0xf0] sm:$0xff]
        %v4550 = vld [vmem:[%s7 + $0xf8] sm:$0xff]
        %4551 = vmatprep.subr.mxu0 0.0
        %4552 = vmatpush1.msra.mxu0 %v4534
        %4553 = vmatprep.subr.mxu0 0.0
        %4554 = vmatpush1.msra.mxu0 %v4533
        %4555 = vmatprep.subr.mxu0 0.0
        %4556 = vmatpush1.msra.mxu0 %v4532
        %4557 = vmatprep.subr.mxu0 0.0
        %4558 = vmatpush1.msra.mxu0 %v4531
        %4559 = vmatprep.subr.mxu0 0.0
        %4560 = vmatpush1.msra.mxu0 %v4530
        %4561 = vmatprep.subr.mxu0 0.0
        %4562 = vmatpush1.msra.mxu0 %v4529
        %4563 = vmatprep.subr.mxu0 0.0
        %4564 = vmatpush1.msra.mxu0 %v4528
        %4565 = vmatprep.subr.mxu0 0.0
        %4566 = vmatpush1.msra.mxu0 %v4527
        %4567 = vmatprep.subr.mxu0 0.0
        %4568 = vmatpush1.msra.mxu0 %v4526
        %4569 = vmatprep.subr.mxu0 0.0
        %4570 = vmatpush1.msra.mxu0 %v4525
        %4571 = vmatprep.subr.mxu0 0.0
        %4572 = vmatpush1.msra.mxu0 %v4524
        %4573 = vmatprep.subr.mxu0 0.0
        %4574 = vmatpush1.msra.mxu0 %v4523
        %4575 = vmatprep.subr.mxu0 0.0
        %4576 = vmatpush1.msra.mxu0 %v4522
        %4577 = vmatprep.subr.mxu0 0.0
        %4578 = vmatpush1.msra.mxu0 %v4521
        %4579 = vmatprep.subr.mxu0 0.0
        %4580 = vmatpush1.msra.mxu0 %v4520
        %4581 = vmatprep.subr.mxu0 0.0
        %4582 = vmatpush1.msra.mxu0 %v4519
        %4583 = vmatprep.subr.mxu0 0.0
        %4584 = vmatpush2.msra.mxu0 %v4550
        %4585 = vmatprep.subr.mxu0 0.0
        %4586 = vmatpush2.msra.mxu0 %v4549
        %4587 = vmatprep.subr.mxu0 0.0
        %4588 = vmatpush2.msra.mxu0 %v4548
        %4589 = vmatprep.subr.mxu0 0.0
        %4590 = vmatpush2.msra.mxu0 %v4547
        %4591 = vmatprep.subr.mxu0 0.0
        %4592 = vmatpush2.msra.mxu0 %v4546
        %4593 = vmatprep.subr.mxu0 0.0
        %4594 = vmatpush2.msra.mxu0 %v4545
        %4595 = vmatprep.subr.mxu0 0.0
        %4596 = vmatpush2.msra.mxu0 %v4544
        %4597 = vmatprep.subr.mxu0 0.0
        %4598 = vmatpush2.msra.mxu0 %v4543
        %4599 = vmatprep.subr.mxu0 0.0
        %4600 = vmatpush2.msra.mxu0 %v4542
        %4601 = vmatprep.subr.mxu0 0.0
        %4602 = vmatpush2.msra.mxu0 %v4541
        %4603 = vmatprep.subr.mxu0 0.0
        %4604 = vmatpush2.msra.mxu0 %v4540
        %4605 = vmatprep.subr.mxu0 0.0
        %4606 = vmatpush2.msra.mxu0 %v4539
        %4607 = vmatprep.subr.mxu0 0.0
        %4608 = vmatpush2.msra.mxu0 %v4538
        %4609 = vmatprep.subr.mxu0 0.0
        %4610 = vmatpush2.msra.mxu0 %v4537
        %4611 = vmatprep.subr.mxu0 0.0
        %4612 = vmatpush2.msra.mxu0 %v4536
        %4613 = vmatprep.subr.mxu0 0.0
        %4614 = vmatpush2.msra.mxu0 %v4535
        %4615 = vmatprep.mubr.f32.mxu0 %v4518
        %4616 = vmatmul.mubr.f32.gmra.mxu0 %v4493
        %v4617 = vpop.f32.mrf.mxu0
        %v4618 = vadd.f32 0.0, %v4617
        %v4619 = vpop.f32.mrf.mxu0
        %4620 = vdwg.mxu0
        %vm4621 = vcmask 253952
        %4622 = vst.msk [vmem:[%s297] sm:$0x1] %vm4621, %v4618
        %s4623 = sand.u32 %s203, 1
        %s4624 = scalar_lea.sflag [#allocation5], %s4623
        %s4625 = sand.u32 %s203, 1
        %s4626 = scalar_lea.vmem [#allocation4], %s4625
        // Predicated region
        $region53: #{simple3d_perceptual_net.1} parent=51 // pred_check
          %p4627 = pneg %p213
        $region54: #{simple3d_perceptual_net.1} parent=51 // pred_check_branch
          %4629 = sbr.rel (%p4627) target = $region56
        $region55: #{simple3d_perceptual_net.1} parent=51 // pred_region
          %s4631 = ssub.s32 16, 16
          %4632 = vsyncadd %s4624, %s4631
          %s4633 = smul.addr %s22, 16
          %s4634 = scalar_lea.hbm %s8, %s4633
          %s4636 = sshll.u32 %s4626, 4
          %s4637 = int_to_ptr.vmem [resolvable:$true] %s4636
          %4639 = dma.vmem_to_hbm [thread:$0]  %s4637, 16, %s4634, %s4624
        $region56: #{simple3d_perceptual_net.1} parent=51 // pred_fallthru
          _
      $region52: #{simple3d_perceptual_net.1} parent=5 // pred_fallthru
        _
      %p4640 = scmp.le.s32.totalorder 2, %s17
      // Predicated region
      $region57: #{simple3d_perceptual_net.1} parent=5 // pred_check
        %p4641 = pneg %p4640
      $region58: #{simple3d_perceptual_net.1} parent=5 // pred_check_branch
        %4643 = sbr.rel (%p4641) target = $region60
      $region59: #{simple3d_perceptual_net.1} parent=5 // pred_region
        %s4644 = ssub.s32 %s17, 2
        // Predicated region
        $region61: #{simple3d_perceptual_net.1} parent=59 // pred_check
          %p4645 = pneg %p219
        $region62: #{simple3d_perceptual_net.1} parent=59 // pred_check_branch
          %4647 = sbr.rel (%p4645) target = $region64
        $region63: #{simple3d_perceptual_net.1} parent=59 // pred_region
          %s4648 = sand.u32 %s204, 1
          %s4649 = scalar_lea.sflag [#allocation5], %s4648
          %s4650 = sand.u32 %s204, 1
          %s4651 = scalar_lea.vmem [#allocation4], %s4650
          %4652 = dma.done %s4649, 16
        $region64: #{simple3d_perceptual_net.1} parent=59 // pred_fallthru
          _
      $region60: #{simple3d_perceptual_net.1} parent=5 // pred_fallthru
        _
    $region6: #{simple3d_perceptual_net.1} parent=1 // loop_footer
      %s21 = sadd.s32 1, %s17
    $region7: #{simple3d_perceptual_net.1} parent=1 // loop_footer_branch
      %16 = sbr.rel target = $region3
    $region8: #{simple3d_perceptual_net.1} parent=1 // loop_exit
      _
    %4653 = vsyncpa [#allocation5], 1
    %s4654 = scalar_lea.sflag [#allocation5], 1
    %4655 = vsyncpa %s4654, 1

</llo_original>
